<compile_context>
chip_gen: v6e
topology: v6e:2x2x1
jax: 0.10.0
libtpu: 0.0.40
codegen_flags: <defaults>
</compile_context>

<pallas_src>
import jax
import jax.numpy as jnp
from jax.experimental import pallas as pl
from jax.experimental.pallas import tpu as pltpu


# ----------------------------------------------------------------------------
# Fused kernel: GRU stack (wavefronted) + concat-head, single invocation.
# ----------------------------------------------------------------------------
def make_fused_kernel(num_layers, seq, b_pad, hidden, state_dim, action_dim,
                      max_din, n_pad):
    H = hidden
    H2, H3 = 2 * hidden, 3 * hidden
    f32 = jnp.float32

    def kernel(x_ref, a_ref, h0_ref, w_gru_ref, b_all_ref, w_head_ref, hm_ref,
               out_ref, gi0_ref, pout_ref):
        # Inputs:
        #   x_ref    : (n_pad, D)        flattened time-major input (rows t*Bp+b)
        #   a_ref    : (n_pad, A)        flattened time-major actions
        #   h0_ref   : (L, Bp, H)        initial hidden per layer
        #   w_gru_ref: (L, max_din+H, 3H) rows [0:din]=W_ih^T, [max_din:+H]=W_hh^T
        #   b_all_ref: (L, 1, 4H)        [ b_ih(+b_hh for r,z) | b_hh_n ]
        #   w_head   : (H+A, H)          dense1 weight^T  (p rows then a rows)
        #   hm_ref   : (3, H)            row0=b1, row1=dense2 weight row, row2[0]=b2
        # Output:
        #   out_ref  : (1, n_pad)
        # Scratch:
        #   gi0_ref  : (n_pad, 3H)       hoisted layer-0 input projection
        #   pout_ref : (n_pad, H)        final-layer GRU outputs

        # Zero the padded output slab once so padded rows hold defined values.
        pout_ref[...] = jnp.zeros_like(pout_ref)

        # Hoist per-layer weights / biases out of the time loop.
        wih, whh, bgi, bhn = [], [], [], []
        for l in range(num_layers):
            din = state_dim if l == 0 else H
            w_l = w_gru_ref[l]                        # (max_din + H, 3H)
            wih.append(w_l[0:din, :])                 # (din, 3H), gates r|z|n
            whh.append(w_l[max_din:max_din + H, :])   # (H, 3H)
            b_l = b_all_ref[l]                        # (1, 4H)
            # Broadcast ONCE (JAX does not CSE broadcast_in_dim in the loop).
            bgi.append(jnp.broadcast_to(b_l[:, 0:H3], (b_pad, H3)) if l > 0 else None)
            bhn.append(jnp.broadcast_to(b_l[:, H3:H3 + H], (b_pad, H)))

        # Hoisted layer-0 input projection over all timesteps, biases folded,
        # spilled to VMEM scratch so it does not stay vreg-resident.
        gi0_ref[...] = (jnp.dot(x_ref[...], wih[0], preferred_element_type=f32)
                        + b_all_ref[0][:, 0:H3])

        hs = [h0_ref[l] for l in range(num_layers)]   # carried hidden, (Bp, H)

        def gru_step(gi, gh, h, l):
            # r|z share one EUP push; b_hh_n stays inside r*(...) (PyTorch GRU).
            rz = jax.nn.sigmoid(gi[:, 0:H2] + gh[:, 0:H2])
            r, z = rz[:, 0:H], rz[:, H:H2]
            n = jnp.tanh(gi[:, H2:H3] + r * (gh[:, H2:H3] + bhn[l]))
            return (1.0 - z) * n + z * h

        for t in range(seq):                          # unrolled; wavefronted layers
            lo = t * b_pad
            # Layer 0: only the recurrent matmul is on the serial chain.
            gi = gi0_ref[pl.ds(lo, b_pad), :]
            gh = jnp.dot(hs[0], whh[0], preferred_element_type=f32)
            hs[0] = gru_step(gi, gh, hs[0], 0)
            p_t = hs[0]
            # Layers 1..L-1: per-step input projection (off their serial chain).
            for l in range(1, num_layers):
                gi = jnp.dot(p_t, wih[l], preferred_element_type=f32) + bgi[l]
                gh = jnp.dot(hs[l], whh[l], preferred_element_type=f32)
                hs[l] = gru_step(gi, gh, hs[l], l)
                p_t = hs[l]
            pout_ref[pl.ds(lo, b_pad), :] = p_t

        # Head: dense1(cat([p, a])) as two matmuls, relu, dense2 as a row
        # reduction, then a single lane-dense (1, n_pad) unmasked store.
        w1p = w_head_ref[0:H, :]
        w1a = w_head_ref[H:H + action_dim, :]
        b1 = hm_ref[0:1, :]
        w2 = hm_ref[1:2, :]
        b2 = hm_ref[2:3, 0:1]
        hid = (jnp.dot(pout_ref[...], w1p, preferred_element_type=f32)
               + jnp.dot(a_ref[...], w1a, preferred_element_type=f32) + b1)
        hid = jnp.maximum(hid, 0.0)
        logit = jnp.sum(hid * w2, axis=-1)[None, :] + b2
        out_ref[...] = jax.nn.sigmoid(logit).astype(out_ref.dtype)

    return kernel


# ----------------------------------------------------------------------------
# Wrapper: pad batch to sublanes, pad rows to a full lane tile, single call.
# ----------------------------------------------------------------------------
@jax.jit
def discriminator_forward(packed, x, a, h0_all):
    """x, a: [seq, batch, y_dim]; h0_all: [num_layers, batch, hidden]."""
    seq, batch, state_dim = x.shape
    num_layers, _, hidden = h0_all.shape
    action_dim = a.shape[-1]
    max_din = packed["w_gru"].shape[1] - hidden

    b_pad = ((batch + 7) // 8) * 8                   # full sublanes
    n = seq * b_pad
    n_pad = ((n + 127) // 128) * 128                 # full lane tile for output

    xp = jnp.pad(x, ((0, 0), (0, b_pad - batch), (0, 0))).reshape(n, state_dim)
    ap = jnp.pad(a, ((0, 0), (0, b_pad - batch), (0, 0))).reshape(n, action_dim)
    x2d = jnp.pad(xp, ((0, n_pad - n), (0, 0)))
    a2d = jnp.pad(ap, ((0, n_pad - n), (0, 0)))
    h0p = jnp.pad(h0_all, ((0, 0), (0, b_pad - batch), (0, 0)))

    args = [x2d, a2d, h0p, packed["w_gru"], packed["b_all"],
            packed["w_head"], packed["head_misc"]]

    kernel = make_fused_kernel(num_layers, seq, b_pad, hidden, state_dim,
                               action_dim, max_din, n_pad)

    # Single TensorCore, no grid: workload is a latency-bound serial recurrence.
    # TODO(synk): if batch grows to hundreds of rows, add a "parallel" batch
    # grid axis so the second TensorCore on v7x gets work.
    out = pl.pallas_call(
        kernel,
        out_shape=jax.ShapeDtypeStruct((1, n_pad), jnp.float32),
        in_specs=[pl.BlockSpec(memory_space=pltpu.MemorySpace.VMEM)
                  for _ in args],
        out_specs=pl.BlockSpec(memory_space=pltpu.MemorySpace.VMEM),
        scratch_shapes=[pltpu.VMEM((n_pad, 3 * hidden), jnp.float32),
                        pltpu.VMEM((n_pad, hidden), jnp.float32)],
    )(*args)

    prob = out[0, :n].reshape(seq, b_pad)[:, :batch]
    return prob[..., None]                           # [seq, batch, 1]


# ----------------------------------------------------------------------------
# Raw (PyTorch-layout) parameter init + packing into kernel buffers.
# ----------------------------------------------------------------------------
def init_raw_params(key, state_dim, hidden_dim, num_layers):
    H, A = hidden_dim, state_dim

    def u(k, shape, bound):
        return jax.random.uniform(k, shape, jnp.float32, -bound, bound)

    params = {"gru": []}
    k_gru = float(H) ** -0.5
    for layer in range(num_layers):
        din = state_dim if layer == 0 else H
        key, k1, k2, k3, k4 = jax.random.split(key, 5)
        params["gru"].append({
            "w_ih": u(k1, (3 * H, din), k_gru),      # gate rows ordered r, z, n
            "w_hh": u(k2, (3 * H, H), k_gru),
            "b_ih": u(k3, (3 * H,), k_gru),
            "b_hh": u(k4, (3 * H,), k_gru),
        })
    k_d1 = float(H + A) ** -0.5
    k_d2 = float(H) ** -0.5
    key, k1, k2, k3, k4 = jax.random.split(key, 5)
    params["dense1_w"] = u(k1, (H, H + A), k_d1)
    params["dense1_b"] = u(k2, (H,), k_d1)
    params["dense2_w"] = u(k3, (1, H), k_d2)
    params["dense2_b"] = u(k4, (1,), k_d2)
    return params


def pack_params(raw, state_dim, hidden_dim, num_layers):
    """Pack raw params into the few gate-concatenated kernel buffers."""
    H = hidden_dim
    max_din = ((max(state_dim, H) + 7) // 8) * 8
    w_gru, b_all = [], []
    for layer, lp in enumerate(raw["gru"]):
        din = state_dim if layer == 0 else H
        w = jnp.zeros((max_din + H, 3 * H), jnp.float32)
        w = w.at[0:din, :].set(lp["w_ih"].T)                    # gates r|z|n on lanes
        w = w.at[max_din:max_din + H, :].set(lp["w_hh"].T)
        w_gru.append(w)
        # r,z biases foldable into the input projection; b_hh_n must stay
        # inside the r*(...) term, so keep it separately in lanes [3H:4H].
        b_gi = jnp.concatenate([lp["b_ih"][:2 * H] + lp["b_hh"][:2 * H],
                                lp["b_ih"][2 * H:]])
        b = jnp.concatenate([b_gi, lp["b_hh"][2 * H:]])[None, :]  # (1, 4H)
        b_all.append(b)
    head_misc = jnp.concatenate(
        [raw["dense1_b"][None, :],
         raw["dense2_w"],
         jnp.concatenate([raw["dense2_b"][None, :],
                          jnp.zeros((1, H - 1), jnp.float32)], axis=1)], axis=0)
    return {
        "w_gru": jnp.stack(w_gru),        # (L, max_din+H, 3H)
        "b_all": jnp.stack(b_all),        # (L, 1, 4H)
        "w_head": raw["dense1_w"].T,      # (H+A, H)
        "head_misc": head_misc,           # (3, H)
    }


# ----------------------------------------------------------------------------
# Pure-JAX reference using the RAW PyTorch-layout params (torch.nn.GRU math).
# ----------------------------------------------------------------------------
def reference_forward(raw, x, a, h0_all):
    H = h0_all.shape[-1]
    seq = x.shape[0]
    p = x
    for layer, lp in enumerate(raw["gru"]):
        h = h0_all[layer]
        outs = []
        for t in range(seq):
            gi = p[t] @ lp["w_ih"].T + lp["b_ih"]
            gh = h @ lp["w_hh"].T + lp["b_hh"]
            r = jax.nn.sigmoid(gi[:, :H] + gh[:, :H])
            z = jax.nn.sigmoid(gi[:, H:2 * H] + gh[:, H:2 * H])
            n = jnp.tanh(gi[:, 2 * H:] + r * gh[:, 2 * H:])
            h = (1.0 - z) * n + z * h
            outs.append(h)
        p = jnp.stack(outs, axis=0)
    pa = jnp.concatenate([p, a], axis=-1)
    hid = jnp.maximum(pa @ raw["dense1_w"].T + raw["dense1_b"], 0.0)
    logit = hid @ raw["dense2_w"].T + raw["dense2_b"]
    return jax.nn.sigmoid(logit)


if __name__ == "__main__":
    # Module hyper-parameters (small, consistent with the PyTorch __init__):
    #   n_features=2, team_size=2, single_team=False -> n_players=4 -> y_dim=8
    #   discrim_rnn_dim=32, discrim_num_layers=2
    n_features, team_size, single_team = 2, 2, False
    n_players = team_size if single_team else team_size * 2
    y_dim = n_players * n_features          # state_dim = action_dim = 8
    hidden_dim = 32
    num_layers = 2
    seq, batch = 8, 4

    key = jax.random.PRNGKey(0)
    kp, kx, ka = jax.random.split(key, 3)

    raw = init_raw_params(kp, y_dim, hidden_dim, num_layers)
    packed = pack_params(raw, y_dim, hidden_dim, num_layers)

    x = jax.random.normal(kx, (seq, batch, y_dim), jnp.float32)
    a = jax.random.normal(ka, (seq, batch, y_dim), jnp.float32)
    h0 = jnp.zeros((num_layers, batch, hidden_dim), jnp.float32)  # init_hidden

    prob = discriminator_forward(packed, x, a, h0)
    prob = jax.block_until_ready(prob)

    ref = reference_forward(raw, x, a, h0)
    assert prob.shape == (seq, batch, 1)
    assert jnp.allclose(prob, ref, rtol=2e-3, atol=2e-4), "mismatch vs reference"

    print("KERNEL_OK")
</pallas_src>

<mosaic_0001>
module attributes {stable_mosaic.version = 11 : i64} {
  func.func @kernel(%arg0: memref<128x8xf32, #tpu.memory_space<vmem>>, %arg1: memref<128x8xf32, #tpu.memory_space<vmem>>, %arg2: memref<2x8x32xf32, #tpu.memory_space<vmem>>, %arg3: memref<2x64x96xf32, #tpu.memory_space<vmem>>, %arg4: memref<2x1x128xf32, #tpu.memory_space<vmem>>, %arg5: memref<40x32xf32, #tpu.memory_space<vmem>>, %arg6: memref<3x32xf32, #tpu.memory_space<vmem>>, %arg7: memref<1x128xf32, #tpu.memory_space<vmem>>, %arg8: memref<128x96xf32, #tpu.memory_space<vmem>>, %arg9: memref<128x32xf32, #tpu.memory_space<vmem>>) attributes {dimension_semantics = [], scalar_prefetch = 0 : i64, scratch_operands = 2 : i64, tpu.core_type = #tpu.core_type<tc>} {
    %cst = arith.constant 0.000000e+00 : f32
    %0 = vector.broadcast %cst : f32 to vector<128x32xf32>
    %c0 = arith.constant 0 : index
    %c0_0 = arith.constant 0 : index
    %1 = vector.load %arg9[%c0, %c0_0] : memref<128x32xf32, #tpu.memory_space<vmem>>, vector<128x32xf32>
    tpu.vector_store %arg9[%c0, %c0_0], %0 {strides = array<i32>} : memref<128x32xf32, #tpu.memory_space<vmem>>, vector<128x32xf32>,
    %c0_1 = arith.constant 0 : index
    %c0_2 = arith.constant 0 : index
    %c0_3 = arith.constant 0 : index
    %2 = vector.load %arg3[%c0_1, %c0_2, %c0_3] : memref<2x64x96xf32, #tpu.memory_space<vmem>>, vector<1x64x96xf32>
    %3 = vector.shape_cast %2 : vector<1x64x96xf32> to vector<64x96xf32>
    %4 = vector.extract_strided_slice %3 {offsets = [0, 0], sizes = [8, 96], strides = [1, 1]} : vector<64x96xf32> to vector<8x96xf32>
    %5 = vector.extract_strided_slice %3 {offsets = [32, 0], sizes = [32, 96], strides = [1, 1]} : vector<64x96xf32> to vector<32x96xf32>
    %c0_4 = arith.constant 0 : index
    %c0_5 = arith.constant 0 : index
    %c0_6 = arith.constant 0 : index
    %6 = vector.load %arg4[%c0_4, %c0_5, %c0_6] : memref<2x1x128xf32, #tpu.memory_space<vmem>>, vector<1x1x128xf32>
    %7 = vector.shape_cast %6 : vector<1x1x128xf32> to vector<1x128xf32>
    %8 = vector.extract_strided_slice %7 {offsets = [0, 96], sizes = [1, 32], strides = [1, 1]} : vector<1x128xf32> to vector<1x32xf32>
    %9 = vector.shape_cast %8 : vector<1x32xf32> to vector<1x32xf32>
    %10 = vector.broadcast %9 : vector<1x32xf32> to vector<8x32xf32>
    %c1 = arith.constant 1 : index
    %c0_7 = arith.constant 0 : index
    %c0_8 = arith.constant 0 : index
    %11 = vector.load %arg3[%c1, %c0_7, %c0_8] : memref<2x64x96xf32, #tpu.memory_space<vmem>>, vector<1x64x96xf32>
    %12 = vector.shape_cast %11 : vector<1x64x96xf32> to vector<64x96xf32>
    %13 = vector.extract_strided_slice %12 {offsets = [0, 0], sizes = [32, 96], strides = [1, 1]} : vector<64x96xf32> to vector<32x96xf32>
    %14 = vector.extract_strided_slice %12 {offsets = [32, 0], sizes = [32, 96], strides = [1, 1]} : vector<64x96xf32> to vector<32x96xf32>
    %c1_9 = arith.constant 1 : index
    %c0_10 = arith.constant 0 : index
    %c0_11 = arith.constant 0 : index
    %15 = vector.load %arg4[%c1_9, %c0_10, %c0_11] : memref<2x1x128xf32, #tpu.memory_space<vmem>>, vector<1x1x128xf32>
    %16 = vector.shape_cast %15 : vector<1x1x128xf32> to vector<1x128xf32>
    %17 = vector.extract_strided_slice %16 {offsets = [0, 0], sizes = [1, 96], strides = [1, 1]} : vector<1x128xf32> to vector<1x96xf32>
    %18 = vector.shape_cast %17 : vector<1x96xf32> to vector<1x96xf32>
    %19 = vector.broadcast %18 : vector<1x96xf32> to vector<8x96xf32>
    %20 = vector.extract_strided_slice %16 {offsets = [0, 96], sizes = [1, 32], strides = [1, 1]} : vector<1x128xf32> to vector<1x32xf32>
    %21 = vector.shape_cast %20 : vector<1x32xf32> to vector<1x32xf32>
    %22 = vector.broadcast %21 : vector<1x32xf32> to vector<8x32xf32>
    %c0_12 = arith.constant 0 : index
    %c0_13 = arith.constant 0 : index
    %23 = vector.load %arg0[%c0_12, %c0_13] : memref<128x8xf32, #tpu.memory_space<vmem>>, vector<128x8xf32>
    %cst_14 = arith.constant dense<0.000000e+00> : vector<128x96xf32>
    %24 = tpu.matmul %23, %4, %cst_14 {dimension_numbers = #tpu.dot_dimension_numbers<[1], [0], [0], [1], [0, 0, 1, 1], [], []>} : vector<128x8xf32>, vector<8x96xf32>, vector<128x96xf32> -> vector<128x96xf32>
    %c0_15 = arith.constant 0 : index
    %c0_16 = arith.constant 0 : index
    %c0_17 = arith.constant 0 : index
    %25 = vector.load %arg4[%c0_15, %c0_16, %c0_17] : memref<2x1x128xf32, #tpu.memory_space<vmem>>, vector<1x1x128xf32>
    %26 = vector.shape_cast %25 : vector<1x1x128xf32> to vector<1x128xf32>
    %27 = vector.extract_strided_slice %26 {offsets = [0, 0], sizes = [1, 96], strides = [1, 1]} : vector<1x128xf32> to vector<1x96xf32>
    %28 = vector.broadcast %27 : vector<1x96xf32> to vector<128x96xf32>
    %29 = arith.addf %24, %28 : vector<128x96xf32>
    %c0_18 = arith.constant 0 : index
    %c0_19 = arith.constant 0 : index
    %30 = vector.load %arg8[%c0_18, %c0_19] : memref<128x96xf32, #tpu.memory_space<vmem>>, vector<128x96xf32>
    tpu.vector_store %arg8[%c0_18, %c0_19], %29 {strides = array<i32>} : memref<128x96xf32, #tpu.memory_space<vmem>>, vector<128x96xf32>,
    %c0_20 = arith.constant 0 : index
    %c0_21 = arith.constant 0 : index
    %c0_22 = arith.constant 0 : index
    %31 = vector.load %arg2[%c0_20, %c0_21, %c0_22] : memref<2x8x32xf32, #tpu.memory_space<vmem>>, vector<1x8x32xf32>
    %32 = vector.shape_cast %31 : vector<1x8x32xf32> to vector<8x32xf32>
    %c1_23 = arith.constant 1 : index
    %c0_24 = arith.constant 0 : index
    %c0_25 = arith.constant 0 : index
    %33 = vector.load %arg2[%c1_23, %c0_24, %c0_25] : memref<2x8x32xf32, #tpu.memory_space<vmem>>, vector<1x8x32xf32>
    %34 = vector.shape_cast %33 : vector<1x8x32xf32> to vector<8x32xf32>
    %c0_26 = arith.constant 0 : index
    %c0_27 = arith.constant 0 : index
    %35 = vector.load %arg8[%c0_26, %c0_27] : memref<128x96xf32, #tpu.memory_space<vmem>>, vector<8x96xf32>
    %cst_28 = arith.constant dense<0.000000e+00> : vector<8x96xf32>
    %36 = tpu.matmul %32, %5, %cst_28 {dimension_numbers = #tpu.dot_dimension_numbers<[1], [0], [0], [1], [0, 0, 1, 1], [], []>} : vector<8x32xf32>, vector<32x96xf32>, vector<8x96xf32> -> vector<8x96xf32>
    %37 = vector.extract_strided_slice %35 {offsets = [0, 0], sizes = [8, 64], strides = [1, 1]} : vector<8x96xf32> to vector<8x64xf32>
    %38 = vector.extract_strided_slice %36 {offsets = [0, 0], sizes = [8, 64], strides = [1, 1]} : vector<8x96xf32> to vector<8x64xf32>
    %39 = arith.addf %37, %38 : vector<8x64xf32>
    %40 = arith.negf %39 : vector<8x64xf32>
    %41 = math.exp %40 : vector<8x64xf32>
    %cst_29 = arith.constant 1.000000e+00 : f32
    %42 = vector.broadcast %cst_29 : f32 to vector<8x64xf32>
    %43 = arith.addf %42, %41 : vector<8x64xf32>
    %44 = arith.divf %42, %43 : vector<8x64xf32>
    %45 = vector.extract_strided_slice %44 {offsets = [0, 0], sizes = [8, 32], strides = [1, 1]} : vector<8x64xf32> to vector<8x32xf32>
    %46 = vector.extract_strided_slice %44 {offsets = [0, 32], sizes = [8, 32], strides = [1, 1]} : vector<8x64xf32> to vector<8x32xf32>
    %47 = vector.extract_strided_slice %35 {offsets = [0, 64], sizes = [8, 32], strides = [1, 1]} : vector<8x96xf32> to vector<8x32xf32>
    %48 = vector.extract_strided_slice %36 {offsets = [0, 64], sizes = [8, 32], strides = [1, 1]} : vector<8x96xf32> to vector<8x32xf32>
    %49 = arith.addf %48, %10 : vector<8x32xf32>
    %50 = arith.mulf %45, %49 : vector<8x32xf32>
    %51 = arith.addf %47, %50 : vector<8x32xf32>
    %52 = math.tanh %51 : vector<8x32xf32>
    %cst_30 = arith.constant 1.000000e+00 : f32
    %53 = vector.broadcast %cst_30 : f32 to vector<8x32xf32>
    %54 = arith.subf %53, %46 : vector<8x32xf32>
    %55 = arith.mulf %54, %52 : vector<8x32xf32>
    %56 = arith.mulf %46, %32 : vector<8x32xf32>
    %57 = arith.addf %55, %56 : vector<8x32xf32>
    %cst_31 = arith.constant dense<0.000000e+00> : vector<8x96xf32>
    %58 = tpu.matmul %57, %13, %cst_31 {dimension_numbers = #tpu.dot_dimension_numbers<[1], [0], [0], [1], [0, 0, 1, 1], [], []>} : vector<8x32xf32>, vector<32x96xf32>, vector<8x96xf32> -> vector<8x96xf32>
    %59 = arith.addf %58, %19 : vector<8x96xf32>
    %cst_32 = arith.constant dense<0.000000e+00> : vector<8x96xf32>
    %60 = tpu.matmul %34, %14, %cst_32 {dimension_numbers = #tpu.dot_dimension_numbers<[1], [0], [0], [1], [0, 0, 1, 1], [], []>} : vector<8x32xf32>, vector<32x96xf32>, vector<8x96xf32> -> vector<8x96xf32>
    %61 = vector.extract_strided_slice %59 {offsets = [0, 0], sizes = [8, 64], strides = [1, 1]} : vector<8x96xf32> to vector<8x64xf32>
    %62 = vector.extract_strided_slice %60 {offsets = [0, 0], sizes = [8, 64], strides = [1, 1]} : vector<8x96xf32> to vector<8x64xf32>
    %63 = arith.addf %61, %62 : vector<8x64xf32>
    %64 = arith.negf %63 : vector<8x64xf32>
    %65 = math.exp %64 : vector<8x64xf32>
    %cst_33 = arith.constant 1.000000e+00 : f32
    %66 = vector.broadcast %cst_33 : f32 to vector<8x64xf32>
    %67 = arith.addf %66, %65 : vector<8x64xf32>
    %68 = arith.divf %66, %67 : vector<8x64xf32>
    %69 = vector.extract_strided_slice %68 {offsets = [0, 0], sizes = [8, 32], strides = [1, 1]} : vector<8x64xf32> to vector<8x32xf32>
    %70 = vector.extract_strided_slice %68 {offsets = [0, 32], sizes = [8, 32], strides = [1, 1]} : vector<8x64xf32> to vector<8x32xf32>
    %71 = vector.extract_strided_slice %59 {offsets = [0, 64], sizes = [8, 32], strides = [1, 1]} : vector<8x96xf32> to vector<8x32xf32>
    %72 = vector.extract_strided_slice %60 {offsets = [0, 64], sizes = [8, 32], strides = [1, 1]} : vector<8x96xf32> to vector<8x32xf32>
    %73 = arith.addf %72, %22 : vector<8x32xf32>
    %74 = arith.mulf %69, %73 : vector<8x32xf32>
    %75 = arith.addf %71, %74 : vector<8x32xf32>
    %76 = math.tanh %75 : vector<8x32xf32>
    %cst_34 = arith.constant 1.000000e+00 : f32
    %77 = vector.broadcast %cst_34 : f32 to vector<8x32xf32>
    %78 = arith.subf %77, %70 : vector<8x32xf32>
    %79 = arith.mulf %78, %76 : vector<8x32xf32>
    %80 = arith.mulf %70, %34 : vector<8x32xf32>
    %81 = arith.addf %79, %80 : vector<8x32xf32>
    %c0_35 = arith.constant 0 : index
    %c0_36 = arith.constant 0 : index
    %82 = vector.load %arg9[%c0_35, %c0_36] : memref<128x32xf32, #tpu.memory_space<vmem>>, vector<8x32xf32>
    tpu.vector_store %arg9[%c0_35, %c0_36], %81 {strides = array<i32>} : memref<128x32xf32, #tpu.memory_space<vmem>>, vector<8x32xf32>,
    %c8 = arith.constant 8 : index
    %c0_37 = arith.constant 0 : index
    %83 = vector.load %arg8[%c8, %c0_37] : memref<128x96xf32, #tpu.memory_space<vmem>>, vector<8x96xf32>
    %cst_38 = arith.constant dense<0.000000e+00> : vector<8x96xf32>
    %84 = tpu.matmul %57, %5, %cst_38 {dimension_numbers = #tpu.dot_dimension_numbers<[1], [0], [0], [1], [0, 0, 1, 1], [], []>} : vector<8x32xf32>, vector<32x96xf32>, vector<8x96xf32> -> vector<8x96xf32>
    %85 = vector.extract_strided_slice %83 {offsets = [0, 0], sizes = [8, 64], strides = [1, 1]} : vector<8x96xf32> to vector<8x64xf32>
    %86 = vector.extract_strided_slice %84 {offsets = [0, 0], sizes = [8, 64], strides = [1, 1]} : vector<8x96xf32> to vector<8x64xf32>
    %87 = arith.addf %85, %86 : vector<8x64xf32>
    %88 = arith.negf %87 : vector<8x64xf32>
    %89 = math.exp %88 : vector<8x64xf32>
    %cst_39 = arith.constant 1.000000e+00 : f32
    %90 = vector.broadcast %cst_39 : f32 to vector<8x64xf32>
    %91 = arith.addf %90, %89 : vector<8x64xf32>
    %92 = arith.divf %90, %91 : vector<8x64xf32>
    %93 = vector.extract_strided_slice %92 {offsets = [0, 0], sizes = [8, 32], strides = [1, 1]} : vector<8x64xf32> to vector<8x32xf32>
    %94 = vector.extract_strided_slice %92 {offsets = [0, 32], sizes = [8, 32], strides = [1, 1]} : vector<8x64xf32> to vector<8x32xf32>
    %95 = vector.extract_strided_slice %83 {offsets = [0, 64], sizes = [8, 32], strides = [1, 1]} : vector<8x96xf32> to vector<8x32xf32>
    %96 = vector.extract_strided_slice %84 {offsets = [0, 64], sizes = [8, 32], strides = [1, 1]} : vector<8x96xf32> to vector<8x32xf32>
    %97 = arith.addf %96, %10 : vector<8x32xf32>
    %98 = arith.mulf %93, %97 : vector<8x32xf32>
    %99 = arith.addf %95, %98 : vector<8x32xf32>
    %100 = math.tanh %99 : vector<8x32xf32>
    %cst_40 = arith.constant 1.000000e+00 : f32
    %101 = vector.broadcast %cst_40 : f32 to vector<8x32xf32>
    %102 = arith.subf %101, %94 : vector<8x32xf32>
    %103 = arith.mulf %102, %100 : vector<8x32xf32>
    %104 = arith.mulf %94, %57 : vector<8x32xf32>
    %105 = arith.addf %103, %104 : vector<8x32xf32>
    %cst_41 = arith.constant dense<0.000000e+00> : vector<8x96xf32>
    %106 = tpu.matmul %105, %13, %cst_41 {dimension_numbers = #tpu.dot_dimension_numbers<[1], [0], [0], [1], [0, 0, 1, 1], [], []>} : vector<8x32xf32>, vector<32x96xf32>, vector<8x96xf32> -> vector<8x96xf32>
    %107 = arith.addf %106, %19 : vector<8x96xf32>
    %cst_42 = arith.constant dense<0.000000e+00> : vector<8x96xf32>
    %108 = tpu.matmul %81, %14, %cst_42 {dimension_numbers = #tpu.dot_dimension_numbers<[1], [0], [0], [1], [0, 0, 1, 1], [], []>} : vector<8x32xf32>, vector<32x96xf32>, vector<8x96xf32> -> vector<8x96xf32>
    %109 = vector.extract_strided_slice %107 {offsets = [0, 0], sizes = [8, 64], strides = [1, 1]} : vector<8x96xf32> to vector<8x64xf32>
    %110 = vector.extract_strided_slice %108 {offsets = [0, 0], sizes = [8, 64], strides = [1, 1]} : vector<8x96xf32> to vector<8x64xf32>
    %111 = arith.addf %109, %110 : vector<8x64xf32>
    %112 = arith.negf %111 : vector<8x64xf32>
    %113 = math.exp %112 : vector<8x64xf32>
    %cst_43 = arith.constant 1.000000e+00 : f32
    %114 = vector.broadcast %cst_43 : f32 to vector<8x64xf32>
    %115 = arith.addf %114, %113 : vector<8x64xf32>
    %116 = arith.divf %114, %115 : vector<8x64xf32>
    %117 = vector.extract_strided_slice %116 {offsets = [0, 0], sizes = [8, 32], strides = [1, 1]} : vector<8x64xf32> to vector<8x32xf32>
    %118 = vector.extract_strided_slice %116 {offsets = [0, 32], sizes = [8, 32], strides = [1, 1]} : vector<8x64xf32> to vector<8x32xf32>
    %119 = vector.extract_strided_slice %107 {offsets = [0, 64], sizes = [8, 32], strides = [1, 1]} : vector<8x96xf32> to vector<8x32xf32>
    %120 = vector.extract_strided_slice %108 {offsets = [0, 64], sizes = [8, 32], strides = [1, 1]} : vector<8x96xf32> to vector<8x32xf32>
    %121 = arith.addf %120, %22 : vector<8x32xf32>
    %122 = arith.mulf %117, %121 : vector<8x32xf32>
    %123 = arith.addf %119, %122 : vector<8x32xf32>
    %124 = math.tanh %123 : vector<8x32xf32>
    %cst_44 = arith.constant 1.000000e+00 : f32
    %125 = vector.broadcast %cst_44 : f32 to vector<8x32xf32>
    %126 = arith.subf %125, %118 : vector<8x32xf32>
    %127 = arith.mulf %126, %124 : vector<8x32xf32>
    %128 = arith.mulf %118, %81 : vector<8x32xf32>
    %129 = arith.addf %127, %128 : vector<8x32xf32>
    %c8_45 = arith.constant 8 : index
    %c0_46 = arith.constant 0 : index
    %130 = vector.load %arg9[%c8_45, %c0_46] : memref<128x32xf32, #tpu.memory_space<vmem>>, vector<8x32xf32>
    tpu.vector_store %arg9[%c8_45, %c0_46], %129 {strides = array<i32>} : memref<128x32xf32, #tpu.memory_space<vmem>>, vector<8x32xf32>,
    %c16 = arith.constant 16 : index
    %c0_47 = arith.constant 0 : index
    %131 = vector.load %arg8[%c16, %c0_47] : memref<128x96xf32, #tpu.memory_space<vmem>>, vector<8x96xf32>
    %cst_48 = arith.constant dense<0.000000e+00> : vector<8x96xf32>
    %132 = tpu.matmul %105, %5, %cst_48 {dimension_numbers = #tpu.dot_dimension_numbers<[1], [0], [0], [1], [0, 0, 1, 1], [], []>} : vector<8x32xf32>, vector<32x96xf32>, vector<8x96xf32> -> vector<8x96xf32>
    %133 = vector.extract_strided_slice %131 {offsets = [0, 0], sizes = [8, 64], strides = [1, 1]} : vector<8x96xf32> to vector<8x64xf32>
    %134 = vector.extract_strided_slice %132 {offsets = [0, 0], sizes = [8, 64], strides = [1, 1]} : vector<8x96xf32> to vector<8x64xf32>
    %135 = arith.addf %133, %134 : vector<8x64xf32>
    %136 = arith.negf %135 : vector<8x64xf32>
    %137 = math.exp %136 : vector<8x64xf32>
    %cst_49 = arith.constant 1.000000e+00 : f32
    %138 = vector.broadcast %cst_49 : f32 to vector<8x64xf32>
    %139 = arith.addf %138, %137 : vector<8x64xf32>
    %140 = arith.divf %138, %139 : vector<8x64xf32>
    %141 = vector.extract_strided_slice %140 {offsets = [0, 0], sizes = [8, 32], strides = [1, 1]} : vector<8x64xf32> to vector<8x32xf32>
    %142 = vector.extract_strided_slice %140 {offsets = [0, 32], sizes = [8, 32], strides = [1, 1]} : vector<8x64xf32> to vector<8x32xf32>
    %143 = vector.extract_strided_slice %131 {offsets = [0, 64], sizes = [8, 32], strides = [1, 1]} : vector<8x96xf32> to vector<8x32xf32>
    %144 = vector.extract_strided_slice %132 {offsets = [0, 64], sizes = [8, 32], strides = [1, 1]} : vector<8x96xf32> to vector<8x32xf32>
    %145 = arith.addf %144, %10 : vector<8x32xf32>
    %146 = arith.mulf %141, %145 : vector<8x32xf32>
    %147 = arith.addf %143, %146 : vector<8x32xf32>
    %148 = math.tanh %147 : vector<8x32xf32>
    %cst_50 = arith.constant 1.000000e+00 : f32
    %149 = vector.broadcast %cst_50 : f32 to vector<8x32xf32>
    %150 = arith.subf %149, %142 : vector<8x32xf32>
    %151 = arith.mulf %150, %148 : vector<8x32xf32>
    %152 = arith.mulf %142, %105 : vector<8x32xf32>
    %153 = arith.addf %151, %152 : vector<8x32xf32>
    %cst_51 = arith.constant dense<0.000000e+00> : vector<8x96xf32>
    %154 = tpu.matmul %153, %13, %cst_51 {dimension_numbers = #tpu.dot_dimension_numbers<[1], [0], [0], [1], [0, 0, 1, 1], [], []>} : vector<8x32xf32>, vector<32x96xf32>, vector<8x96xf32> -> vector<8x96xf32>
    %155 = arith.addf %154, %19 : vector<8x96xf32>
    %cst_52 = arith.constant dense<0.000000e+00> : vector<8x96xf32>
    %156 = tpu.matmul %129, %14, %cst_52 {dimension_numbers = #tpu.dot_dimension_numbers<[1], [0], [0], [1], [0, 0, 1, 1], [], []>} : vector<8x32xf32>, vector<32x96xf32>, vector<8x96xf32> -> vector<8x96xf32>
    %157 = vector.extract_strided_slice %155 {offsets = [0, 0], sizes = [8, 64], strides = [1, 1]} : vector<8x96xf32> to vector<8x64xf32>
    %158 = vector.extract_strided_slice %156 {offsets = [0, 0], sizes = [8, 64], strides = [1, 1]} : vector<8x96xf32> to vector<8x64xf32>
    %159 = arith.addf %157, %158 : vector<8x64xf32>
    %160 = arith.negf %159 : vector<8x64xf32>
    %161 = math.exp %160 : vector<8x64xf32>
    %cst_53 = arith.constant 1.000000e+00 : f32
    %162 = vector.broadcast %cst_53 : f32 to vector<8x64xf32>
    %163 = arith.addf %162, %161 : vector<8x64xf32>
    %164 = arith.divf %162, %163 : vector<8x64xf32>
    %165 = vector.extract_strided_slice %164 {offsets = [0, 0], sizes = [8, 32], strides = [1, 1]} : vector<8x64xf32> to vector<8x32xf32>
    %166 = vector.extract_strided_slice %164 {offsets = [0, 32], sizes = [8, 32], strides = [1, 1]} : vector<8x64xf32> to vector<8x32xf32>
    %167 = vector.extract_strided_slice %155 {offsets = [0, 64], sizes = [8, 32], strides = [1, 1]} : vector<8x96xf32> to vector<8x32xf32>
    %168 = vector.extract_strided_slice %156 {offsets = [0, 64], sizes = [8, 32], strides = [1, 1]} : vector<8x96xf32> to vector<8x32xf32>
    %169 = arith.addf %168, %22 : vector<8x32xf32>
    %170 = arith.mulf %165, %169 : vector<8x32xf32>
    %171 = arith.addf %167, %170 : vector<8x32xf32>
    %172 = math.tanh %171 : vector<8x32xf32>
    %cst_54 = arith.constant 1.000000e+00 : f32
    %173 = vector.broadcast %cst_54 : f32 to vector<8x32xf32>
    %174 = arith.subf %173, %166 : vector<8x32xf32>
    %175 = arith.mulf %174, %172 : vector<8x32xf32>
    %176 = arith.mulf %166, %129 : vector<8x32xf32>
    %177 = arith.addf %175, %176 : vector<8x32xf32>
    %c16_55 = arith.constant 16 : index
    %c0_56 = arith.constant 0 : index
    %178 = vector.load %arg9[%c16_55, %c0_56] : memref<128x32xf32, #tpu.memory_space<vmem>>, vector<8x32xf32>
    tpu.vector_store %arg9[%c16_55, %c0_56], %177 {strides = array<i32>} : memref<128x32xf32, #tpu.memory_space<vmem>>, vector<8x32xf32>,
    %c24 = arith.constant 24 : index
    %c0_57 = arith.constant 0 : index
    %179 = vector.load %arg8[%c24, %c0_57] : memref<128x96xf32, #tpu.memory_space<vmem>>, vector<8x96xf32>
    %cst_58 = arith.constant dense<0.000000e+00> : vector<8x96xf32>
    %180 = tpu.matmul %153, %5, %cst_58 {dimension_numbers = #tpu.dot_dimension_numbers<[1], [0], [0], [1], [0, 0, 1, 1], [], []>} : vector<8x32xf32>, vector<32x96xf32>, vector<8x96xf32> -> vector<8x96xf32>
    %181 = vector.extract_strided_slice %179 {offsets = [0, 0], sizes = [8, 64], strides = [1, 1]} : vector<8x96xf32> to vector<8x64xf32>
    %182 = vector.extract_strided_slice %180 {offsets = [0, 0], sizes = [8, 64], strides = [1, 1]} : vector<8x96xf32> to vector<8x64xf32>
    %183 = arith.addf %181, %182 : vector<8x64xf32>
    %184 = arith.negf %183 : vector<8x64xf32>
    %185 = math.exp %184 : vector<8x64xf32>
    %cst_59 = arith.constant 1.000000e+00 : f32
    %186 = vector.broadcast %cst_59 : f32 to vector<8x64xf32>
    %187 = arith.addf %186, %185 : vector<8x64xf32>
    %188 = arith.divf %186, %187 : vector<8x64xf32>
    %189 = vector.extract_strided_slice %188 {offsets = [0, 0], sizes = [8, 32], strides = [1, 1]} : vector<8x64xf32> to vector<8x32xf32>
    %190 = vector.extract_strided_slice %188 {offsets = [0, 32], sizes = [8, 32], strides = [1, 1]} : vector<8x64xf32> to vector<8x32xf32>
    %191 = vector.extract_strided_slice %179 {offsets = [0, 64], sizes = [8, 32], strides = [1, 1]} : vector<8x96xf32> to vector<8x32xf32>
    %192 = vector.extract_strided_slice %180 {offsets = [0, 64], sizes = [8, 32], strides = [1, 1]} : vector<8x96xf32> to vector<8x32xf32>
    %193 = arith.addf %192, %10 : vector<8x32xf32>
    %194 = arith.mulf %189, %193 : vector<8x32xf32>
    %195 = arith.addf %191, %194 : vector<8x32xf32>
    %196 = math.tanh %195 : vector<8x32xf32>
    %cst_60 = arith.constant 1.000000e+00 : f32
    %197 = vector.broadcast %cst_60 : f32 to vector<8x32xf32>
    %198 = arith.subf %197, %190 : vector<8x32xf32>
    %199 = arith.mulf %198, %196 : vector<8x32xf32>
    %200 = arith.mulf %190, %153 : vector<8x32xf32>
    %201 = arith.addf %199, %200 : vector<8x32xf32>
    %cst_61 = arith.constant dense<0.000000e+00> : vector<8x96xf32>
    %202 = tpu.matmul %201, %13, %cst_61 {dimension_numbers = #tpu.dot_dimension_numbers<[1], [0], [0], [1], [0, 0, 1, 1], [], []>} : vector<8x32xf32>, vector<32x96xf32>, vector<8x96xf32> -> vector<8x96xf32>
    %203 = arith.addf %202, %19 : vector<8x96xf32>
    %cst_62 = arith.constant dense<0.000000e+00> : vector<8x96xf32>
    %204 = tpu.matmul %177, %14, %cst_62 {dimension_numbers = #tpu.dot_dimension_numbers<[1], [0], [0], [1], [0, 0, 1, 1], [], []>} : vector<8x32xf32>, vector<32x96xf32>, vector<8x96xf32> -> vector<8x96xf32>
    %205 = vector.extract_strided_slice %203 {offsets = [0, 0], sizes = [8, 64], strides = [1, 1]} : vector<8x96xf32> to vector<8x64xf32>
    %206 = vector.extract_strided_slice %204 {offsets = [0, 0], sizes = [8, 64], strides = [1, 1]} : vector<8x96xf32> to vector<8x64xf32>
    %207 = arith.addf %205, %206 : vector<8x64xf32>
    %208 = arith.negf %207 : vector<8x64xf32>
    %209 = math.exp %208 : vector<8x64xf32>
    %cst_63 = arith.constant 1.000000e+00 : f32
    %210 = vector.broadcast %cst_63 : f32 to vector<8x64xf32>
    %211 = arith.addf %210, %209 : vector<8x64xf32>
    %212 = arith.divf %210, %211 : vector<8x64xf32>
    %213 = vector.extract_strided_slice %212 {offsets = [0, 0], sizes = [8, 32], strides = [1, 1]} : vector<8x64xf32> to vector<8x32xf32>
    %214 = vector.extract_strided_slice %212 {offsets = [0, 32], sizes = [8, 32], strides = [1, 1]} : vector<8x64xf32> to vector<8x32xf32>
    %215 = vector.extract_strided_slice %203 {offsets = [0, 64], sizes = [8, 32], strides = [1, 1]} : vector<8x96xf32> to vector<8x32xf32>
    %216 = vector.extract_strided_slice %204 {offsets = [0, 64], sizes = [8, 32], strides = [1, 1]} : vector<8x96xf32> to vector<8x32xf32>
    %217 = arith.addf %216, %22 : vector<8x32xf32>
    %218 = arith.mulf %213, %217 : vector<8x32xf32>
    %219 = arith.addf %215, %218 : vector<8x32xf32>
    %220 = math.tanh %219 : vector<8x32xf32>
    %cst_64 = arith.constant 1.000000e+00 : f32
    %221 = vector.broadcast %cst_64 : f32 to vector<8x32xf32>
    %222 = arith.subf %221, %214 : vector<8x32xf32>
    %223 = arith.mulf %222, %220 : vector<8x32xf32>
    %224 = arith.mulf %214, %177 : vector<8x32xf32>
    %225 = arith.addf %223, %224 : vector<8x32xf32>
    %c24_65 = arith.constant 24 : index
    %c0_66 = arith.constant 0 : index
    %226 = vector.load %arg9[%c24_65, %c0_66] : memref<128x32xf32, #tpu.memory_space<vmem>>, vector<8x32xf32>
    tpu.vector_store %arg9[%c24_65, %c0_66], %225 {strides = array<i32>} : memref<128x32xf32, #tpu.memory_space<vmem>>, vector<8x32xf32>,
    %c32 = arith.constant 32 : index
    %c0_67 = arith.constant 0 : index
    %227 = vector.load %arg8[%c32, %c0_67] : memref<128x96xf32, #tpu.memory_space<vmem>>, vector<8x96xf32>
    %cst_68 = arith.constant dense<0.000000e+00> : vector<8x96xf32>
    %228 = tpu.matmul %201, %5, %cst_68 {dimension_numbers = #tpu.dot_dimension_numbers<[1], [0], [0], [1], [0, 0, 1, 1], [], []>} : vector<8x32xf32>, vector<32x96xf32>, vector<8x96xf32> -> vector<8x96xf32>
    %229 = vector.extract_strided_slice %227 {offsets = [0, 0], sizes = [8, 64], strides = [1, 1]} : vector<8x96xf32> to vector<8x64xf32>
    %230 = vector.extract_strided_slice %228 {offsets = [0, 0], sizes = [8, 64], strides = [1, 1]} : vector<8x96xf32> to vector<8x64xf32>
    %231 = arith.addf %229, %230 : vector<8x64xf32>
    %232 = arith.negf %231 : vector<8x64xf32>
    %233 = math.exp %232 : vector<8x64xf32>
    %cst_69 = arith.constant 1.000000e+00 : f32
    %234 = vector.broadcast %cst_69 : f32 to vector<8x64xf32>
    %235 = arith.addf %234, %233 : vector<8x64xf32>
    %236 = arith.divf %234, %235 : vector<8x64xf32>
    %237 = vector.extract_strided_slice %236 {offsets = [0, 0], sizes = [8, 32], strides = [1, 1]} : vector<8x64xf32> to vector<8x32xf32>
    %238 = vector.extract_strided_slice %236 {offsets = [0, 32], sizes = [8, 32], strides = [1, 1]} : vector<8x64xf32> to vector<8x32xf32>
    %239 = vector.extract_strided_slice %227 {offsets = [0, 64], sizes = [8, 32], strides = [1, 1]} : vector<8x96xf32> to vector<8x32xf32>
    %240 = vector.extract_strided_slice %228 {offsets = [0, 64], sizes = [8, 32], strides = [1, 1]} : vector<8x96xf32> to vector<8x32xf32>
    %241 = arith.addf %240, %10 : vector<8x32xf32>
    %242 = arith.mulf %237, %241 : vector<8x32xf32>
    %243 = arith.addf %239, %242 : vector<8x32xf32>
    %244 = math.tanh %243 : vector<8x32xf32>
    %cst_70 = arith.constant 1.000000e+00 : f32
    %245 = vector.broadcast %cst_70 : f32 to vector<8x32xf32>
    %246 = arith.subf %245, %238 : vector<8x32xf32>
    %247 = arith.mulf %246, %244 : vector<8x32xf32>
    %248 = arith.mulf %238, %201 : vector<8x32xf32>
    %249 = arith.addf %247, %248 : vector<8x32xf32>
    %cst_71 = arith.constant dense<0.000000e+00> : vector<8x96xf32>
    %250 = tpu.matmul %249, %13, %cst_71 {dimension_numbers = #tpu.dot_dimension_numbers<[1], [0], [0], [1], [0, 0, 1, 1], [], []>} : vector<8x32xf32>, vector<32x96xf32>, vector<8x96xf32> -> vector<8x96xf32>
    %251 = arith.addf %250, %19 : vector<8x96xf32>
    %cst_72 = arith.constant dense<0.000000e+00> : vector<8x96xf32>
    %252 = tpu.matmul %225, %14, %cst_72 {dimension_numbers = #tpu.dot_dimension_numbers<[1], [0], [0], [1], [0, 0, 1, 1], [], []>} : vector<8x32xf32>, vector<32x96xf32>, vector<8x96xf32> -> vector<8x96xf32>
    %253 = vector.extract_strided_slice %251 {offsets = [0, 0], sizes = [8, 64], strides = [1, 1]} : vector<8x96xf32> to vector<8x64xf32>
    %254 = vector.extract_strided_slice %252 {offsets = [0, 0], sizes = [8, 64], strides = [1, 1]} : vector<8x96xf32> to vector<8x64xf32>
    %255 = arith.addf %253, %254 : vector<8x64xf32>
    %256 = arith.negf %255 : vector<8x64xf32>
    %257 = math.exp %256 : vector<8x64xf32>
    %cst_73 = arith.constant 1.000000e+00 : f32
    %258 = vector.broadcast %cst_73 : f32 to vector<8x64xf32>
    %259 = arith.addf %258, %257 : vector<8x64xf32>
    %260 = arith.divf %258, %259 : vector<8x64xf32>
    %261 = vector.extract_strided_slice %260 {offsets = [0, 0], sizes = [8, 32], strides = [1, 1]} : vector<8x64xf32> to vector<8x32xf32>
    %262 = vector.extract_strided_slice %260 {offsets = [0, 32], sizes = [8, 32], strides = [1, 1]} : vector<8x64xf32> to vector<8x32xf32>
    %263 = vector.extract_strided_slice %251 {offsets = [0, 64], sizes = [8, 32], strides = [1, 1]} : vector<8x96xf32> to vector<8x32xf32>
    %264 = vector.extract_strided_slice %252 {offsets = [0, 64], sizes = [8, 32], strides = [1, 1]} : vector<8x96xf32> to vector<8x32xf32>
    %265 = arith.addf %264, %22 : vector<8x32xf32>
    %266 = arith.mulf %261, %265 : vector<8x32xf32>
    %267 = arith.addf %263, %266 : vector<8x32xf32>
    %268 = math.tanh %267 : vector<8x32xf32>
    %cst_74 = arith.constant 1.000000e+00 : f32
    %269 = vector.broadcast %cst_74 : f32 to vector<8x32xf32>
    %270 = arith.subf %269, %262 : vector<8x32xf32>
    %271 = arith.mulf %270, %268 : vector<8x32xf32>
    %272 = arith.mulf %262, %225 : vector<8x32xf32>
    %273 = arith.addf %271, %272 : vector<8x32xf32>
    %c32_75 = arith.constant 32 : index
    %c0_76 = arith.constant 0 : index
    %274 = vector.load %arg9[%c32_75, %c0_76] : memref<128x32xf32, #tpu.memory_space<vmem>>, vector<8x32xf32>
    tpu.vector_store %arg9[%c32_75, %c0_76], %273 {strides = array<i32>} : memref<128x32xf32, #tpu.memory_space<vmem>>, vector<8x32xf32>,
    %c40 = arith.constant 40 : index
    %c0_77 = arith.constant 0 : index
    %275 = vector.load %arg8[%c40, %c0_77] : memref<128x96xf32, #tpu.memory_space<vmem>>, vector<8x96xf32>
    %cst_78 = arith.constant dense<0.000000e+00> : vector<8x96xf32>
    %276 = tpu.matmul %249, %5, %cst_78 {dimension_numbers = #tpu.dot_dimension_numbers<[1], [0], [0], [1], [0, 0, 1, 1], [], []>} : vector<8x32xf32>, vector<32x96xf32>, vector<8x96xf32> -> vector<8x96xf32>
    %277 = vector.extract_strided_slice %275 {offsets = [0, 0], sizes = [8, 64], strides = [1, 1]} : vector<8x96xf32> to vector<8x64xf32>
    %278 = vector.extract_strided_slice %276 {offsets = [0, 0], sizes = [8, 64], strides = [1, 1]} : vector<8x96xf32> to vector<8x64xf32>
    %279 = arith.addf %277, %278 : vector<8x64xf32>
    %280 = arith.negf %279 : vector<8x64xf32>
    %281 = math.exp %280 : vector<8x64xf32>
    %cst_79 = arith.constant 1.000000e+00 : f32
    %282 = vector.broadcast %cst_79 : f32 to vector<8x64xf32>
    %283 = arith.addf %282, %281 : vector<8x64xf32>
    %284 = arith.divf %282, %283 : vector<8x64xf32>
    %285 = vector.extract_strided_slice %284 {offsets = [0, 0], sizes = [8, 32], strides = [1, 1]} : vector<8x64xf32> to vector<8x32xf32>
    %286 = vector.extract_strided_slice %284 {offsets = [0, 32], sizes = [8, 32], strides = [1, 1]} : vector<8x64xf32> to vector<8x32xf32>
    %287 = vector.extract_strided_slice %275 {offsets = [0, 64], sizes = [8, 32], strides = [1, 1]} : vector<8x96xf32> to vector<8x32xf32>
    %288 = vector.extract_strided_slice %276 {offsets = [0, 64], sizes = [8, 32], strides = [1, 1]} : vector<8x96xf32> to vector<8x32xf32>
    %289 = arith.addf %288, %10 : vector<8x32xf32>
    %290 = arith.mulf %285, %289 : vector<8x32xf32>
    %291 = arith.addf %287, %290 : vector<8x32xf32>
    %292 = math.tanh %291 : vector<8x32xf32>
    %cst_80 = arith.constant 1.000000e+00 : f32
    %293 = vector.broadcast %cst_80 : f32 to vector<8x32xf32>
    %294 = arith.subf %293, %286 : vector<8x32xf32>
    %295 = arith.mulf %294, %292 : vector<8x32xf32>
    %296 = arith.mulf %286, %249 : vector<8x32xf32>
    %297 = arith.addf %295, %296 : vector<8x32xf32>
    %cst_81 = arith.constant dense<0.000000e+00> : vector<8x96xf32>
    %298 = tpu.matmul %297, %13, %cst_81 {dimension_numbers = #tpu.dot_dimension_numbers<[1], [0], [0], [1], [0, 0, 1, 1], [], []>} : vector<8x32xf32>, vector<32x96xf32>, vector<8x96xf32> -> vector<8x96xf32>
    %299 = arith.addf %298, %19 : vector<8x96xf32>
    %cst_82 = arith.constant dense<0.000000e+00> : vector<8x96xf32>
    %300 = tpu.matmul %273, %14, %cst_82 {dimension_numbers = #tpu.dot_dimension_numbers<[1], [0], [0], [1], [0, 0, 1, 1], [], []>} : vector<8x32xf32>, vector<32x96xf32>, vector<8x96xf32> -> vector<8x96xf32>
    %301 = vector.extract_strided_slice %299 {offsets = [0, 0], sizes = [8, 64], strides = [1, 1]} : vector<8x96xf32> to vector<8x64xf32>
    %302 = vector.extract_strided_slice %300 {offsets = [0, 0], sizes = [8, 64], strides = [1, 1]} : vector<8x96xf32> to vector<8x64xf32>
    %303 = arith.addf %301, %302 : vector<8x64xf32>
    %304 = arith.negf %303 : vector<8x64xf32>
    %305 = math.exp %304 : vector<8x64xf32>
    %cst_83 = arith.constant 1.000000e+00 : f32
    %306 = vector.broadcast %cst_83 : f32 to vector<8x64xf32>
    %307 = arith.addf %306, %305 : vector<8x64xf32>
    %308 = arith.divf %306, %307 : vector<8x64xf32>
    %309 = vector.extract_strided_slice %308 {offsets = [0, 0], sizes = [8, 32], strides = [1, 1]} : vector<8x64xf32> to vector<8x32xf32>
    %310 = vector.extract_strided_slice %308 {offsets = [0, 32], sizes = [8, 32], strides = [1, 1]} : vector<8x64xf32> to vector<8x32xf32>
    %311 = vector.extract_strided_slice %299 {offsets = [0, 64], sizes = [8, 32], strides = [1, 1]} : vector<8x96xf32> to vector<8x32xf32>
    %312 = vector.extract_strided_slice %300 {offsets = [0, 64], sizes = [8, 32], strides = [1, 1]} : vector<8x96xf32> to vector<8x32xf32>
    %313 = arith.addf %312, %22 : vector<8x32xf32>
    %314 = arith.mulf %309, %313 : vector<8x32xf32>
    %315 = arith.addf %311, %314 : vector<8x32xf32>
    %316 = math.tanh %315 : vector<8x32xf32>
    %cst_84 = arith.constant 1.000000e+00 : f32
    %317 = vector.broadcast %cst_84 : f32 to vector<8x32xf32>
    %318 = arith.subf %317, %310 : vector<8x32xf32>
    %319 = arith.mulf %318, %316 : vector<8x32xf32>
    %320 = arith.mulf %310, %273 : vector<8x32xf32>
    %321 = arith.addf %319, %320 : vector<8x32xf32>
    %c40_85 = arith.constant 40 : index
    %c0_86 = arith.constant 0 : index
    %322 = vector.load %arg9[%c40_85, %c0_86] : memref<128x32xf32, #tpu.memory_space<vmem>>, vector<8x32xf32>
    tpu.vector_store %arg9[%c40_85, %c0_86], %321 {strides = array<i32>} : memref<128x32xf32, #tpu.memory_space<vmem>>, vector<8x32xf32>,
    %c48 = arith.constant 48 : index
    %c0_87 = arith.constant 0 : index
    %323 = vector.load %arg8[%c48, %c0_87] : memref<128x96xf32, #tpu.memory_space<vmem>>, vector<8x96xf32>
    %cst_88 = arith.constant dense<0.000000e+00> : vector<8x96xf32>
    %324 = tpu.matmul %297, %5, %cst_88 {dimension_numbers = #tpu.dot_dimension_numbers<[1], [0], [0], [1], [0, 0, 1, 1], [], []>} : vector<8x32xf32>, vector<32x96xf32>, vector<8x96xf32> -> vector<8x96xf32>
    %325 = vector.extract_strided_slice %323 {offsets = [0, 0], sizes = [8, 64], strides = [1, 1]} : vector<8x96xf32> to vector<8x64xf32>
    %326 = vector.extract_strided_slice %324 {offsets = [0, 0], sizes = [8, 64], strides = [1, 1]} : vector<8x96xf32> to vector<8x64xf32>
    %327 = arith.addf %325, %326 : vector<8x64xf32>
    %328 = arith.negf %327 : vector<8x64xf32>
    %329 = math.exp %328 : vector<8x64xf32>
    %cst_89 = arith.constant 1.000000e+00 : f32
    %330 = vector.broadcast %cst_89 : f32 to vector<8x64xf32>
    %331 = arith.addf %330, %329 : vector<8x64xf32>
    %332 = arith.divf %330, %331 : vector<8x64xf32>
    %333 = vector.extract_strided_slice %332 {offsets = [0, 0], sizes = [8, 32], strides = [1, 1]} : vector<8x64xf32> to vector<8x32xf32>
    %334 = vector.extract_strided_slice %332 {offsets = [0, 32], sizes = [8, 32], strides = [1, 1]} : vector<8x64xf32> to vector<8x32xf32>
    %335 = vector.extract_strided_slice %323 {offsets = [0, 64], sizes = [8, 32], strides = [1, 1]} : vector<8x96xf32> to vector<8x32xf32>
    %336 = vector.extract_strided_slice %324 {offsets = [0, 64], sizes = [8, 32], strides = [1, 1]} : vector<8x96xf32> to vector<8x32xf32>
    %337 = arith.addf %336, %10 : vector<8x32xf32>
    %338 = arith.mulf %333, %337 : vector<8x32xf32>
    %339 = arith.addf %335, %338 : vector<8x32xf32>
    %340 = math.tanh %339 : vector<8x32xf32>
    %cst_90 = arith.constant 1.000000e+00 : f32
    %341 = vector.broadcast %cst_90 : f32 to vector<8x32xf32>
    %342 = arith.subf %341, %334 : vector<8x32xf32>
    %343 = arith.mulf %342, %340 : vector<8x32xf32>
    %344 = arith.mulf %334, %297 : vector<8x32xf32>
    %345 = arith.addf %343, %344 : vector<8x32xf32>
    %cst_91 = arith.constant dense<0.000000e+00> : vector<8x96xf32>
    %346 = tpu.matmul %345, %13, %cst_91 {dimension_numbers = #tpu.dot_dimension_numbers<[1], [0], [0], [1], [0, 0, 1, 1], [], []>} : vector<8x32xf32>, vector<32x96xf32>, vector<8x96xf32> -> vector<8x96xf32>
    %347 = arith.addf %346, %19 : vector<8x96xf32>
    %cst_92 = arith.constant dense<0.000000e+00> : vector<8x96xf32>
    %348 = tpu.matmul %321, %14, %cst_92 {dimension_numbers = #tpu.dot_dimension_numbers<[1], [0], [0], [1], [0, 0, 1, 1], [], []>} : vector<8x32xf32>, vector<32x96xf32>, vector<8x96xf32> -> vector<8x96xf32>
    %349 = vector.extract_strided_slice %347 {offsets = [0, 0], sizes = [8, 64], strides = [1, 1]} : vector<8x96xf32> to vector<8x64xf32>
    %350 = vector.extract_strided_slice %348 {offsets = [0, 0], sizes = [8, 64], strides = [1, 1]} : vector<8x96xf32> to vector<8x64xf32>
    %351 = arith.addf %349, %350 : vector<8x64xf32>
    %352 = arith.negf %351 : vector<8x64xf32>
    %353 = math.exp %352 : vector<8x64xf32>
    %cst_93 = arith.constant 1.000000e+00 : f32
    %354 = vector.broadcast %cst_93 : f32 to vector<8x64xf32>
    %355 = arith.addf %354, %353 : vector<8x64xf32>
    %356 = arith.divf %354, %355 : vector<8x64xf32>
    %357 = vector.extract_strided_slice %356 {offsets = [0, 0], sizes = [8, 32], strides = [1, 1]} : vector<8x64xf32> to vector<8x32xf32>
    %358 = vector.extract_strided_slice %356 {offsets = [0, 32], sizes = [8, 32], strides = [1, 1]} : vector<8x64xf32> to vector<8x32xf32>
    %359 = vector.extract_strided_slice %347 {offsets = [0, 64], sizes = [8, 32], strides = [1, 1]} : vector<8x96xf32> to vector<8x32xf32>
    %360 = vector.extract_strided_slice %348 {offsets = [0, 64], sizes = [8, 32], strides = [1, 1]} : vector<8x96xf32> to vector<8x32xf32>
    %361 = arith.addf %360, %22 : vector<8x32xf32>
    %362 = arith.mulf %357, %361 : vector<8x32xf32>
    %363 = arith.addf %359, %362 : vector<8x32xf32>
    %364 = math.tanh %363 : vector<8x32xf32>
    %cst_94 = arith.constant 1.000000e+00 : f32
    %365 = vector.broadcast %cst_94 : f32 to vector<8x32xf32>
    %366 = arith.subf %365, %358 : vector<8x32xf32>
    %367 = arith.mulf %366, %364 : vector<8x32xf32>
    %368 = arith.mulf %358, %321 : vector<8x32xf32>
    %369 = arith.addf %367, %368 : vector<8x32xf32>
    %c48_95 = arith.constant 48 : index
    %c0_96 = arith.constant 0 : index
    %370 = vector.load %arg9[%c48_95, %c0_96] : memref<128x32xf32, #tpu.memory_space<vmem>>, vector<8x32xf32>
    tpu.vector_store %arg9[%c48_95, %c0_96], %369 {strides = array<i32>} : memref<128x32xf32, #tpu.memory_space<vmem>>, vector<8x32xf32>,
    %c56 = arith.constant 56 : index
    %c0_97 = arith.constant 0 : index
    %371 = vector.load %arg8[%c56, %c0_97] : memref<128x96xf32, #tpu.memory_space<vmem>>, vector<8x96xf32>
    %cst_98 = arith.constant dense<0.000000e+00> : vector<8x96xf32>
    %372 = tpu.matmul %345, %5, %cst_98 {dimension_numbers = #tpu.dot_dimension_numbers<[1], [0], [0], [1], [0, 0, 1, 1], [], []>} : vector<8x32xf32>, vector<32x96xf32>, vector<8x96xf32> -> vector<8x96xf32>
    %373 = vector.extract_strided_slice %371 {offsets = [0, 0], sizes = [8, 64], strides = [1, 1]} : vector<8x96xf32> to vector<8x64xf32>
    %374 = vector.extract_strided_slice %372 {offsets = [0, 0], sizes = [8, 64], strides = [1, 1]} : vector<8x96xf32> to vector<8x64xf32>
    %375 = arith.addf %373, %374 : vector<8x64xf32>
    %376 = arith.negf %375 : vector<8x64xf32>
    %377 = math.exp %376 : vector<8x64xf32>
    %cst_99 = arith.constant 1.000000e+00 : f32
    %378 = vector.broadcast %cst_99 : f32 to vector<8x64xf32>
    %379 = arith.addf %378, %377 : vector<8x64xf32>
    %380 = arith.divf %378, %379 : vector<8x64xf32>
    %381 = vector.extract_strided_slice %380 {offsets = [0, 0], sizes = [8, 32], strides = [1, 1]} : vector<8x64xf32> to vector<8x32xf32>
    %382 = vector.extract_strided_slice %380 {offsets = [0, 32], sizes = [8, 32], strides = [1, 1]} : vector<8x64xf32> to vector<8x32xf32>
    %383 = vector.extract_strided_slice %371 {offsets = [0, 64], sizes = [8, 32], strides = [1, 1]} : vector<8x96xf32> to vector<8x32xf32>
    %384 = vector.extract_strided_slice %372 {offsets = [0, 64], sizes = [8, 32], strides = [1, 1]} : vector<8x96xf32> to vector<8x32xf32>
    %385 = arith.addf %384, %10 : vector<8x32xf32>
    %386 = arith.mulf %381, %385 : vector<8x32xf32>
    %387 = arith.addf %383, %386 : vector<8x32xf32>
    %388 = math.tanh %387 : vector<8x32xf32>
    %cst_100 = arith.constant 1.000000e+00 : f32
    %389 = vector.broadcast %cst_100 : f32 to vector<8x32xf32>
    %390 = arith.subf %389, %382 : vector<8x32xf32>
    %391 = arith.mulf %390, %388 : vector<8x32xf32>
    %392 = arith.mulf %382, %345 : vector<8x32xf32>
    %393 = arith.addf %391, %392 : vector<8x32xf32>
    %cst_101 = arith.constant dense<0.000000e+00> : vector<8x96xf32>
    %394 = tpu.matmul %393, %13, %cst_101 {dimension_numbers = #tpu.dot_dimension_numbers<[1], [0], [0], [1], [0, 0, 1, 1], [], []>} : vector<8x32xf32>, vector<32x96xf32>, vector<8x96xf32> -> vector<8x96xf32>
    %395 = arith.addf %394, %19 : vector<8x96xf32>
    %cst_102 = arith.constant dense<0.000000e+00> : vector<8x96xf32>
    %396 = tpu.matmul %369, %14, %cst_102 {dimension_numbers = #tpu.dot_dimension_numbers<[1], [0], [0], [1], [0, 0, 1, 1], [], []>} : vector<8x32xf32>, vector<32x96xf32>, vector<8x96xf32> -> vector<8x96xf32>
    %397 = vector.extract_strided_slice %395 {offsets = [0, 0], sizes = [8, 64], strides = [1, 1]} : vector<8x96xf32> to vector<8x64xf32>
    %398 = vector.extract_strided_slice %396 {offsets = [0, 0], sizes = [8, 64], strides = [1, 1]} : vector<8x96xf32> to vector<8x64xf32>
    %399 = arith.addf %397, %398 : vector<8x64xf32>
    %400 = arith.negf %399 : vector<8x64xf32>
    %401 = math.exp %400 : vector<8x64xf32>
    %cst_103 = arith.constant 1.000000e+00 : f32
    %402 = vector.broadcast %cst_103 : f32 to vector<8x64xf32>
    %403 = arith.addf %402, %401 : vector<8x64xf32>
    %404 = arith.divf %402, %403 : vector<8x64xf32>
    %405 = vector.extract_strided_slice %404 {offsets = [0, 0], sizes = [8, 32], strides = [1, 1]} : vector<8x64xf32> to vector<8x32xf32>
    %406 = vector.extract_strided_slice %404 {offsets = [0, 32], sizes = [8, 32], strides = [1, 1]} : vector<8x64xf32> to vector<8x32xf32>
    %407 = vector.extract_strided_slice %395 {offsets = [0, 64], sizes = [8, 32], strides = [1, 1]} : vector<8x96xf32> to vector<8x32xf32>
    %408 = vector.extract_strided_slice %396 {offsets = [0, 64], sizes = [8, 32], strides = [1, 1]} : vector<8x96xf32> to vector<8x32xf32>
    %409 = arith.addf %408, %22 : vector<8x32xf32>
    %410 = arith.mulf %405, %409 : vector<8x32xf32>
    %411 = arith.addf %407, %410 : vector<8x32xf32>
    %412 = math.tanh %411 : vector<8x32xf32>
    %cst_104 = arith.constant 1.000000e+00 : f32
    %413 = vector.broadcast %cst_104 : f32 to vector<8x32xf32>
    %414 = arith.subf %413, %406 : vector<8x32xf32>
    %415 = arith.mulf %414, %412 : vector<8x32xf32>
    %416 = arith.mulf %406, %369 : vector<8x32xf32>
    %417 = arith.addf %415, %416 : vector<8x32xf32>
    %c56_105 = arith.constant 56 : index
    %c0_106 = arith.constant 0 : index
    %418 = vector.load %arg9[%c56_105, %c0_106] : memref<128x32xf32, #tpu.memory_space<vmem>>, vector<8x32xf32>
    tpu.vector_store %arg9[%c56_105, %c0_106], %417 {strides = array<i32>} : memref<128x32xf32, #tpu.memory_space<vmem>>, vector<8x32xf32>,
    %c0_107 = arith.constant 0 : index
    %c0_108 = arith.constant 0 : index
    %419 = vector.load %arg5[%c0_107, %c0_108] : memref<40x32xf32, #tpu.memory_space<vmem>>, vector<32x32xf32>
    %c32_109 = arith.constant 32 : index
    %c0_110 = arith.constant 0 : index
    %420 = vector.load %arg5[%c32_109, %c0_110] : memref<40x32xf32, #tpu.memory_space<vmem>>, vector<8x32xf32>
    %c0_111 = arith.constant 0 : index
    %c0_112 = arith.constant 0 : index
    %421 = vector.load %arg6[%c0_111, %c0_112] : memref<3x32xf32, #tpu.memory_space<vmem>>, vector<1x32xf32>
    %c1_113 = arith.constant 1 : index
    %c0_114 = arith.constant 0 : index
    %422 = vector.load %arg6[%c1_113, %c0_114] : memref<3x32xf32, #tpu.memory_space<vmem>>, vector<1x32xf32>
    %c2 = arith.constant 2 : index
    %c0_115 = arith.constant 0 : index
    %423 = vector.load %arg6[%c2, %c0_115] : memref<3x32xf32, #tpu.memory_space<vmem>>, vector<1x1xf32>
    %c0_116 = arith.constant 0 : index
    %c0_117 = arith.constant 0 : index
    %424 = vector.load %arg9[%c0_116, %c0_117] : memref<128x32xf32, #tpu.memory_space<vmem>>, vector<128x32xf32>
    %cst_118 = arith.constant dense<0.000000e+00> : vector<128x32xf32>
    %425 = tpu.matmul %424, %419, %cst_118 {dimension_numbers = #tpu.dot_dimension_numbers<[1], [0], [0], [1], [0, 0, 1, 1], [], []>} : vector<128x32xf32>, vector<32x32xf32>, vector<128x32xf32> -> vector<128x32xf32>
    %c0_119 = arith.constant 0 : index
    %c0_120 = arith.constant 0 : index
    %426 = vector.load %arg1[%c0_119, %c0_120] : memref<128x8xf32, #tpu.memory_space<vmem>>, vector<128x8xf32>
    %cst_121 = arith.constant dense<0.000000e+00> : vector<128x32xf32>
    %427 = tpu.matmul %426, %420, %cst_121 {dimension_numbers = #tpu.dot_dimension_numbers<[1], [0], [0], [1], [0, 0, 1, 1], [], []>} : vector<128x8xf32>, vector<8x32xf32>, vector<128x32xf32> -> vector<128x32xf32>
    %428 = arith.addf %425, %427 : vector<128x32xf32>
    %429 = vector.broadcast %421 : vector<1x32xf32> to vector<128x32xf32>
    %430 = arith.addf %428, %429 : vector<128x32xf32>
    %cst_122 = arith.constant 0.000000e+00 : f32
    %431 = vector.broadcast %cst_122 : f32 to vector<128x32xf32>
    %432 = arith.maximumf %430, %431 : vector<128x32xf32>
    %433 = vector.broadcast %422 : vector<1x32xf32> to vector<128x32xf32>
    %434 = arith.mulf %432, %433 : vector<128x32xf32>
    %cst_123 = arith.constant dense<0.000000e+00> : vector<128xf32>
    %435 = vector.multi_reduction <add>, %434, %cst_123 [1] : vector<128x32xf32> to vector<128xf32>
    %436 = vector.shape_cast %435 : vector<128xf32> to vector<1x128xf32>
    %437 = vector.broadcast %423 : vector<1x1xf32> to vector<1x128xf32>
    %438 = arith.addf %436, %437 : vector<1x128xf32>
    %439 = arith.negf %438 : vector<1x128xf32>
    %440 = math.exp %439 : vector<1x128xf32>
    %cst_124 = arith.constant 1.000000e+00 : f32
    %441 = vector.broadcast %cst_124 : f32 to vector<1x128xf32>
    %442 = arith.addf %441, %440 : vector<1x128xf32>
    %443 = arith.divf %441, %442 : vector<1x128xf32>
    %c0_125 = arith.constant 0 : index
    %c0_126 = arith.constant 0 : index
    %444 = vector.load %arg7[%c0_125, %c0_126] : memref<1x128xf32, #tpu.memory_space<vmem>>, vector<1x128xf32>
    tpu.vector_store %arg7[%c0_125, %c0_126], %443 {strides = array<i32>} : memref<1x128xf32, #tpu.memory_space<vmem>>, vector<1x128xf32>,
    return
  }
}

</mosaic_0001>

<llo_original>
// kernel: squeeze.1
$region0: #{squeeze.1}
  %s0 = inlined_call_operand.vmem [shape: f32[64], index: 0, kind: input, shape index: {}]
  %s1 = inlined_call_operand.vmem [shape: f32[8,8], index: 1, kind: output, shape index: {}]
  $region1: #{squeeze.1} parent=0
    #allocation0 [shape = 'u8[4096]{0}', space=vmem, size = 0x1000, scoped, tag = 'scoped mem for input reshape']
    %s3 = sshll.u32 1, 1
    %s4 = ssub.s32 %s3, 1
    %v5 = vld [vmem:[%s0] sm:%s4]
    %6 = vst [vmem:[#allocation0] sm:%s4] %v5
    %v7 = vld [vmem:[#allocation0] sm:$0x1]
    %vm8 = vcmask 64512
    %9 = vst.msk [vmem:[%s1] sm:$0x1] %vm8, %v7
    %v10 = vld [vmem:[#allocation0] sm:$0x1]
    %11 = vrot.lane.b32.xlu0 %v10, 120
    %v12 = vpop.permute.xlu0 %11
    %vm13 = vcmask 64512
    %s14 = scalar_lea.vmem %s1, 1
    %15 = vst.msk [vmem:[%s14] sm:$0x1] %vm13, %v12
    %v16 = vld [vmem:[#allocation0] sm:$0x1]
    %17 = vrot.lane.b32.xlu0 %v16, 112
    %v18 = vpop.permute.xlu0 %17
    %vm19 = vcmask 64512
    %s20 = scalar_lea.vmem %s1, 2
    %21 = vst.msk [vmem:[%s20] sm:$0x1] %vm19, %v18
    %v22 = vld [vmem:[#allocation0] sm:$0x1]
    %23 = vrot.lane.b32.xlu0 %v22, 104
    %v24 = vpop.permute.xlu0 %23
    %vm25 = vcmask 64512
    %s26 = scalar_lea.vmem %s1, 3
    %27 = vst.msk [vmem:[%s26] sm:$0x1] %vm25, %v24
    %v28 = vld [vmem:[#allocation0] sm:$0x1]
    %29 = vrot.lane.b32.xlu0 %v28, 96
    %v30 = vpop.permute.xlu0 %29
    %vm31 = vcmask 64512
    %s32 = scalar_lea.vmem %s1, 4
    %33 = vst.msk [vmem:[%s32] sm:$0x1] %vm31, %v30
    %v34 = vld [vmem:[#allocation0] sm:$0x1]
    %35 = vrot.lane.b32.xlu0 %v34, 88
    %v36 = vpop.permute.xlu0 %35
    %vm37 = vcmask 64512
    %s38 = scalar_lea.vmem %s1, 5
    %39 = vst.msk [vmem:[%s38] sm:$0x1] %vm37, %v36
    %v40 = vld [vmem:[#allocation0] sm:$0x1]
    %41 = vrot.lane.b32.xlu0 %v40, 80
    %v42 = vpop.permute.xlu0 %41
    %vm43 = vcmask 64512
    %s44 = scalar_lea.vmem %s1, 6
    %45 = vst.msk [vmem:[%s44] sm:$0x1] %vm43, %v42
    %v46 = vld [vmem:[#allocation0] sm:$0x1]
    %47 = vrot.lane.b32.xlu0 %v46, 72
    %v48 = vpop.permute.xlu0 %47
    %vm49 = vcmask 64512
    %s50 = scalar_lea.vmem %s1, 7
    %51 = vst.msk [vmem:[%s50] sm:$0x1] %vm49, %v48

// kernel: discriminator_forward.1
$region0: #{discriminator_forward.1}
  #allocation0 [shape = 'u32[]', space=smem, size = 0x4, offset = 0x4, fixed_abs, tag = 'smem constant byte address 0x4 - core index']
  #allocation1 [shape = 'u32[144,128]{1,0:T(1,128)}', space=vmem, size = 0x12000, scoped, tag = 'internal scratch']
  #allocation2 [shape = 'f32[128,96]{1,0:T(8,128)}', space=vmem, size = 0x10000, scoped, tag = 'scratch operand']
  #allocation3 [shape = 'f32[128,32]{1,0:T(8,128)}', space=vmem, size = 0x10000, scoped, tag = 'scratch operand']
  %s0 = inlined_call_operand.vmem [shape: f32[128,8], index: 0, kind: input, shape index: {}]
  %s1 = inlined_call_operand.vmem [shape: f32[128,8], index: 1, kind: input, shape index: {}]
  %s2 = inlined_call_operand.vmem [shape: f32[2,8,32], index: 2, kind: input, shape index: {}]
  %s3 = inlined_call_operand.vmem [shape: f32[2,64,96], index: 3, kind: input, shape index: {}]
  %s4 = inlined_call_operand.vmem [shape: f32[2,1,128], index: 4, kind: input, shape index: {}]
  %s5 = inlined_call_operand.vmem [shape: f32[40,32], index: 5, kind: input, shape index: {}]
  %s6 = inlined_call_operand.vmem [shape: f32[3,32], index: 6, kind: input, shape index: {}]
  %s7 = inlined_call_operand.vmem [shape: f32[1,128], index: 7, kind: output, shape index: {}]
  %s8 = sld [smem:[#allocation0]]
  $region38: #{discriminator_forward.1} parent=0
    _
  %s10 = ssub.s32 1, %s8
  %s11 = scalar_select 0, %s10, %s8
  // Predicated region
  $region2: #{discriminator_forward.1} parent=0 // pred_check
    _
  $region3: #{discriminator_forward.1} parent=0 // pred_check_branch
    %13 = sbr.rel (0) target = $region5
  $region4: #{discriminator_forward.1} parent=0 // pred_region
    _
  $region5: #{discriminator_forward.1} parent=0 // pred_fallthru
    _
  // Predicated region
  $region6: #{discriminator_forward.1} parent=0 // pred_check
    _
  $region7: #{discriminator_forward.1} parent=0 // pred_check_branch
    %15 = sbr.rel (0) target = $region9
  $region8: #{discriminator_forward.1} parent=0 // pred_region
    _
  $region9: #{discriminator_forward.1} parent=0 // pred_fallthru
    _
  // Predicated region
  $region10: #{discriminator_forward.1} parent=0 // pred_check
    _
  $region11: #{discriminator_forward.1} parent=0 // pred_check_branch
    %17 = sbr.rel (0) target = $region13
  $region12: #{discriminator_forward.1} parent=0 // pred_region
    _
  $region13: #{discriminator_forward.1} parent=0 // pred_fallthru
    _
  // Predicated region
  $region14: #{discriminator_forward.1} parent=0 // pred_check
    _
  $region15: #{discriminator_forward.1} parent=0 // pred_check_branch
    %19 = sbr.rel (0) target = $region17
  $region16: #{discriminator_forward.1} parent=0 // pred_region
    _
  $region17: #{discriminator_forward.1} parent=0 // pred_fallthru
    _
  // Predicated region
  $region18: #{discriminator_forward.1} parent=0 // pred_check
    _
  $region19: #{discriminator_forward.1} parent=0 // pred_check_branch
    %21 = sbr.rel (0) target = $region21
  $region20: #{discriminator_forward.1} parent=0 // pred_region
    _
  $region21: #{discriminator_forward.1} parent=0 // pred_fallthru
    _
  // Predicated region
  $region22: #{discriminator_forward.1} parent=0 // pred_check
    _
  $region23: #{discriminator_forward.1} parent=0 // pred_check_branch
    %23 = sbr.rel (0) target = $region25
  $region24: #{discriminator_forward.1} parent=0 // pred_region
    _
  $region25: #{discriminator_forward.1} parent=0 // pred_fallthru
    _
  // Predicated region
  $region26: #{discriminator_forward.1} parent=0 // pred_check
    _
  $region27: #{discriminator_forward.1} parent=0 // pred_check_branch
    %25 = sbr.rel (0) target = $region29
  $region28: #{discriminator_forward.1} parent=0 // pred_region
    _
  $region29: #{discriminator_forward.1} parent=0 // pred_fallthru
    _
  %vm26 = vcmask 261120
  %27 = vst.msk [vmem:[#allocation3] sm:$0xff] %vm26, 0.0
  %28 = vst.msk [vmem:[#allocation3 + $0x8] sm:$0xff] %vm26, 0.0
  %29 = vst.msk [vmem:[#allocation3 + $0x10] sm:$0xff] %vm26, 0.0
  %30 = vst.msk [vmem:[#allocation3 + $0x18] sm:$0xff] %vm26, 0.0
  %31 = vst.msk [vmem:[#allocation3 + $0x20] sm:$0xff] %vm26, 0.0
  %32 = vst.msk [vmem:[#allocation3 + $0x28] sm:$0xff] %vm26, 0.0
  %33 = vst.msk [vmem:[#allocation3 + $0x30] sm:$0xff] %vm26, 0.0
  %34 = vst.msk [vmem:[#allocation3 + $0x38] sm:$0xff] %vm26, 0.0
  %35 = vst.msk [vmem:[#allocation3 + $0x40] sm:$0xff] %vm26, 0.0
  %36 = vst.msk [vmem:[#allocation3 + $0x48] sm:$0xff] %vm26, 0.0
  %37 = vst.msk [vmem:[#allocation3 + $0x50] sm:$0xff] %vm26, 0.0
  %38 = vst.msk [vmem:[#allocation3 + $0x58] sm:$0xff] %vm26, 0.0
  %39 = vst.msk [vmem:[#allocation3 + $0x60] sm:$0xff] %vm26, 0.0
  %40 = vst.msk [vmem:[#allocation3 + $0x68] sm:$0xff] %vm26, 0.0
  %41 = vst.msk [vmem:[#allocation3 + $0x70] sm:$0xff] %vm26, 0.0
  %42 = vst.msk [vmem:[#allocation3 + $0x78] sm:$0xff] %vm26, 0.0
  %v43 = vld [vmem:[%s3] sm:$0xff]
  %v44 = vld [vmem:[%s3 + $0x20] sm:$0xff]
  %v45 = vld [vmem:[%s3 + $0x28] sm:$0xff]
  %v46 = vld [vmem:[%s3 + $0x30] sm:$0xff]
  %v47 = vld [vmem:[%s3 + $0x38] sm:$0xff]
  %v48 = vld [vmem:[%s4] sm:$0x1]
  %v50 = vlaneseq
  %v51 = vshrl.u32 %v50, 7
  %v52 = vsub.s32 0, %v51
  %v53 = vrot.slane %v48, %v52
  %s54 = scalar_lea.vmem %s3, 64
  %v55 = vld [vmem:[%s54] sm:$0xff]
  %v56 = vld [vmem:[%s54 + $0x8] sm:$0xff]
  %v57 = vld [vmem:[%s54 + $0x10] sm:$0xff]
  %v58 = vld [vmem:[%s54 + $0x18] sm:$0xff]
  %v59 = vld [vmem:[%s54 + $0x20] sm:$0xff]
  %v60 = vld [vmem:[%s54 + $0x28] sm:$0xff]
  %v61 = vld [vmem:[%s54 + $0x30] sm:$0xff]
  %v62 = vld [vmem:[%s54 + $0x38] sm:$0xff]
  %s63 = scalar_lea.vmem %s4, 1
  %v64 = vld [vmem:[%s63] sm:$0x1]
  %v66 = vlaneseq
  %v67 = vshrl.u32 %v66, 7
  %v68 = vsub.s32 0, %v67
  %v69 = vrot.slane %v64, %v68
  %v71 = vld [vmem:[%s0] sm:$0xff]
  %v72 = vld [vmem:[%s0 + $0x8] sm:$0xff]
  %v73 = vld [vmem:[%s0 + $0x10] sm:$0xff]
  %v74 = vld [vmem:[%s0 + $0x18] sm:$0xff]
  %v75 = vld [vmem:[%s0 + $0x20] sm:$0xff]
  %v76 = vld [vmem:[%s0 + $0x28] sm:$0xff]
  %v77 = vld [vmem:[%s0 + $0x30] sm:$0xff]
  %v78 = vld [vmem:[%s0 + $0x38] sm:$0xff]
  %v79 = vld [vmem:[%s0 + $0x40] sm:$0xff]
  %v80 = vld [vmem:[%s0 + $0x48] sm:$0xff]
  %v81 = vld [vmem:[%s0 + $0x50] sm:$0xff]
  %v82 = vld [vmem:[%s0 + $0x58] sm:$0xff]
  %v83 = vld [vmem:[%s0 + $0x60] sm:$0xff]
  %v84 = vld [vmem:[%s0 + $0x68] sm:$0xff]
  %v85 = vld [vmem:[%s0 + $0x70] sm:$0xff]
  %v86 = vld [vmem:[%s0 + $0x78] sm:$0xff]
  %vm88 = vcmask 64512
  %v90 = vsel %vm88, %v71, 0
  %v93 = vsel %vm88, %v72, 0
  %v96 = vsel %vm88, %v73, 0
  %v99 = vsel %vm88, %v74, 0
  %v102 = vsel %vm88, %v75, 0
  %v105 = vsel %vm88, %v76, 0
  %v108 = vsel %vm88, %v77, 0
  %v111 = vsel %vm88, %v78, 0
  %v114 = vsel %vm88, %v79, 0
  %v117 = vsel %vm88, %v80, 0
  %v120 = vsel %vm88, %v81, 0
  %v123 = vsel %vm88, %v82, 0
  %v126 = vsel %vm88, %v83, 0
  %v129 = vsel %vm88, %v84, 0
  %v132 = vsel %vm88, %v85, 0
  %v135 = vsel %vm88, %v86, 0
  %137 = vmatprep.subr.mxu0 0.0
  %138 = vmatpush1.msra.mxu0 0.0
  %139 = vmatprep.subr.mxu0 0.0
  %140 = vmatpush1.msra.mxu0 0.0
  %141 = vmatprep.subr.mxu0 0.0
  %142 = vmatpush1.msra.mxu0 0.0
  %143 = vmatprep.subr.mxu0 0.0
  %144 = vmatpush1.msra.mxu0 0.0
  %145 = vmatprep.subr.mxu0 0.0
  %146 = vmatpush1.msra.mxu0 0.0
  %147 = vmatprep.subr.mxu0 0.0
  %148 = vmatpush1.msra.mxu0 0.0
  %149 = vmatprep.subr.mxu0 0.0
  %150 = vmatpush1.msra.mxu0 0.0
  %151 = vmatprep.subr.mxu0 0.0
  %152 = vmatpush1.msra.mxu0 0.0
  %153 = vmatprep.subr.mxu0 0.0
  %154 = vmatpush1.msra.mxu0 0.0
  %155 = vmatprep.subr.mxu0 0.0
  %156 = vmatpush1.msra.mxu0 0.0
  %157 = vmatprep.subr.mxu0 0.0
  %158 = vmatpush1.msra.mxu0 0.0
  %159 = vmatprep.subr.mxu0 0.0
  %160 = vmatpush1.msra.mxu0 0.0
  %161 = vmatprep.subr.mxu0 0.0
  %162 = vmatpush1.msra.mxu0 0.0
  %163 = vmatprep.subr.mxu0 0.0
  %164 = vmatpush1.msra.mxu0 0.0
  %165 = vmatprep.subr.mxu0 0.0
  %166 = vmatpush1.msra.mxu0 0.0
  %167 = vmatprep.subr.mxu0 0.0
  %168 = vmatpush1.msra.mxu0 %v43
  %169 = vmatprep.subr.mxu0 0.0
  %170 = vmatpush2.msra.mxu0 0.0
  %171 = vmatprep.subr.mxu0 0.0
  %172 = vmatpush2.msra.mxu0 0.0
  %173 = vmatprep.subr.mxu0 0.0
  %174 = vmatpush2.msra.mxu0 0.0
  %175 = vmatprep.subr.mxu0 0.0
  %176 = vmatpush2.msra.mxu0 0.0
  %177 = vmatprep.subr.mxu0 0.0
  %178 = vmatpush2.msra.mxu0 0.0
  %179 = vmatprep.subr.mxu0 0.0
  %180 = vmatpush2.msra.mxu0 0.0
  %181 = vmatprep.subr.mxu0 0.0
  %182 = vmatpush2.msra.mxu0 0.0
  %183 = vmatprep.subr.mxu0 0.0
  %184 = vmatpush2.msra.mxu0 0.0
  %185 = vmatprep.subr.mxu0 0.0
  %186 = vmatpush2.msra.mxu0 0.0
  %187 = vmatprep.subr.mxu0 0.0
  %188 = vmatpush2.msra.mxu0 0.0
  %189 = vmatprep.subr.mxu0 0.0
  %190 = vmatpush2.msra.mxu0 0.0
  %191 = vmatprep.subr.mxu0 0.0
  %192 = vmatpush2.msra.mxu0 0.0
  %193 = vmatprep.subr.mxu0 0.0
  %194 = vmatpush2.msra.mxu0 0.0
  %195 = vmatprep.subr.mxu0 0.0
  %196 = vmatpush2.msra.mxu0 0.0
  %197 = vmatprep.subr.mxu0 0.0
  %198 = vmatpush2.msra.mxu0 0.0
  %199 = vmatprep.subr.mxu0 0.0
  %200 = vmatpush2.msra.mxu0 0.0
  %201 = vmatprep.mubr.f32.mxu0 0.0
  %202 = vmatmul.mubr.f32.gmra.mxu0 %v90
  %v203 = vpop.f32.mrf.mxu0
  %v204 = vadd.f32 %v53, %v203
  %v205 = vpop.f32.mrf.mxu0
  %206 = vmatprep.mubr.f32.mxu0 0.0
  %207 = vmatmul.mubr.f32.gmra.mxu0 %v93
  %v208 = vpop.f32.mrf.mxu0
  %v209 = vadd.f32 %v53, %v208
  %v210 = vpop.f32.mrf.mxu0
  %211 = vmatprep.mubr.f32.mxu0 0.0
  %212 = vmatmul.mubr.f32.gmra.mxu0 %v96
  %v213 = vpop.f32.mrf.mxu0
  %v214 = vadd.f32 %v53, %v213
  %v215 = vpop.f32.mrf.mxu0
  %216 = vmatprep.mubr.f32.mxu0 0.0
  %217 = vmatmul.mubr.f32.gmra.mxu0 %v99
  %v218 = vpop.f32.mrf.mxu0
  %v219 = vadd.f32 %v53, %v218
  %v220 = vpop.f32.mrf.mxu0
  %221 = vmatprep.mubr.f32.mxu0 0.0
  %222 = vmatmul.mubr.f32.gmra.mxu0 %v102
  %v223 = vpop.f32.mrf.mxu0
  %v224 = vadd.f32 %v53, %v223
  %v225 = vpop.f32.mrf.mxu0
  %226 = vmatprep.mubr.f32.mxu0 0.0
  %227 = vmatmul.mubr.f32.gmra.mxu0 %v105
  %v228 = vpop.f32.mrf.mxu0
  %v229 = vadd.f32 %v53, %v228
  %v230 = vpop.f32.mrf.mxu0
  %231 = vmatprep.mubr.f32.mxu0 0.0
  %232 = vmatmul.mubr.f32.gmra.mxu0 %v108
  %v233 = vpop.f32.mrf.mxu0
  %v234 = vadd.f32 %v53, %v233
  %v235 = vpop.f32.mrf.mxu0
  %236 = vmatprep.mubr.f32.mxu0 0.0
  %237 = vmatmul.mubr.f32.gmra.mxu0 %v111
  %v238 = vpop.f32.mrf.mxu0
  %v239 = vadd.f32 %v53, %v238
  %v240 = vpop.f32.mrf.mxu0
  %241 = vmatprep.mubr.f32.mxu0 0.0
  %242 = vmatmul.mubr.f32.gmra.mxu0 %v114
  %v243 = vpop.f32.mrf.mxu0
  %v244 = vadd.f32 %v53, %v243
  %v245 = vpop.f32.mrf.mxu0
  %246 = vmatprep.mubr.f32.mxu0 0.0
  %247 = vmatmul.mubr.f32.gmra.mxu0 %v117
  %v248 = vpop.f32.mrf.mxu0
  %v249 = vadd.f32 %v53, %v248
  %v250 = vpop.f32.mrf.mxu0
  %251 = vmatprep.mubr.f32.mxu0 0.0
  %252 = vmatmul.mubr.f32.gmra.mxu0 %v120
  %v253 = vpop.f32.mrf.mxu0
  %v254 = vadd.f32 %v53, %v253
  %v255 = vpop.f32.mrf.mxu0
  %256 = vmatprep.mubr.f32.mxu0 0.0
  %257 = vmatmul.mubr.f32.gmra.mxu0 %v123
  %v258 = vpop.f32.mrf.mxu0
  %v259 = vadd.f32 %v53, %v258
  %v260 = vpop.f32.mrf.mxu0
  %261 = vmatprep.mubr.f32.mxu0 0.0
  %262 = vmatmul.mubr.f32.gmra.mxu0 %v126
  %v263 = vpop.f32.mrf.mxu0
  %v264 = vadd.f32 %v53, %v263
  %v265 = vpop.f32.mrf.mxu0
  %266 = vmatprep.mubr.f32.mxu0 0.0
  %267 = vmatmul.mubr.f32.gmra.mxu0 %v129
  %v268 = vpop.f32.mrf.mxu0
  %v269 = vadd.f32 %v53, %v268
  %v270 = vpop.f32.mrf.mxu0
  %271 = vmatprep.mubr.f32.mxu0 0.0
  %272 = vmatmul.mubr.f32.gmra.mxu0 %v132
  %v273 = vpop.f32.mrf.mxu0
  %v274 = vadd.f32 %v53, %v273
  %v275 = vpop.f32.mrf.mxu0
  %276 = vmatprep.mubr.f32.mxu0 0.0
  %277 = vmatmul.mubr.f32.gmra.mxu0 %v135
  %v278 = vpop.f32.mrf.mxu0
  %v279 = vadd.f32 %v53, %v278
  %v280 = vpop.f32.mrf.mxu0
  %281 = vdwg.mxu0
  %vm282 = vcmask 785408
  %283 = vst.msk [vmem:[#allocation2] sm:$0xff] %vm282, %v204
  %284 = vst.msk [vmem:[#allocation2 + $0x8] sm:$0xff] %vm282, %v209
  %285 = vst.msk [vmem:[#allocation2 + $0x10] sm:$0xff] %vm282, %v214
  %286 = vst.msk [vmem:[#allocation2 + $0x18] sm:$0xff] %vm282, %v219
  %287 = vst.msk [vmem:[#allocation2 + $0x20] sm:$0xff] %vm282, %v224
  %288 = vst.msk [vmem:[#allocation2 + $0x28] sm:$0xff] %vm282, %v229
  %289 = vst.msk [vmem:[#allocation2 + $0x30] sm:$0xff] %vm282, %v234
  %290 = vst.msk [vmem:[#allocation2 + $0x38] sm:$0xff] %vm282, %v239
  %291 = vst.msk [vmem:[#allocation2 + $0x40] sm:$0xff] %vm282, %v244
  %292 = vst.msk [vmem:[#allocation2 + $0x48] sm:$0xff] %vm282, %v249
  %293 = vst.msk [vmem:[#allocation2 + $0x50] sm:$0xff] %vm282, %v254
  %294 = vst.msk [vmem:[#allocation2 + $0x58] sm:$0xff] %vm282, %v259
  %295 = vst.msk [vmem:[#allocation2 + $0x60] sm:$0xff] %vm282, %v264
  %296 = vst.msk [vmem:[#allocation2 + $0x68] sm:$0xff] %vm282, %v269
  %297 = vst.msk [vmem:[#allocation2 + $0x70] sm:$0xff] %vm282, %v274
  %298 = vst.msk [vmem:[#allocation2 + $0x78] sm:$0xff] %vm282, %v279
  %v299 = vld [vmem:[%s2] sm:$0xff]
  %s300 = scalar_lea.vmem %s2, 8
  %v301 = vld [vmem:[%s300] sm:$0xff]
  %v302 = vld [vmem:[#allocation2] sm:$0xff]
  %v304 = vsel %vm26, %v299, 0
  %306 = vmatprep.subr.mxu0 0.0
  %307 = vmatpush1.msra.mxu0 0.0
  %308 = vmatprep.subr.mxu0 0.0
  %309 = vmatpush1.msra.mxu0 0.0
  %310 = vmatprep.subr.mxu0 0.0
  %311 = vmatpush1.msra.mxu0 0.0
  %312 = vmatprep.subr.mxu0 0.0
  %313 = vmatpush1.msra.mxu0 0.0
  %314 = vmatprep.subr.mxu0 0.0
  %315 = vmatpush1.msra.mxu0 0.0
  %316 = vmatprep.subr.mxu0 0.0
  %317 = vmatpush1.msra.mxu0 0.0
  %318 = vmatprep.subr.mxu0 0.0
  %319 = vmatpush1.msra.mxu0 0.0
  %320 = vmatprep.subr.mxu0 0.0
  %321 = vmatpush1.msra.mxu0 0.0
  %322 = vmatprep.subr.mxu0 0.0
  %323 = vmatpush1.msra.mxu0 0.0
  %324 = vmatprep.subr.mxu0 0.0
  %325 = vmatpush1.msra.mxu0 0.0
  %326 = vmatprep.subr.mxu0 0.0
  %327 = vmatpush1.msra.mxu0 0.0
  %328 = vmatprep.subr.mxu0 0.0
  %329 = vmatpush1.msra.mxu0 0.0
  %330 = vmatprep.subr.mxu0 0.0
  %331 = vmatpush1.msra.mxu0 %v47
  %332 = vmatprep.subr.mxu0 0.0
  %333 = vmatpush1.msra.mxu0 %v46
  %334 = vmatprep.subr.mxu0 0.0
  %335 = vmatpush1.msra.mxu0 %v45
  %336 = vmatprep.subr.mxu0 0.0
  %337 = vmatpush1.msra.mxu0 %v44
  %338 = vmatprep.subr.mxu0 0.0
  %339 = vmatpush2.msra.mxu0 0.0
  %340 = vmatprep.subr.mxu0 0.0
  %341 = vmatpush2.msra.mxu0 0.0
  %342 = vmatprep.subr.mxu0 0.0
  %343 = vmatpush2.msra.mxu0 0.0
  %344 = vmatprep.subr.mxu0 0.0
  %345 = vmatpush2.msra.mxu0 0.0
  %346 = vmatprep.subr.mxu0 0.0
  %347 = vmatpush2.msra.mxu0 0.0
  %348 = vmatprep.subr.mxu0 0.0
  %349 = vmatpush2.msra.mxu0 0.0
  %350 = vmatprep.subr.mxu0 0.0
  %351 = vmatpush2.msra.mxu0 0.0
  %352 = vmatprep.subr.mxu0 0.0
  %353 = vmatpush2.msra.mxu0 0.0
  %354 = vmatprep.subr.mxu0 0.0
  %355 = vmatpush2.msra.mxu0 0.0
  %356 = vmatprep.subr.mxu0 0.0
  %357 = vmatpush2.msra.mxu0 0.0
  %358 = vmatprep.subr.mxu0 0.0
  %359 = vmatpush2.msra.mxu0 0.0
  %360 = vmatprep.subr.mxu0 0.0
  %361 = vmatpush2.msra.mxu0 0.0
  %362 = vmatprep.subr.mxu0 0.0
  %363 = vmatpush2.msra.mxu0 0.0
  %364 = vmatprep.subr.mxu0 0.0
  %365 = vmatpush2.msra.mxu0 0.0
  %366 = vmatprep.subr.mxu0 0.0
  %367 = vmatpush2.msra.mxu0 0.0
  %368 = vmatprep.subr.mxu0 0.0
  %369 = vmatpush2.msra.mxu0 0.0
  %370 = vmatprep.mubr.f32.mxu0 0.0
  %371 = vmatmul.mubr.f32.gmra.mxu0 %v304
  %v372 = vpop.f32.mrf.mxu0
  %v373 = vadd.f32 0.0, %v372
  %v374 = vpop.f32.mrf.mxu0
  %375 = vdwg.mxu0
  %v376 = vadd.f32 %v302, %v373
  %v377 = vxor.u32 %v376, 2147483648
  %v378 = vmul.f32 %v377, 1.442695
  %v379 = vpow.pop %v378
  %v380 = vadd.f32 %v379, 1.0
  %v381 = vrcp.pop %v380
  %v382 = vmul.f32 1.0, %v381
  %383 = vrot.lane.b32.xlu0 %v53, 96
  %v384 = vpop.permute.xlu0 %383
  %v386 = vadd.f32 %v373, %v384
  %388 = vrot.lane.b32.xlu0 %v386, 64
  %v389 = vpop.permute.xlu0 %388
  %v391 = vmul.f32 %v382, %v389
  %393 = vrot.lane.b32.xlu0 %v391, 64
  %v394 = vpop.permute.xlu0 %393
  %v396 = vadd.f32 %v302, %v394
  %v397 = vtanh.pop %v396
  %v398 = vsub.f32 1.0, %v382
  %400 = vrot.lane.b32.xlu0 %v397, 96
  %v401 = vpop.permute.xlu0 %400
  %v403 = vmul.f32 %v398, %v401
  %404 = vrot.lane.b32.xlu0 %v299, 32
  %v405 = vpop.permute.xlu0 %404
  %v407 = vmul.f32 %v382, %v405
  %v408 = vadd.f32 %v403, %v407
  %410 = vrot.lane.b32.xlu0 %v408, 96
  %v411 = vpop.permute.xlu0 %410
  %v412 = vsel %vm26, %v411, 0
  %414 = vmatprep.subr.mxu0 0.0
  %415 = vmatpush1.msra.mxu0 0.0
  %416 = vmatprep.subr.mxu0 0.0
  %417 = vmatpush1.msra.mxu0 0.0
  %418 = vmatprep.subr.mxu0 0.0
  %419 = vmatpush1.msra.mxu0 0.0
  %420 = vmatprep.subr.mxu0 0.0
  %421 = vmatpush1.msra.mxu0 0.0
  %422 = vmatprep.subr.mxu0 0.0
  %423 = vmatpush1.msra.mxu0 0.0
  %424 = vmatprep.subr.mxu0 0.0
  %425 = vmatpush1.msra.mxu0 0.0
  %426 = vmatprep.subr.mxu0 0.0
  %427 = vmatpush1.msra.mxu0 0.0
  %428 = vmatprep.subr.mxu0 0.0
  %429 = vmatpush1.msra.mxu0 0.0
  %430 = vmatprep.subr.mxu0 0.0
  %431 = vmatpush1.msra.mxu0 0.0
  %432 = vmatprep.subr.mxu0 0.0
  %433 = vmatpush1.msra.mxu0 0.0
  %434 = vmatprep.subr.mxu0 0.0
  %435 = vmatpush1.msra.mxu0 0.0
  %436 = vmatprep.subr.mxu0 0.0
  %437 = vmatpush1.msra.mxu0 0.0
  %438 = vmatprep.subr.mxu0 0.0
  %439 = vmatpush1.msra.mxu0 %v58
  %440 = vmatprep.subr.mxu0 0.0
  %441 = vmatpush1.msra.mxu0 %v57
  %442 = vmatprep.subr.mxu0 0.0
  %443 = vmatpush1.msra.mxu0 %v56
  %444 = vmatprep.subr.mxu0 0.0
  %445 = vmatpush1.msra.mxu0 %v55
  %446 = vmatprep.subr.mxu0 0.0
  %447 = vmatpush2.msra.mxu0 0.0
  %448 = vmatprep.subr.mxu0 0.0
  %449 = vmatpush2.msra.mxu0 0.0
  %450 = vmatprep.subr.mxu0 0.0
  %451 = vmatpush2.msra.mxu0 0.0
  %452 = vmatprep.subr.mxu0 0.0
  %453 = vmatpush2.msra.mxu0 0.0
  %454 = vmatprep.subr.mxu0 0.0
  %455 = vmatpush2.msra.mxu0 0.0
  %456 = vmatprep.subr.mxu0 0.0
  %457 = vmatpush2.msra.mxu0 0.0
  %458 = vmatprep.subr.mxu0 0.0
  %459 = vmatpush2.msra.mxu0 0.0
  %460 = vmatprep.subr.mxu0 0.0
  %461 = vmatpush2.msra.mxu0 0.0
  %462 = vmatprep.subr.mxu0 0.0
  %463 = vmatpush2.msra.mxu0 0.0
  %464 = vmatprep.subr.mxu0 0.0
  %465 = vmatpush2.msra.mxu0 0.0
  %466 = vmatprep.subr.mxu0 0.0
  %467 = vmatpush2.msra.mxu0 0.0
  %468 = vmatprep.subr.mxu0 0.0
  %469 = vmatpush2.msra.mxu0 0.0
  %470 = vmatprep.subr.mxu0 0.0
  %471 = vmatpush2.msra.mxu0 0.0
  %472 = vmatprep.subr.mxu0 0.0
  %473 = vmatpush2.msra.mxu0 0.0
  %474 = vmatprep.subr.mxu0 0.0
  %475 = vmatpush2.msra.mxu0 0.0
  %476 = vmatprep.subr.mxu0 0.0
  %477 = vmatpush2.msra.mxu0 0.0
  %478 = vmatprep.mubr.f32.mxu0 0.0
  %479 = vmatmul.mubr.f32.gmra.mxu0 %v412
  %v480 = vpop.f32.mrf.mxu0
  %v481 = vadd.f32 %v69, %v480
  %v482 = vpop.f32.mrf.mxu0
  %483 = vdwg.mxu0
  %v485 = vsel %vm26, %v301, 0
  %487 = vmatprep.subr.mxu0 0.0
  %488 = vmatpush1.msra.mxu0 0.0
  %489 = vmatprep.subr.mxu0 0.0
  %490 = vmatpush1.msra.mxu0 0.0
  %491 = vmatprep.subr.mxu0 0.0
  %492 = vmatpush1.msra.mxu0 0.0
  %493 = vmatprep.subr.mxu0 0.0
  %494 = vmatpush1.msra.mxu0 0.0
  %495 = vmatprep.subr.mxu0 0.0
  %496 = vmatpush1.msra.mxu0 0.0
  %497 = vmatprep.subr.mxu0 0.0
  %498 = vmatpush1.msra.mxu0 0.0
  %499 = vmatprep.subr.mxu0 0.0
  %500 = vmatpush1.msra.mxu0 0.0
  %501 = vmatprep.subr.mxu0 0.0
  %502 = vmatpush1.msra.mxu0 0.0
  %503 = vmatprep.subr.mxu0 0.0
  %504 = vmatpush1.msra.mxu0 0.0
  %505 = vmatprep.subr.mxu0 0.0
  %506 = vmatpush1.msra.mxu0 0.0
  %507 = vmatprep.subr.mxu0 0.0
  %508 = vmatpush1.msra.mxu0 0.0
  %509 = vmatprep.subr.mxu0 0.0
  %510 = vmatpush1.msra.mxu0 0.0
  %511 = vmatprep.subr.mxu0 0.0
  %512 = vmatpush1.msra.mxu0 %v62
  %513 = vmatprep.subr.mxu0 0.0
  %514 = vmatpush1.msra.mxu0 %v61
  %515 = vmatprep.subr.mxu0 0.0
  %516 = vmatpush1.msra.mxu0 %v60
  %517 = vmatprep.subr.mxu0 0.0
  %518 = vmatpush1.msra.mxu0 %v59
  %519 = vmatprep.subr.mxu0 0.0
  %520 = vmatpush2.msra.mxu0 0.0
  %521 = vmatprep.subr.mxu0 0.0
  %522 = vmatpush2.msra.mxu0 0.0
  %523 = vmatprep.subr.mxu0 0.0
  %524 = vmatpush2.msra.mxu0 0.0
  %525 = vmatprep.subr.mxu0 0.0
  %526 = vmatpush2.msra.mxu0 0.0
  %527 = vmatprep.subr.mxu0 0.0
  %528 = vmatpush2.msra.mxu0 0.0
  %529 = vmatprep.subr.mxu0 0.0
  %530 = vmatpush2.msra.mxu0 0.0
  %531 = vmatprep.subr.mxu0 0.0
  %532 = vmatpush2.msra.mxu0 0.0
  %533 = vmatprep.subr.mxu0 0.0
  %534 = vmatpush2.msra.mxu0 0.0
  %535 = vmatprep.subr.mxu0 0.0
  %536 = vmatpush2.msra.mxu0 0.0
  %537 = vmatprep.subr.mxu0 0.0
  %538 = vmatpush2.msra.mxu0 0.0
  %539 = vmatprep.subr.mxu0 0.0
  %540 = vmatpush2.msra.mxu0 0.0
  %541 = vmatprep.subr.mxu0 0.0
  %542 = vmatpush2.msra.mxu0 0.0
  %543 = vmatprep.subr.mxu0 0.0
  %544 = vmatpush2.msra.mxu0 0.0
  %545 = vmatprep.subr.mxu0 0.0
  %546 = vmatpush2.msra.mxu0 0.0
  %547 = vmatprep.subr.mxu0 0.0
  %548 = vmatpush2.msra.mxu0 0.0
  %549 = vmatprep.subr.mxu0 0.0
  %550 = vmatpush2.msra.mxu0 0.0
  %551 = vmatprep.mubr.f32.mxu0 0.0
  %552 = vmatmul.mubr.f32.gmra.mxu0 %v485
  %v553 = vpop.f32.mrf.mxu0
  %v554 = vadd.f32 0.0, %v553
  %v555 = vpop.f32.mrf.mxu0
  %556 = vdwg.mxu0
  %v557 = vadd.f32 %v481, %v554
  %v558 = vxor.u32 %v557, 2147483648
  %v559 = vmul.f32 %v558, 1.442695
  %v560 = vpow.pop %v559
  %v561 = vadd.f32 %v560, 1.0
  %v562 = vrcp.pop %v561
  %v563 = vmul.f32 1.0, %v562
  %564 = vrot.lane.b32.xlu0 %v69, 96
  %v565 = vpop.permute.xlu0 %564
  %v567 = vadd.f32 %v554, %v565
  %569 = vrot.lane.b32.xlu0 %v567, 64
  %v570 = vpop.permute.xlu0 %569
  %v572 = vmul.f32 %v563, %v570
  %574 = vrot.lane.b32.xlu0 %v572, 64
  %v575 = vpop.permute.xlu0 %574
  %v577 = vadd.f32 %v481, %v575
  %v578 = vtanh.pop %v577
  %v579 = vsub.f32 1.0, %v563
  %581 = vrot.lane.b32.xlu0 %v578, 96
  %v582 = vpop.permute.xlu0 %581
  %v584 = vmul.f32 %v579, %v582
  %585 = vrot.lane.b32.xlu0 %v301, 32
  %v586 = vpop.permute.xlu0 %585
  %v588 = vmul.f32 %v563, %v586
  %v589 = vadd.f32 %v584, %v588
  %591 = vrot.lane.b32.xlu0 %v589, 96
  %v592 = vpop.permute.xlu0 %591
  %594 = vst.msk [vmem:[#allocation3] sm:$0xff] %vm26, %v592
  %v595 = vld [vmem:[#allocation2 + $0x8] sm:$0xff]
  %596 = vmatprep.subr.mxu0 0.0
  %597 = vmatpush1.msra.mxu0 0.0
  %598 = vmatprep.subr.mxu0 0.0
  %599 = vmatpush1.msra.mxu0 0.0
  %600 = vmatprep.subr.mxu0 0.0
  %601 = vmatpush1.msra.mxu0 0.0
  %602 = vmatprep.subr.mxu0 0.0
  %603 = vmatpush1.msra.mxu0 0.0
  %604 = vmatprep.subr.mxu0 0.0
  %605 = vmatpush1.msra.mxu0 0.0
  %606 = vmatprep.subr.mxu0 0.0
  %607 = vmatpush1.msra.mxu0 0.0
  %608 = vmatprep.subr.mxu0 0.0
  %609 = vmatpush1.msra.mxu0 0.0
  %610 = vmatprep.subr.mxu0 0.0
  %611 = vmatpush1.msra.mxu0 0.0
  %612 = vmatprep.subr.mxu0 0.0
  %613 = vmatpush1.msra.mxu0 0.0
  %614 = vmatprep.subr.mxu0 0.0
  %615 = vmatpush1.msra.mxu0 0.0
  %616 = vmatprep.subr.mxu0 0.0
  %617 = vmatpush1.msra.mxu0 0.0
  %618 = vmatprep.subr.mxu0 0.0
  %619 = vmatpush1.msra.mxu0 0.0
  %620 = vmatprep.subr.mxu0 0.0
  %621 = vmatpush1.msra.mxu0 %v47
  %622 = vmatprep.subr.mxu0 0.0
  %623 = vmatpush1.msra.mxu0 %v46
  %624 = vmatprep.subr.mxu0 0.0
  %625 = vmatpush1.msra.mxu0 %v45
  %626 = vmatprep.subr.mxu0 0.0
  %627 = vmatpush1.msra.mxu0 %v44
  %628 = vmatprep.subr.mxu0 0.0
  %629 = vmatpush2.msra.mxu0 0.0
  %630 = vmatprep.subr.mxu0 0.0
  %631 = vmatpush2.msra.mxu0 0.0
  %632 = vmatprep.subr.mxu0 0.0
  %633 = vmatpush2.msra.mxu0 0.0
  %634 = vmatprep.subr.mxu0 0.0
  %635 = vmatpush2.msra.mxu0 0.0
  %636 = vmatprep.subr.mxu0 0.0
  %637 = vmatpush2.msra.mxu0 0.0
  %638 = vmatprep.subr.mxu0 0.0
  %639 = vmatpush2.msra.mxu0 0.0
  %640 = vmatprep.subr.mxu0 0.0
  %641 = vmatpush2.msra.mxu0 0.0
  %642 = vmatprep.subr.mxu0 0.0
  %643 = vmatpush2.msra.mxu0 0.0
  %644 = vmatprep.subr.mxu0 0.0
  %645 = vmatpush2.msra.mxu0 0.0
  %646 = vmatprep.subr.mxu0 0.0
  %647 = vmatpush2.msra.mxu0 0.0
  %648 = vmatprep.subr.mxu0 0.0
  %649 = vmatpush2.msra.mxu0 0.0
  %650 = vmatprep.subr.mxu0 0.0
  %651 = vmatpush2.msra.mxu0 0.0
  %652 = vmatprep.subr.mxu0 0.0
  %653 = vmatpush2.msra.mxu0 0.0
  %654 = vmatprep.subr.mxu0 0.0
  %655 = vmatpush2.msra.mxu0 0.0
  %656 = vmatprep.subr.mxu0 0.0
  %657 = vmatpush2.msra.mxu0 0.0
  %658 = vmatprep.subr.mxu0 0.0
  %659 = vmatpush2.msra.mxu0 0.0
  %660 = vmatprep.mubr.f32.mxu0 0.0
  %661 = vmatmul.mubr.f32.gmra.mxu0 %v412
  %v662 = vpop.f32.mrf.mxu0
  %v663 = vadd.f32 0.0, %v662
  %v664 = vpop.f32.mrf.mxu0
  %665 = vdwg.mxu0
  %v666 = vadd.f32 %v595, %v663
  %v667 = vxor.u32 %v666, 2147483648
  %v668 = vmul.f32 %v667, 1.442695
  %v669 = vpow.pop %v668
  %v670 = vadd.f32 %v669, 1.0
  %v671 = vrcp.pop %v670
  %v672 = vmul.f32 1.0, %v671
  %v673 = vadd.f32 %v663, %v384
  %675 = vrot.lane.b32.xlu0 %v673, 64
  %v676 = vpop.permute.xlu0 %675
  %v678 = vmul.f32 %v672, %v676
  %680 = vrot.lane.b32.xlu0 %v678, 64
  %v681 = vpop.permute.xlu0 %680
  %v683 = vadd.f32 %v595, %v681
  %v684 = vtanh.pop %v683
  %v685 = vsub.f32 1.0, %v672
  %687 = vrot.lane.b32.xlu0 %v684, 96
  %v688 = vpop.permute.xlu0 %687
  %v690 = vmul.f32 %v685, %v688
  %v691 = vmul.f32 %v672, %v408
  %v692 = vadd.f32 %v690, %v691
  %694 = vrot.lane.b32.xlu0 %v692, 96
  %v695 = vpop.permute.xlu0 %694
  %v696 = vsel %vm26, %v695, 0
  %698 = vmatprep.subr.mxu0 0.0
  %699 = vmatpush1.msra.mxu0 0.0
  %700 = vmatprep.subr.mxu0 0.0
  %701 = vmatpush1.msra.mxu0 0.0
  %702 = vmatprep.subr.mxu0 0.0
  %703 = vmatpush1.msra.mxu0 0.0
  %704 = vmatprep.subr.mxu0 0.0
  %705 = vmatpush1.msra.mxu0 0.0
  %706 = vmatprep.subr.mxu0 0.0
  %707 = vmatpush1.msra.mxu0 0.0
  %708 = vmatprep.subr.mxu0 0.0
  %709 = vmatpush1.msra.mxu0 0.0
  %710 = vmatprep.subr.mxu0 0.0
  %711 = vmatpush1.msra.mxu0 0.0
  %712 = vmatprep.subr.mxu0 0.0
  %713 = vmatpush1.msra.mxu0 0.0
  %714 = vmatprep.subr.mxu0 0.0
  %715 = vmatpush1.msra.mxu0 0.0
  %716 = vmatprep.subr.mxu0 0.0
  %717 = vmatpush1.msra.mxu0 0.0
  %718 = vmatprep.subr.mxu0 0.0
  %719 = vmatpush1.msra.mxu0 0.0
  %720 = vmatprep.subr.mxu0 0.0
  %721 = vmatpush1.msra.mxu0 0.0
  %722 = vmatprep.subr.mxu0 0.0
  %723 = vmatpush1.msra.mxu0 %v58
  %724 = vmatprep.subr.mxu0 0.0
  %725 = vmatpush1.msra.mxu0 %v57
  %726 = vmatprep.subr.mxu0 0.0
  %727 = vmatpush1.msra.mxu0 %v56
  %728 = vmatprep.subr.mxu0 0.0
  %729 = vmatpush1.msra.mxu0 %v55
  %730 = vmatprep.subr.mxu0 0.0
  %731 = vmatpush2.msra.mxu0 0.0
  %732 = vmatprep.subr.mxu0 0.0
  %733 = vmatpush2.msra.mxu0 0.0
  %734 = vmatprep.subr.mxu0 0.0
  %735 = vmatpush2.msra.mxu0 0.0
  %736 = vmatprep.subr.mxu0 0.0
  %737 = vmatpush2.msra.mxu0 0.0
  %738 = vmatprep.subr.mxu0 0.0
  %739 = vmatpush2.msra.mxu0 0.0
  %740 = vmatprep.subr.mxu0 0.0
  %741 = vmatpush2.msra.mxu0 0.0
  %742 = vmatprep.subr.mxu0 0.0
  %743 = vmatpush2.msra.mxu0 0.0
  %744 = vmatprep.subr.mxu0 0.0
  %745 = vmatpush2.msra.mxu0 0.0
  %746 = vmatprep.subr.mxu0 0.0
  %747 = vmatpush2.msra.mxu0 0.0
  %748 = vmatprep.subr.mxu0 0.0
  %749 = vmatpush2.msra.mxu0 0.0
  %750 = vmatprep.subr.mxu0 0.0
  %751 = vmatpush2.msra.mxu0 0.0
  %752 = vmatprep.subr.mxu0 0.0
  %753 = vmatpush2.msra.mxu0 0.0
  %754 = vmatprep.subr.mxu0 0.0
  %755 = vmatpush2.msra.mxu0 0.0
  %756 = vmatprep.subr.mxu0 0.0
  %757 = vmatpush2.msra.mxu0 0.0
  %758 = vmatprep.subr.mxu0 0.0
  %759 = vmatpush2.msra.mxu0 0.0
  %760 = vmatprep.subr.mxu0 0.0
  %761 = vmatpush2.msra.mxu0 0.0
  %762 = vmatprep.mubr.f32.mxu0 0.0
  %763 = vmatmul.mubr.f32.gmra.mxu0 %v696
  %v764 = vpop.f32.mrf.mxu0
  %v765 = vadd.f32 %v69, %v764
  %v766 = vpop.f32.mrf.mxu0
  %767 = vdwg.mxu0
  %v768 = vsel %vm26, %v592, 0
  %770 = vmatprep.subr.mxu0 0.0
  %771 = vmatpush1.msra.mxu0 0.0
  %772 = vmatprep.subr.mxu0 0.0
  %773 = vmatpush1.msra.mxu0 0.0
  %774 = vmatprep.subr.mxu0 0.0
  %775 = vmatpush1.msra.mxu0 0.0
  %776 = vmatprep.subr.mxu0 0.0
  %777 = vmatpush1.msra.mxu0 0.0
  %778 = vmatprep.subr.mxu0 0.0
  %779 = vmatpush1.msra.mxu0 0.0
  %780 = vmatprep.subr.mxu0 0.0
  %781 = vmatpush1.msra.mxu0 0.0
  %782 = vmatprep.subr.mxu0 0.0
  %783 = vmatpush1.msra.mxu0 0.0
  %784 = vmatprep.subr.mxu0 0.0
  %785 = vmatpush1.msra.mxu0 0.0
  %786 = vmatprep.subr.mxu0 0.0
  %787 = vmatpush1.msra.mxu0 0.0
  %788 = vmatprep.subr.mxu0 0.0
  %789 = vmatpush1.msra.mxu0 0.0
  %790 = vmatprep.subr.mxu0 0.0
  %791 = vmatpush1.msra.mxu0 0.0
  %792 = vmatprep.subr.mxu0 0.0
  %793 = vmatpush1.msra.mxu0 0.0
  %794 = vmatprep.subr.mxu0 0.0
  %795 = vmatpush1.msra.mxu0 %v62
  %796 = vmatprep.subr.mxu0 0.0
  %797 = vmatpush1.msra.mxu0 %v61
  %798 = vmatprep.subr.mxu0 0.0
  %799 = vmatpush1.msra.mxu0 %v60
  %800 = vmatprep.subr.mxu0 0.0
  %801 = vmatpush1.msra.mxu0 %v59
  %802 = vmatprep.subr.mxu0 0.0
  %803 = vmatpush2.msra.mxu0 0.0
  %804 = vmatprep.subr.mxu0 0.0
  %805 = vmatpush2.msra.mxu0 0.0
  %806 = vmatprep.subr.mxu0 0.0
  %807 = vmatpush2.msra.mxu0 0.0
  %808 = vmatprep.subr.mxu0 0.0
  %809 = vmatpush2.msra.mxu0 0.0
  %810 = vmatprep.subr.mxu0 0.0
  %811 = vmatpush2.msra.mxu0 0.0
  %812 = vmatprep.subr.mxu0 0.0
  %813 = vmatpush2.msra.mxu0 0.0
  %814 = vmatprep.subr.mxu0 0.0
  %815 = vmatpush2.msra.mxu0 0.0
  %816 = vmatprep.subr.mxu0 0.0
  %817 = vmatpush2.msra.mxu0 0.0
  %818 = vmatprep.subr.mxu0 0.0
  %819 = vmatpush2.msra.mxu0 0.0
  %820 = vmatprep.subr.mxu0 0.0
  %821 = vmatpush2.msra.mxu0 0.0
  %822 = vmatprep.subr.mxu0 0.0
  %823 = vmatpush2.msra.mxu0 0.0
  %824 = vmatprep.subr.mxu0 0.0
  %825 = vmatpush2.msra.mxu0 0.0
  %826 = vmatprep.subr.mxu0 0.0
  %827 = vmatpush2.msra.mxu0 0.0
  %828 = vmatprep.subr.mxu0 0.0
  %829 = vmatpush2.msra.mxu0 0.0
  %830 = vmatprep.subr.mxu0 0.0
  %831 = vmatpush2.msra.mxu0 0.0
  %832 = vmatprep.subr.mxu0 0.0
  %833 = vmatpush2.msra.mxu0 0.0
  %834 = vmatprep.mubr.f32.mxu0 0.0
  %835 = vmatmul.mubr.f32.gmra.mxu0 %v768
  %v836 = vpop.f32.mrf.mxu0
  %v837 = vadd.f32 0.0, %v836
  %v838 = vpop.f32.mrf.mxu0
  %839 = vdwg.mxu0
  %v840 = vadd.f32 %v765, %v837
  %v841 = vxor.u32 %v840, 2147483648
  %v842 = vmul.f32 %v841, 1.442695
  %v843 = vpow.pop %v842
  %v844 = vadd.f32 %v843, 1.0
  %v845 = vrcp.pop %v844
  %v846 = vmul.f32 1.0, %v845
  %v847 = vadd.f32 %v837, %v565
  %849 = vrot.lane.b32.xlu0 %v847, 64
  %v850 = vpop.permute.xlu0 %849
  %v852 = vmul.f32 %v846, %v850
  %854 = vrot.lane.b32.xlu0 %v852, 64
  %v855 = vpop.permute.xlu0 %854
  %v857 = vadd.f32 %v765, %v855
  %v858 = vtanh.pop %v857
  %v859 = vsub.f32 1.0, %v846
  %861 = vrot.lane.b32.xlu0 %v858, 96
  %v862 = vpop.permute.xlu0 %861
  %v864 = vmul.f32 %v859, %v862
  %v865 = vmul.f32 %v846, %v589
  %v866 = vadd.f32 %v864, %v865
  %868 = vrot.lane.b32.xlu0 %v866, 96
  %v869 = vpop.permute.xlu0 %868
  %871 = vst.msk [vmem:[#allocation3 + $0x8] sm:$0xff] %vm26, %v869
  %v872 = vld [vmem:[#allocation2 + $0x10] sm:$0xff]
  %873 = vmatprep.subr.mxu0 0.0
  %874 = vmatpush1.msra.mxu0 0.0
  %875 = vmatprep.subr.mxu0 0.0
  %876 = vmatpush1.msra.mxu0 0.0
  %877 = vmatprep.subr.mxu0 0.0
  %878 = vmatpush1.msra.mxu0 0.0
  %879 = vmatprep.subr.mxu0 0.0
  %880 = vmatpush1.msra.mxu0 0.0
  %881 = vmatprep.subr.mxu0 0.0
  %882 = vmatpush1.msra.mxu0 0.0
  %883 = vmatprep.subr.mxu0 0.0
  %884 = vmatpush1.msra.mxu0 0.0
  %885 = vmatprep.subr.mxu0 0.0
  %886 = vmatpush1.msra.mxu0 0.0
  %887 = vmatprep.subr.mxu0 0.0
  %888 = vmatpush1.msra.mxu0 0.0
  %889 = vmatprep.subr.mxu0 0.0
  %890 = vmatpush1.msra.mxu0 0.0
  %891 = vmatprep.subr.mxu0 0.0
  %892 = vmatpush1.msra.mxu0 0.0
  %893 = vmatprep.subr.mxu0 0.0
  %894 = vmatpush1.msra.mxu0 0.0
  %895 = vmatprep.subr.mxu0 0.0
  %896 = vmatpush1.msra.mxu0 0.0
  %897 = vmatprep.subr.mxu0 0.0
  %898 = vmatpush1.msra.mxu0 %v47
  %899 = vmatprep.subr.mxu0 0.0
  %900 = vmatpush1.msra.mxu0 %v46
  %901 = vmatprep.subr.mxu0 0.0
  %902 = vmatpush1.msra.mxu0 %v45
  %903 = vmatprep.subr.mxu0 0.0
  %904 = vmatpush1.msra.mxu0 %v44
  %905 = vmatprep.subr.mxu0 0.0
  %906 = vmatpush2.msra.mxu0 0.0
  %907 = vmatprep.subr.mxu0 0.0
  %908 = vmatpush2.msra.mxu0 0.0
  %909 = vmatprep.subr.mxu0 0.0
  %910 = vmatpush2.msra.mxu0 0.0
  %911 = vmatprep.subr.mxu0 0.0
  %912 = vmatpush2.msra.mxu0 0.0
  %913 = vmatprep.subr.mxu0 0.0
  %914 = vmatpush2.msra.mxu0 0.0
  %915 = vmatprep.subr.mxu0 0.0
  %916 = vmatpush2.msra.mxu0 0.0
  %917 = vmatprep.subr.mxu0 0.0
  %918 = vmatpush2.msra.mxu0 0.0
  %919 = vmatprep.subr.mxu0 0.0
  %920 = vmatpush2.msra.mxu0 0.0
  %921 = vmatprep.subr.mxu0 0.0
  %922 = vmatpush2.msra.mxu0 0.0
  %923 = vmatprep.subr.mxu0 0.0
  %924 = vmatpush2.msra.mxu0 0.0
  %925 = vmatprep.subr.mxu0 0.0
  %926 = vmatpush2.msra.mxu0 0.0
  %927 = vmatprep.subr.mxu0 0.0
  %928 = vmatpush2.msra.mxu0 0.0
  %929 = vmatprep.subr.mxu0 0.0
  %930 = vmatpush2.msra.mxu0 0.0
  %931 = vmatprep.subr.mxu0 0.0
  %932 = vmatpush2.msra.mxu0 0.0
  %933 = vmatprep.subr.mxu0 0.0
  %934 = vmatpush2.msra.mxu0 0.0
  %935 = vmatprep.subr.mxu0 0.0
  %936 = vmatpush2.msra.mxu0 0.0
  %937 = vmatprep.mubr.f32.mxu0 0.0
  %938 = vmatmul.mubr.f32.gmra.mxu0 %v696
  %v939 = vpop.f32.mrf.mxu0
  %v940 = vadd.f32 0.0, %v939
  %v941 = vpop.f32.mrf.mxu0
  %942 = vdwg.mxu0
  %v943 = vadd.f32 %v872, %v940
  %v944 = vxor.u32 %v943, 2147483648
  %v945 = vmul.f32 %v944, 1.442695
  %v946 = vpow.pop %v945
  %v947 = vadd.f32 %v946, 1.0
  %v948 = vrcp.pop %v947
  %v949 = vmul.f32 1.0, %v948
  %v950 = vadd.f32 %v940, %v384
  %952 = vrot.lane.b32.xlu0 %v950, 64
  %v953 = vpop.permute.xlu0 %952
  %v955 = vmul.f32 %v949, %v953
  %957 = vrot.lane.b32.xlu0 %v955, 64
  %v958 = vpop.permute.xlu0 %957
  %v960 = vadd.f32 %v872, %v958
  %v961 = vtanh.pop %v960
  %v962 = vsub.f32 1.0, %v949
  %964 = vrot.lane.b32.xlu0 %v961, 96
  %v965 = vpop.permute.xlu0 %964
  %v967 = vmul.f32 %v962, %v965
  %v968 = vmul.f32 %v949, %v692
  %v969 = vadd.f32 %v967, %v968
  %971 = vrot.lane.b32.xlu0 %v969, 96
  %v972 = vpop.permute.xlu0 %971
  %v973 = vsel %vm26, %v972, 0
  %975 = vmatprep.subr.mxu0 0.0
  %976 = vmatpush1.msra.mxu0 0.0
  %977 = vmatprep.subr.mxu0 0.0
  %978 = vmatpush1.msra.mxu0 0.0
  %979 = vmatprep.subr.mxu0 0.0
  %980 = vmatpush1.msra.mxu0 0.0
  %981 = vmatprep.subr.mxu0 0.0
  %982 = vmatpush1.msra.mxu0 0.0
  %983 = vmatprep.subr.mxu0 0.0
  %984 = vmatpush1.msra.mxu0 0.0
  %985 = vmatprep.subr.mxu0 0.0
  %986 = vmatpush1.msra.mxu0 0.0
  %987 = vmatprep.subr.mxu0 0.0
  %988 = vmatpush1.msra.mxu0 0.0
  %989 = vmatprep.subr.mxu0 0.0
  %990 = vmatpush1.msra.mxu0 0.0
  %991 = vmatprep.subr.mxu0 0.0
  %992 = vmatpush1.msra.mxu0 0.0
  %993 = vmatprep.subr.mxu0 0.0
  %994 = vmatpush1.msra.mxu0 0.0
  %995 = vmatprep.subr.mxu0 0.0
  %996 = vmatpush1.msra.mxu0 0.0
  %997 = vmatprep.subr.mxu0 0.0
  %998 = vmatpush1.msra.mxu0 0.0
  %999 = vmatprep.subr.mxu0 0.0
  %1000 = vmatpush1.msra.mxu0 %v58
  %1001 = vmatprep.subr.mxu0 0.0
  %1002 = vmatpush1.msra.mxu0 %v57
  %1003 = vmatprep.subr.mxu0 0.0
  %1004 = vmatpush1.msra.mxu0 %v56
  %1005 = vmatprep.subr.mxu0 0.0
  %1006 = vmatpush1.msra.mxu0 %v55
  %1007 = vmatprep.subr.mxu0 0.0
  %1008 = vmatpush2.msra.mxu0 0.0
  %1009 = vmatprep.subr.mxu0 0.0
  %1010 = vmatpush2.msra.mxu0 0.0
  %1011 = vmatprep.subr.mxu0 0.0
  %1012 = vmatpush2.msra.mxu0 0.0
  %1013 = vmatprep.subr.mxu0 0.0
  %1014 = vmatpush2.msra.mxu0 0.0
  %1015 = vmatprep.subr.mxu0 0.0
  %1016 = vmatpush2.msra.mxu0 0.0
  %1017 = vmatprep.subr.mxu0 0.0
  %1018 = vmatpush2.msra.mxu0 0.0
  %1019 = vmatprep.subr.mxu0 0.0
  %1020 = vmatpush2.msra.mxu0 0.0
  %1021 = vmatprep.subr.mxu0 0.0
  %1022 = vmatpush2.msra.mxu0 0.0
  %1023 = vmatprep.subr.mxu0 0.0
  %1024 = vmatpush2.msra.mxu0 0.0
  %1025 = vmatprep.subr.mxu0 0.0
  %1026 = vmatpush2.msra.mxu0 0.0
  %1027 = vmatprep.subr.mxu0 0.0
  %1028 = vmatpush2.msra.mxu0 0.0
  %1029 = vmatprep.subr.mxu0 0.0
  %1030 = vmatpush2.msra.mxu0 0.0
  %1031 = vmatprep.subr.mxu0 0.0
  %1032 = vmatpush2.msra.mxu0 0.0
  %1033 = vmatprep.subr.mxu0 0.0
  %1034 = vmatpush2.msra.mxu0 0.0
  %1035 = vmatprep.subr.mxu0 0.0
  %1036 = vmatpush2.msra.mxu0 0.0
  %1037 = vmatprep.subr.mxu0 0.0
  %1038 = vmatpush2.msra.mxu0 0.0
  %1039 = vmatprep.mubr.f32.mxu0 0.0
  %1040 = vmatmul.mubr.f32.gmra.mxu0 %v973
  %v1041 = vpop.f32.mrf.mxu0
  %v1042 = vadd.f32 %v69, %v1041
  %v1043 = vpop.f32.mrf.mxu0
  %1044 = vdwg.mxu0
  %v1045 = vsel %vm26, %v869, 0
  %1047 = vmatprep.subr.mxu0 0.0
  %1048 = vmatpush1.msra.mxu0 0.0
  %1049 = vmatprep.subr.mxu0 0.0
  %1050 = vmatpush1.msra.mxu0 0.0
  %1051 = vmatprep.subr.mxu0 0.0
  %1052 = vmatpush1.msra.mxu0 0.0
  %1053 = vmatprep.subr.mxu0 0.0
  %1054 = vmatpush1.msra.mxu0 0.0
  %1055 = vmatprep.subr.mxu0 0.0
  %1056 = vmatpush1.msra.mxu0 0.0
  %1057 = vmatprep.subr.mxu0 0.0
  %1058 = vmatpush1.msra.mxu0 0.0
  %1059 = vmatprep.subr.mxu0 0.0
  %1060 = vmatpush1.msra.mxu0 0.0
  %1061 = vmatprep.subr.mxu0 0.0
  %1062 = vmatpush1.msra.mxu0 0.0
  %1063 = vmatprep.subr.mxu0 0.0
  %1064 = vmatpush1.msra.mxu0 0.0
  %1065 = vmatprep.subr.mxu0 0.0
  %1066 = vmatpush1.msra.mxu0 0.0
  %1067 = vmatprep.subr.mxu0 0.0
  %1068 = vmatpush1.msra.mxu0 0.0
  %1069 = vmatprep.subr.mxu0 0.0
  %1070 = vmatpush1.msra.mxu0 0.0
  %1071 = vmatprep.subr.mxu0 0.0
  %1072 = vmatpush1.msra.mxu0 %v62
  %1073 = vmatprep.subr.mxu0 0.0
  %1074 = vmatpush1.msra.mxu0 %v61
  %1075 = vmatprep.subr.mxu0 0.0
  %1076 = vmatpush1.msra.mxu0 %v60
  %1077 = vmatprep.subr.mxu0 0.0
  %1078 = vmatpush1.msra.mxu0 %v59
  %1079 = vmatprep.subr.mxu0 0.0
  %1080 = vmatpush2.msra.mxu0 0.0
  %1081 = vmatprep.subr.mxu0 0.0
  %1082 = vmatpush2.msra.mxu0 0.0
  %1083 = vmatprep.subr.mxu0 0.0
  %1084 = vmatpush2.msra.mxu0 0.0
  %1085 = vmatprep.subr.mxu0 0.0
  %1086 = vmatpush2.msra.mxu0 0.0
  %1087 = vmatprep.subr.mxu0 0.0
  %1088 = vmatpush2.msra.mxu0 0.0
  %1089 = vmatprep.subr.mxu0 0.0
  %1090 = vmatpush2.msra.mxu0 0.0
  %1091 = vmatprep.subr.mxu0 0.0
  %1092 = vmatpush2.msra.mxu0 0.0
  %1093 = vmatprep.subr.mxu0 0.0
  %1094 = vmatpush2.msra.mxu0 0.0
  %1095 = vmatprep.subr.mxu0 0.0
  %1096 = vmatpush2.msra.mxu0 0.0
  %1097 = vmatprep.subr.mxu0 0.0
  %1098 = vmatpush2.msra.mxu0 0.0
  %1099 = vmatprep.subr.mxu0 0.0
  %1100 = vmatpush2.msra.mxu0 0.0
  %1101 = vmatprep.subr.mxu0 0.0
  %1102 = vmatpush2.msra.mxu0 0.0
  %1103 = vmatprep.subr.mxu0 0.0
  %1104 = vmatpush2.msra.mxu0 0.0
  %1105 = vmatprep.subr.mxu0 0.0
  %1106 = vmatpush2.msra.mxu0 0.0
  %1107 = vmatprep.subr.mxu0 0.0
  %1108 = vmatpush2.msra.mxu0 0.0
  %1109 = vmatprep.subr.mxu0 0.0
  %1110 = vmatpush2.msra.mxu0 0.0
  %1111 = vmatprep.mubr.f32.mxu0 0.0
  %1112 = vmatmul.mubr.f32.gmra.mxu0 %v1045
  %v1113 = vpop.f32.mrf.mxu0
  %v1114 = vadd.f32 0.0, %v1113
  %v1115 = vpop.f32.mrf.mxu0
  %1116 = vdwg.mxu0
  %v1117 = vadd.f32 %v1042, %v1114
  %v1118 = vxor.u32 %v1117, 2147483648
  %v1119 = vmul.f32 %v1118, 1.442695
  %v1120 = vpow.pop %v1119
  %v1121 = vadd.f32 %v1120, 1.0
  %v1122 = vrcp.pop %v1121
  %v1123 = vmul.f32 1.0, %v1122
  %v1124 = vadd.f32 %v1114, %v565
  %1126 = vrot.lane.b32.xlu0 %v1124, 64
  %v1127 = vpop.permute.xlu0 %1126
  %v1129 = vmul.f32 %v1123, %v1127
  %1131 = vrot.lane.b32.xlu0 %v1129, 64
  %v1132 = vpop.permute.xlu0 %1131
  %v1134 = vadd.f32 %v1042, %v1132
  %v1135 = vtanh.pop %v1134
  %v1136 = vsub.f32 1.0, %v1123
  %1138 = vrot.lane.b32.xlu0 %v1135, 96
  %v1139 = vpop.permute.xlu0 %1138
  %v1141 = vmul.f32 %v1136, %v1139
  %v1142 = vmul.f32 %v1123, %v866
  %v1143 = vadd.f32 %v1141, %v1142
  %1145 = vrot.lane.b32.xlu0 %v1143, 96
  %v1146 = vpop.permute.xlu0 %1145
  %1148 = vst.msk [vmem:[#allocation3 + $0x10] sm:$0xff] %vm26, %v1146
  %v1149 = vld [vmem:[#allocation2 + $0x18] sm:$0xff]
  %1150 = vmatprep.subr.mxu0 0.0
  %1151 = vmatpush1.msra.mxu0 0.0
  %1152 = vmatprep.subr.mxu0 0.0
  %1153 = vmatpush1.msra.mxu0 0.0
  %1154 = vmatprep.subr.mxu0 0.0
  %1155 = vmatpush1.msra.mxu0 0.0
  %1156 = vmatprep.subr.mxu0 0.0
  %1157 = vmatpush1.msra.mxu0 0.0
  %1158 = vmatprep.subr.mxu0 0.0
  %1159 = vmatpush1.msra.mxu0 0.0
  %1160 = vmatprep.subr.mxu0 0.0
  %1161 = vmatpush1.msra.mxu0 0.0
  %1162 = vmatprep.subr.mxu0 0.0
  %1163 = vmatpush1.msra.mxu0 0.0
  %1164 = vmatprep.subr.mxu0 0.0
  %1165 = vmatpush1.msra.mxu0 0.0
  %1166 = vmatprep.subr.mxu0 0.0
  %1167 = vmatpush1.msra.mxu0 0.0
  %1168 = vmatprep.subr.mxu0 0.0
  %1169 = vmatpush1.msra.mxu0 0.0
  %1170 = vmatprep.subr.mxu0 0.0
  %1171 = vmatpush1.msra.mxu0 0.0
  %1172 = vmatprep.subr.mxu0 0.0
  %1173 = vmatpush1.msra.mxu0 0.0
  %1174 = vmatprep.subr.mxu0 0.0
  %1175 = vmatpush1.msra.mxu0 %v47
  %1176 = vmatprep.subr.mxu0 0.0
  %1177 = vmatpush1.msra.mxu0 %v46
  %1178 = vmatprep.subr.mxu0 0.0
  %1179 = vmatpush1.msra.mxu0 %v45
  %1180 = vmatprep.subr.mxu0 0.0
  %1181 = vmatpush1.msra.mxu0 %v44
  %1182 = vmatprep.subr.mxu0 0.0
  %1183 = vmatpush2.msra.mxu0 0.0
  %1184 = vmatprep.subr.mxu0 0.0
  %1185 = vmatpush2.msra.mxu0 0.0
  %1186 = vmatprep.subr.mxu0 0.0
  %1187 = vmatpush2.msra.mxu0 0.0
  %1188 = vmatprep.subr.mxu0 0.0
  %1189 = vmatpush2.msra.mxu0 0.0
  %1190 = vmatprep.subr.mxu0 0.0
  %1191 = vmatpush2.msra.mxu0 0.0
  %1192 = vmatprep.subr.mxu0 0.0
  %1193 = vmatpush2.msra.mxu0 0.0
  %1194 = vmatprep.subr.mxu0 0.0
  %1195 = vmatpush2.msra.mxu0 0.0
  %1196 = vmatprep.subr.mxu0 0.0
  %1197 = vmatpush2.msra.mxu0 0.0
  %1198 = vmatprep.subr.mxu0 0.0
  %1199 = vmatpush2.msra.mxu0 0.0
  %1200 = vmatprep.subr.mxu0 0.0
  %1201 = vmatpush2.msra.mxu0 0.0
  %1202 = vmatprep.subr.mxu0 0.0
  %1203 = vmatpush2.msra.mxu0 0.0
  %1204 = vmatprep.subr.mxu0 0.0
  %1205 = vmatpush2.msra.mxu0 0.0
  %1206 = vmatprep.subr.mxu0 0.0
  %1207 = vmatpush2.msra.mxu0 0.0
  %1208 = vmatprep.subr.mxu0 0.0
  %1209 = vmatpush2.msra.mxu0 0.0
  %1210 = vmatprep.subr.mxu0 0.0
  %1211 = vmatpush2.msra.mxu0 0.0
  %1212 = vmatprep.subr.mxu0 0.0
  %1213 = vmatpush2.msra.mxu0 0.0
  %1214 = vmatprep.mubr.f32.mxu0 0.0
  %1215 = vmatmul.mubr.f32.gmra.mxu0 %v973
  %v1216 = vpop.f32.mrf.mxu0
  %v1217 = vadd.f32 0.0, %v1216
  %v1218 = vpop.f32.mrf.mxu0
  %1219 = vdwg.mxu0
  %v1220 = vadd.f32 %v1149, %v1217
  %v1221 = vxor.u32 %v1220, 2147483648
  %v1222 = vmul.f32 %v1221, 1.442695
  %v1223 = vpow.pop %v1222
  %v1224 = vadd.f32 %v1223, 1.0
  %v1225 = vrcp.pop %v1224
  %v1226 = vmul.f32 1.0, %v1225
  %v1227 = vadd.f32 %v1217, %v384
  %1229 = vrot.lane.b32.xlu0 %v1227, 64
  %v1230 = vpop.permute.xlu0 %1229
  %v1232 = vmul.f32 %v1226, %v1230
  %1234 = vrot.lane.b32.xlu0 %v1232, 64
  %v1235 = vpop.permute.xlu0 %1234
  %v1237 = vadd.f32 %v1149, %v1235
  %v1238 = vtanh.pop %v1237
  %v1239 = vsub.f32 1.0, %v1226
  %1241 = vrot.lane.b32.xlu0 %v1238, 96
  %v1242 = vpop.permute.xlu0 %1241
  %v1244 = vmul.f32 %v1239, %v1242
  %v1245 = vmul.f32 %v1226, %v969
  %v1246 = vadd.f32 %v1244, %v1245
  %1248 = vrot.lane.b32.xlu0 %v1246, 96
  %v1249 = vpop.permute.xlu0 %1248
  %v1250 = vsel %vm26, %v1249, 0
  %1252 = vmatprep.subr.mxu0 0.0
  %1253 = vmatpush1.msra.mxu0 0.0
  %1254 = vmatprep.subr.mxu0 0.0
  %1255 = vmatpush1.msra.mxu0 0.0
  %1256 = vmatprep.subr.mxu0 0.0
  %1257 = vmatpush1.msra.mxu0 0.0
  %1258 = vmatprep.subr.mxu0 0.0
  %1259 = vmatpush1.msra.mxu0 0.0
  %1260 = vmatprep.subr.mxu0 0.0
  %1261 = vmatpush1.msra.mxu0 0.0
  %1262 = vmatprep.subr.mxu0 0.0
  %1263 = vmatpush1.msra.mxu0 0.0
  %1264 = vmatprep.subr.mxu0 0.0
  %1265 = vmatpush1.msra.mxu0 0.0
  %1266 = vmatprep.subr.mxu0 0.0
  %1267 = vmatpush1.msra.mxu0 0.0
  %1268 = vmatprep.subr.mxu0 0.0
  %1269 = vmatpush1.msra.mxu0 0.0
  %1270 = vmatprep.subr.mxu0 0.0
  %1271 = vmatpush1.msra.mxu0 0.0
  %1272 = vmatprep.subr.mxu0 0.0
  %1273 = vmatpush1.msra.mxu0 0.0
  %1274 = vmatprep.subr.mxu0 0.0
  %1275 = vmatpush1.msra.mxu0 0.0
  %1276 = vmatprep.subr.mxu0 0.0
  %1277 = vmatpush1.msra.mxu0 %v58
  %1278 = vmatprep.subr.mxu0 0.0
  %1279 = vmatpush1.msra.mxu0 %v57
  %1280 = vmatprep.subr.mxu0 0.0
  %1281 = vmatpush1.msra.mxu0 %v56
  %1282 = vmatprep.subr.mxu0 0.0
  %1283 = vmatpush1.msra.mxu0 %v55
  %1284 = vmatprep.subr.mxu0 0.0
  %1285 = vmatpush2.msra.mxu0 0.0
  %1286 = vmatprep.subr.mxu0 0.0
  %1287 = vmatpush2.msra.mxu0 0.0
  %1288 = vmatprep.subr.mxu0 0.0
  %1289 = vmatpush2.msra.mxu0 0.0
  %1290 = vmatprep.subr.mxu0 0.0
  %1291 = vmatpush2.msra.mxu0 0.0
  %1292 = vmatprep.subr.mxu0 0.0
  %1293 = vmatpush2.msra.mxu0 0.0
  %1294 = vmatprep.subr.mxu0 0.0
  %1295 = vmatpush2.msra.mxu0 0.0
  %1296 = vmatprep.subr.mxu0 0.0
  %1297 = vmatpush2.msra.mxu0 0.0
  %1298 = vmatprep.subr.mxu0 0.0
  %1299 = vmatpush2.msra.mxu0 0.0
  %1300 = vmatprep.subr.mxu0 0.0
  %1301 = vmatpush2.msra.mxu0 0.0
  %1302 = vmatprep.subr.mxu0 0.0
  %1303 = vmatpush2.msra.mxu0 0.0
  %1304 = vmatprep.subr.mxu0 0.0
  %1305 = vmatpush2.msra.mxu0 0.0
  %1306 = vmatprep.subr.mxu0 0.0
  %1307 = vmatpush2.msra.mxu0 0.0
  %1308 = vmatprep.subr.mxu0 0.0
  %1309 = vmatpush2.msra.mxu0 0.0
  %1310 = vmatprep.subr.mxu0 0.0
  %1311 = vmatpush2.msra.mxu0 0.0
  %1312 = vmatprep.subr.mxu0 0.0
  %1313 = vmatpush2.msra.mxu0 0.0
  %1314 = vmatprep.subr.mxu0 0.0
  %1315 = vmatpush2.msra.mxu0 0.0
  %1316 = vmatprep.mubr.f32.mxu0 0.0
  %1317 = vmatmul.mubr.f32.gmra.mxu0 %v1250
  %v1318 = vpop.f32.mrf.mxu0
  %v1319 = vadd.f32 %v69, %v1318
  %v1320 = vpop.f32.mrf.mxu0
  %1321 = vdwg.mxu0
  %v1322 = vsel %vm26, %v1146, 0
  %1324 = vmatprep.subr.mxu0 0.0
  %1325 = vmatpush1.msra.mxu0 0.0
  %1326 = vmatprep.subr.mxu0 0.0
  %1327 = vmatpush1.msra.mxu0 0.0
  %1328 = vmatprep.subr.mxu0 0.0
  %1329 = vmatpush1.msra.mxu0 0.0
  %1330 = vmatprep.subr.mxu0 0.0
  %1331 = vmatpush1.msra.mxu0 0.0
  %1332 = vmatprep.subr.mxu0 0.0
  %1333 = vmatpush1.msra.mxu0 0.0
  %1334 = vmatprep.subr.mxu0 0.0
  %1335 = vmatpush1.msra.mxu0 0.0
  %1336 = vmatprep.subr.mxu0 0.0
  %1337 = vmatpush1.msra.mxu0 0.0
  %1338 = vmatprep.subr.mxu0 0.0
  %1339 = vmatpush1.msra.mxu0 0.0
  %1340 = vmatprep.subr.mxu0 0.0
  %1341 = vmatpush1.msra.mxu0 0.0
  %1342 = vmatprep.subr.mxu0 0.0
  %1343 = vmatpush1.msra.mxu0 0.0
  %1344 = vmatprep.subr.mxu0 0.0
  %1345 = vmatpush1.msra.mxu0 0.0
  %1346 = vmatprep.subr.mxu0 0.0
  %1347 = vmatpush1.msra.mxu0 0.0
  %1348 = vmatprep.subr.mxu0 0.0
  %1349 = vmatpush1.msra.mxu0 %v62
  %1350 = vmatprep.subr.mxu0 0.0
  %1351 = vmatpush1.msra.mxu0 %v61
  %1352 = vmatprep.subr.mxu0 0.0
  %1353 = vmatpush1.msra.mxu0 %v60
  %1354 = vmatprep.subr.mxu0 0.0
  %1355 = vmatpush1.msra.mxu0 %v59
  %1356 = vmatprep.subr.mxu0 0.0
  %1357 = vmatpush2.msra.mxu0 0.0
  %1358 = vmatprep.subr.mxu0 0.0
  %1359 = vmatpush2.msra.mxu0 0.0
  %1360 = vmatprep.subr.mxu0 0.0
  %1361 = vmatpush2.msra.mxu0 0.0
  %1362 = vmatprep.subr.mxu0 0.0
  %1363 = vmatpush2.msra.mxu0 0.0
  %1364 = vmatprep.subr.mxu0 0.0
  %1365 = vmatpush2.msra.mxu0 0.0
  %1366 = vmatprep.subr.mxu0 0.0
  %1367 = vmatpush2.msra.mxu0 0.0
  %1368 = vmatprep.subr.mxu0 0.0
  %1369 = vmatpush2.msra.mxu0 0.0
  %1370 = vmatprep.subr.mxu0 0.0
  %1371 = vmatpush2.msra.mxu0 0.0
  %1372 = vmatprep.subr.mxu0 0.0
  %1373 = vmatpush2.msra.mxu0 0.0
  %1374 = vmatprep.subr.mxu0 0.0
  %1375 = vmatpush2.msra.mxu0 0.0
  %1376 = vmatprep.subr.mxu0 0.0
  %1377 = vmatpush2.msra.mxu0 0.0
  %1378 = vmatprep.subr.mxu0 0.0
  %1379 = vmatpush2.msra.mxu0 0.0
  %1380 = vmatprep.subr.mxu0 0.0
  %1381 = vmatpush2.msra.mxu0 0.0
  %1382 = vmatprep.subr.mxu0 0.0
  %1383 = vmatpush2.msra.mxu0 0.0
  %1384 = vmatprep.subr.mxu0 0.0
  %1385 = vmatpush2.msra.mxu0 0.0
  %1386 = vmatprep.subr.mxu0 0.0
  %1387 = vmatpush2.msra.mxu0 0.0
  %1388 = vmatprep.mubr.f32.mxu0 0.0
  %1389 = vmatmul.mubr.f32.gmra.mxu0 %v1322
  %v1390 = vpop.f32.mrf.mxu0
  %v1391 = vadd.f32 0.0, %v1390
  %v1392 = vpop.f32.mrf.mxu0
  %1393 = vdwg.mxu0
  %v1394 = vadd.f32 %v1319, %v1391
  %v1395 = vxor.u32 %v1394, 2147483648
  %v1396 = vmul.f32 %v1395, 1.442695
  %v1397 = vpow.pop %v1396
  %v1398 = vadd.f32 %v1397, 1.0
  %v1399 = vrcp.pop %v1398
  %v1400 = vmul.f32 1.0, %v1399
  %v1401 = vadd.f32 %v1391, %v565
  %1403 = vrot.lane.b32.xlu0 %v1401, 64
  %v1404 = vpop.permute.xlu0 %1403
  %v1406 = vmul.f32 %v1400, %v1404
  %1408 = vrot.lane.b32.xlu0 %v1406, 64
  %v1409 = vpop.permute.xlu0 %1408
  %v1411 = vadd.f32 %v1319, %v1409
  %v1412 = vtanh.pop %v1411
  %v1413 = vsub.f32 1.0, %v1400
  %1415 = vrot.lane.b32.xlu0 %v1412, 96
  %v1416 = vpop.permute.xlu0 %1415
  %v1418 = vmul.f32 %v1413, %v1416
  %v1419 = vmul.f32 %v1400, %v1143
  %v1420 = vadd.f32 %v1418, %v1419
  %1422 = vrot.lane.b32.xlu0 %v1420, 96
  %v1423 = vpop.permute.xlu0 %1422
  %1425 = vst.msk [vmem:[#allocation3 + $0x18] sm:$0xff] %vm26, %v1423
  %v1426 = vld [vmem:[#allocation2 + $0x20] sm:$0xff]
  %1427 = vmatprep.subr.mxu0 0.0
  %1428 = vmatpush1.msra.mxu0 0.0
  %1429 = vmatprep.subr.mxu0 0.0
  %1430 = vmatpush1.msra.mxu0 0.0
  %1431 = vmatprep.subr.mxu0 0.0
  %1432 = vmatpush1.msra.mxu0 0.0
  %1433 = vmatprep.subr.mxu0 0.0
  %1434 = vmatpush1.msra.mxu0 0.0
  %1435 = vmatprep.subr.mxu0 0.0
  %1436 = vmatpush1.msra.mxu0 0.0
  %1437 = vmatprep.subr.mxu0 0.0
  %1438 = vmatpush1.msra.mxu0 0.0
  %1439 = vmatprep.subr.mxu0 0.0
  %1440 = vmatpush1.msra.mxu0 0.0
  %1441 = vmatprep.subr.mxu0 0.0
  %1442 = vmatpush1.msra.mxu0 0.0
  %1443 = vmatprep.subr.mxu0 0.0
  %1444 = vmatpush1.msra.mxu0 0.0
  %1445 = vmatprep.subr.mxu0 0.0
  %1446 = vmatpush1.msra.mxu0 0.0
  %1447 = vmatprep.subr.mxu0 0.0
  %1448 = vmatpush1.msra.mxu0 0.0
  %1449 = vmatprep.subr.mxu0 0.0
  %1450 = vmatpush1.msra.mxu0 0.0
  %1451 = vmatprep.subr.mxu0 0.0
  %1452 = vmatpush1.msra.mxu0 %v47
  %1453 = vmatprep.subr.mxu0 0.0
  %1454 = vmatpush1.msra.mxu0 %v46
  %1455 = vmatprep.subr.mxu0 0.0
  %1456 = vmatpush1.msra.mxu0 %v45
  %1457 = vmatprep.subr.mxu0 0.0
  %1458 = vmatpush1.msra.mxu0 %v44
  %1459 = vmatprep.subr.mxu0 0.0
  %1460 = vmatpush2.msra.mxu0 0.0
  %1461 = vmatprep.subr.mxu0 0.0
  %1462 = vmatpush2.msra.mxu0 0.0
  %1463 = vmatprep.subr.mxu0 0.0
  %1464 = vmatpush2.msra.mxu0 0.0
  %1465 = vmatprep.subr.mxu0 0.0
  %1466 = vmatpush2.msra.mxu0 0.0
  %1467 = vmatprep.subr.mxu0 0.0
  %1468 = vmatpush2.msra.mxu0 0.0
  %1469 = vmatprep.subr.mxu0 0.0
  %1470 = vmatpush2.msra.mxu0 0.0
  %1471 = vmatprep.subr.mxu0 0.0
  %1472 = vmatpush2.msra.mxu0 0.0
  %1473 = vmatprep.subr.mxu0 0.0
  %1474 = vmatpush2.msra.mxu0 0.0
  %1475 = vmatprep.subr.mxu0 0.0
  %1476 = vmatpush2.msra.mxu0 0.0
  %1477 = vmatprep.subr.mxu0 0.0
  %1478 = vmatpush2.msra.mxu0 0.0
  %1479 = vmatprep.subr.mxu0 0.0
  %1480 = vmatpush2.msra.mxu0 0.0
  %1481 = vmatprep.subr.mxu0 0.0
  %1482 = vmatpush2.msra.mxu0 0.0
  %1483 = vmatprep.subr.mxu0 0.0
  %1484 = vmatpush2.msra.mxu0 0.0
  %1485 = vmatprep.subr.mxu0 0.0
  %1486 = vmatpush2.msra.mxu0 0.0
  %1487 = vmatprep.subr.mxu0 0.0
  %1488 = vmatpush2.msra.mxu0 0.0
  %1489 = vmatprep.subr.mxu0 0.0
  %1490 = vmatpush2.msra.mxu0 0.0
  %1491 = vmatprep.mubr.f32.mxu0 0.0
  %1492 = vmatmul.mubr.f32.gmra.mxu0 %v1250
  %v1493 = vpop.f32.mrf.mxu0
  %v1494 = vadd.f32 0.0, %v1493
  %v1495 = vpop.f32.mrf.mxu0
  %1496 = vdwg.mxu0
  %v1497 = vadd.f32 %v1426, %v1494
  %v1498 = vxor.u32 %v1497, 2147483648
  %v1499 = vmul.f32 %v1498, 1.442695
  %v1500 = vpow.pop %v1499
  %v1501 = vadd.f32 %v1500, 1.0
  %v1502 = vrcp.pop %v1501
  %v1503 = vmul.f32 1.0, %v1502
  %v1504 = vadd.f32 %v1494, %v384
  %1506 = vrot.lane.b32.xlu0 %v1504, 64
  %v1507 = vpop.permute.xlu0 %1506
  %v1509 = vmul.f32 %v1503, %v1507
  %1511 = vrot.lane.b32.xlu0 %v1509, 64
  %v1512 = vpop.permute.xlu0 %1511
  %v1514 = vadd.f32 %v1426, %v1512
  %v1515 = vtanh.pop %v1514
  %v1516 = vsub.f32 1.0, %v1503
  %1518 = vrot.lane.b32.xlu0 %v1515, 96
  %v1519 = vpop.permute.xlu0 %1518
  %v1521 = vmul.f32 %v1516, %v1519
  %v1522 = vmul.f32 %v1503, %v1246
  %v1523 = vadd.f32 %v1521, %v1522
  %1525 = vrot.lane.b32.xlu0 %v1523, 96
  %v1526 = vpop.permute.xlu0 %1525
  %v1527 = vsel %vm26, %v1526, 0
  %1529 = vmatprep.subr.mxu0 0.0
  %1530 = vmatpush1.msra.mxu0 0.0
  %1531 = vmatprep.subr.mxu0 0.0
  %1532 = vmatpush1.msra.mxu0 0.0
  %1533 = vmatprep.subr.mxu0 0.0
  %1534 = vmatpush1.msra.mxu0 0.0
  %1535 = vmatprep.subr.mxu0 0.0
  %1536 = vmatpush1.msra.mxu0 0.0
  %1537 = vmatprep.subr.mxu0 0.0
  %1538 = vmatpush1.msra.mxu0 0.0
  %1539 = vmatprep.subr.mxu0 0.0
  %1540 = vmatpush1.msra.mxu0 0.0
  %1541 = vmatprep.subr.mxu0 0.0
  %1542 = vmatpush1.msra.mxu0 0.0
  %1543 = vmatprep.subr.mxu0 0.0
  %1544 = vmatpush1.msra.mxu0 0.0
  %1545 = vmatprep.subr.mxu0 0.0
  %1546 = vmatpush1.msra.mxu0 0.0
  %1547 = vmatprep.subr.mxu0 0.0
  %1548 = vmatpush1.msra.mxu0 0.0
  %1549 = vmatprep.subr.mxu0 0.0
  %1550 = vmatpush1.msra.mxu0 0.0
  %1551 = vmatprep.subr.mxu0 0.0
  %1552 = vmatpush1.msra.mxu0 0.0
  %1553 = vmatprep.subr.mxu0 0.0
  %1554 = vmatpush1.msra.mxu0 %v58
  %1555 = vmatprep.subr.mxu0 0.0
  %1556 = vmatpush1.msra.mxu0 %v57
  %1557 = vmatprep.subr.mxu0 0.0
  %1558 = vmatpush1.msra.mxu0 %v56
  %1559 = vmatprep.subr.mxu0 0.0
  %1560 = vmatpush1.msra.mxu0 %v55
  %1561 = vmatprep.subr.mxu0 0.0
  %1562 = vmatpush2.msra.mxu0 0.0
  %1563 = vmatprep.subr.mxu0 0.0
  %1564 = vmatpush2.msra.mxu0 0.0
  %1565 = vmatprep.subr.mxu0 0.0
  %1566 = vmatpush2.msra.mxu0 0.0
  %1567 = vmatprep.subr.mxu0 0.0
  %1568 = vmatpush2.msra.mxu0 0.0
  %1569 = vmatprep.subr.mxu0 0.0
  %1570 = vmatpush2.msra.mxu0 0.0
  %1571 = vmatprep.subr.mxu0 0.0
  %1572 = vmatpush2.msra.mxu0 0.0
  %1573 = vmatprep.subr.mxu0 0.0
  %1574 = vmatpush2.msra.mxu0 0.0
  %1575 = vmatprep.subr.mxu0 0.0
  %1576 = vmatpush2.msra.mxu0 0.0
  %1577 = vmatprep.subr.mxu0 0.0
  %1578 = vmatpush2.msra.mxu0 0.0
  %1579 = vmatprep.subr.mxu0 0.0
  %1580 = vmatpush2.msra.mxu0 0.0
  %1581 = vmatprep.subr.mxu0 0.0
  %1582 = vmatpush2.msra.mxu0 0.0
  %1583 = vmatprep.subr.mxu0 0.0
  %1584 = vmatpush2.msra.mxu0 0.0
  %1585 = vmatprep.subr.mxu0 0.0
  %1586 = vmatpush2.msra.mxu0 0.0
  %1587 = vmatprep.subr.mxu0 0.0
  %1588 = vmatpush2.msra.mxu0 0.0
  %1589 = vmatprep.subr.mxu0 0.0
  %1590 = vmatpush2.msra.mxu0 0.0
  %1591 = vmatprep.subr.mxu0 0.0
  %1592 = vmatpush2.msra.mxu0 0.0
  %1593 = vmatprep.mubr.f32.mxu0 0.0
  %1594 = vmatmul.mubr.f32.gmra.mxu0 %v1527
  %v1595 = vpop.f32.mrf.mxu0
  %v1596 = vadd.f32 %v69, %v1595
  %v1597 = vpop.f32.mrf.mxu0
  %1598 = vdwg.mxu0
  %v1599 = vsel %vm26, %v1423, 0
  %1601 = vmatprep.subr.mxu0 0.0
  %1602 = vmatpush1.msra.mxu0 0.0
  %1603 = vmatprep.subr.mxu0 0.0
  %1604 = vmatpush1.msra.mxu0 0.0
  %1605 = vmatprep.subr.mxu0 0.0
  %1606 = vmatpush1.msra.mxu0 0.0
  %1607 = vmatprep.subr.mxu0 0.0
  %1608 = vmatpush1.msra.mxu0 0.0
  %1609 = vmatprep.subr.mxu0 0.0
  %1610 = vmatpush1.msra.mxu0 0.0
  %1611 = vmatprep.subr.mxu0 0.0
  %1612 = vmatpush1.msra.mxu0 0.0
  %1613 = vmatprep.subr.mxu0 0.0
  %1614 = vmatpush1.msra.mxu0 0.0
  %1615 = vmatprep.subr.mxu0 0.0
  %1616 = vmatpush1.msra.mxu0 0.0
  %1617 = vmatprep.subr.mxu0 0.0
  %1618 = vmatpush1.msra.mxu0 0.0
  %1619 = vmatprep.subr.mxu0 0.0
  %1620 = vmatpush1.msra.mxu0 0.0
  %1621 = vmatprep.subr.mxu0 0.0
  %1622 = vmatpush1.msra.mxu0 0.0
  %1623 = vmatprep.subr.mxu0 0.0
  %1624 = vmatpush1.msra.mxu0 0.0
  %1625 = vmatprep.subr.mxu0 0.0
  %1626 = vmatpush1.msra.mxu0 %v62
  %1627 = vmatprep.subr.mxu0 0.0
  %1628 = vmatpush1.msra.mxu0 %v61
  %1629 = vmatprep.subr.mxu0 0.0
  %1630 = vmatpush1.msra.mxu0 %v60
  %1631 = vmatprep.subr.mxu0 0.0
  %1632 = vmatpush1.msra.mxu0 %v59
  %1633 = vmatprep.subr.mxu0 0.0
  %1634 = vmatpush2.msra.mxu0 0.0
  %1635 = vmatprep.subr.mxu0 0.0
  %1636 = vmatpush2.msra.mxu0 0.0
  %1637 = vmatprep.subr.mxu0 0.0
  %1638 = vmatpush2.msra.mxu0 0.0
  %1639 = vmatprep.subr.mxu0 0.0
  %1640 = vmatpush2.msra.mxu0 0.0
  %1641 = vmatprep.subr.mxu0 0.0
  %1642 = vmatpush2.msra.mxu0 0.0
  %1643 = vmatprep.subr.mxu0 0.0
  %1644 = vmatpush2.msra.mxu0 0.0
  %1645 = vmatprep.subr.mxu0 0.0
  %1646 = vmatpush2.msra.mxu0 0.0
  %1647 = vmatprep.subr.mxu0 0.0
  %1648 = vmatpush2.msra.mxu0 0.0
  %1649 = vmatprep.subr.mxu0 0.0
  %1650 = vmatpush2.msra.mxu0 0.0
  %1651 = vmatprep.subr.mxu0 0.0
  %1652 = vmatpush2.msra.mxu0 0.0
  %1653 = vmatprep.subr.mxu0 0.0
  %1654 = vmatpush2.msra.mxu0 0.0
  %1655 = vmatprep.subr.mxu0 0.0
  %1656 = vmatpush2.msra.mxu0 0.0
  %1657 = vmatprep.subr.mxu0 0.0
  %1658 = vmatpush2.msra.mxu0 0.0
  %1659 = vmatprep.subr.mxu0 0.0
  %1660 = vmatpush2.msra.mxu0 0.0
  %1661 = vmatprep.subr.mxu0 0.0
  %1662 = vmatpush2.msra.mxu0 0.0
  %1663 = vmatprep.subr.mxu0 0.0
  %1664 = vmatpush2.msra.mxu0 0.0
  %1665 = vmatprep.mubr.f32.mxu0 0.0
  %1666 = vmatmul.mubr.f32.gmra.mxu0 %v1599
  %v1667 = vpop.f32.mrf.mxu0
  %v1668 = vadd.f32 0.0, %v1667
  %v1669 = vpop.f32.mrf.mxu0
  %1670 = vdwg.mxu0
  %v1671 = vadd.f32 %v1596, %v1668
  %v1672 = vxor.u32 %v1671, 2147483648
  %v1673 = vmul.f32 %v1672, 1.442695
  %v1674 = vpow.pop %v1673
  %v1675 = vadd.f32 %v1674, 1.0
  %v1676 = vrcp.pop %v1675
  %v1677 = vmul.f32 1.0, %v1676
  %v1678 = vadd.f32 %v1668, %v565
  %1680 = vrot.lane.b32.xlu0 %v1678, 64
  %v1681 = vpop.permute.xlu0 %1680
  %v1683 = vmul.f32 %v1677, %v1681
  %1685 = vrot.lane.b32.xlu0 %v1683, 64
  %v1686 = vpop.permute.xlu0 %1685
  %v1688 = vadd.f32 %v1596, %v1686
  %v1689 = vtanh.pop %v1688
  %v1690 = vsub.f32 1.0, %v1677
  %1692 = vrot.lane.b32.xlu0 %v1689, 96
  %v1693 = vpop.permute.xlu0 %1692
  %v1695 = vmul.f32 %v1690, %v1693
  %v1696 = vmul.f32 %v1677, %v1420
  %v1697 = vadd.f32 %v1695, %v1696
  %1699 = vrot.lane.b32.xlu0 %v1697, 96
  %v1700 = vpop.permute.xlu0 %1699
  %1702 = vst.msk [vmem:[#allocation3 + $0x20] sm:$0xff] %vm26, %v1700
  %v1703 = vld [vmem:[#allocation2 + $0x28] sm:$0xff]
  %1704 = vmatprep.subr.mxu0 0.0
  %1705 = vmatpush1.msra.mxu0 0.0
  %1706 = vmatprep.subr.mxu0 0.0
  %1707 = vmatpush1.msra.mxu0 0.0
  %1708 = vmatprep.subr.mxu0 0.0
  %1709 = vmatpush1.msra.mxu0 0.0
  %1710 = vmatprep.subr.mxu0 0.0
  %1711 = vmatpush1.msra.mxu0 0.0
  %1712 = vmatprep.subr.mxu0 0.0
  %1713 = vmatpush1.msra.mxu0 0.0
  %1714 = vmatprep.subr.mxu0 0.0
  %1715 = vmatpush1.msra.mxu0 0.0
  %1716 = vmatprep.subr.mxu0 0.0
  %1717 = vmatpush1.msra.mxu0 0.0
  %1718 = vmatprep.subr.mxu0 0.0
  %1719 = vmatpush1.msra.mxu0 0.0
  %1720 = vmatprep.subr.mxu0 0.0
  %1721 = vmatpush1.msra.mxu0 0.0
  %1722 = vmatprep.subr.mxu0 0.0
  %1723 = vmatpush1.msra.mxu0 0.0
  %1724 = vmatprep.subr.mxu0 0.0
  %1725 = vmatpush1.msra.mxu0 0.0
  %1726 = vmatprep.subr.mxu0 0.0
  %1727 = vmatpush1.msra.mxu0 0.0
  %1728 = vmatprep.subr.mxu0 0.0
  %1729 = vmatpush1.msra.mxu0 %v47
  %1730 = vmatprep.subr.mxu0 0.0
  %1731 = vmatpush1.msra.mxu0 %v46
  %1732 = vmatprep.subr.mxu0 0.0
  %1733 = vmatpush1.msra.mxu0 %v45
  %1734 = vmatprep.subr.mxu0 0.0
  %1735 = vmatpush1.msra.mxu0 %v44
  %1736 = vmatprep.subr.mxu0 0.0
  %1737 = vmatpush2.msra.mxu0 0.0
  %1738 = vmatprep.subr.mxu0 0.0
  %1739 = vmatpush2.msra.mxu0 0.0
  %1740 = vmatprep.subr.mxu0 0.0
  %1741 = vmatpush2.msra.mxu0 0.0
  %1742 = vmatprep.subr.mxu0 0.0
  %1743 = vmatpush2.msra.mxu0 0.0
  %1744 = vmatprep.subr.mxu0 0.0
  %1745 = vmatpush2.msra.mxu0 0.0
  %1746 = vmatprep.subr.mxu0 0.0
  %1747 = vmatpush2.msra.mxu0 0.0
  %1748 = vmatprep.subr.mxu0 0.0
  %1749 = vmatpush2.msra.mxu0 0.0
  %1750 = vmatprep.subr.mxu0 0.0
  %1751 = vmatpush2.msra.mxu0 0.0
  %1752 = vmatprep.subr.mxu0 0.0
  %1753 = vmatpush2.msra.mxu0 0.0
  %1754 = vmatprep.subr.mxu0 0.0
  %1755 = vmatpush2.msra.mxu0 0.0
  %1756 = vmatprep.subr.mxu0 0.0
  %1757 = vmatpush2.msra.mxu0 0.0
  %1758 = vmatprep.subr.mxu0 0.0
  %1759 = vmatpush2.msra.mxu0 0.0
  %1760 = vmatprep.subr.mxu0 0.0
  %1761 = vmatpush2.msra.mxu0 0.0
  %1762 = vmatprep.subr.mxu0 0.0
  %1763 = vmatpush2.msra.mxu0 0.0
  %1764 = vmatprep.subr.mxu0 0.0
  %1765 = vmatpush2.msra.mxu0 0.0
  %1766 = vmatprep.subr.mxu0 0.0
  %1767 = vmatpush2.msra.mxu0 0.0
  %1768 = vmatprep.mubr.f32.mxu0 0.0
  %1769 = vmatmul.mubr.f32.gmra.mxu0 %v1527
  %v1770 = vpop.f32.mrf.mxu0
  %v1771 = vadd.f32 0.0, %v1770
  %v1772 = vpop.f32.mrf.mxu0
  %1773 = vdwg.mxu0
  %v1774 = vadd.f32 %v1703, %v1771
  %v1775 = vxor.u32 %v1774, 2147483648
  %v1776 = vmul.f32 %v1775, 1.442695
  %v1777 = vpow.pop %v1776
  %v1778 = vadd.f32 %v1777, 1.0
  %v1779 = vrcp.pop %v1778
  %v1780 = vmul.f32 1.0, %v1779
  %v1781 = vadd.f32 %v1771, %v384
  %1783 = vrot.lane.b32.xlu0 %v1781, 64
  %v1784 = vpop.permute.xlu0 %1783
  %v1786 = vmul.f32 %v1780, %v1784
  %1788 = vrot.lane.b32.xlu0 %v1786, 64
  %v1789 = vpop.permute.xlu0 %1788
  %v1791 = vadd.f32 %v1703, %v1789
  %v1792 = vtanh.pop %v1791
  %v1793 = vsub.f32 1.0, %v1780
  %1795 = vrot.lane.b32.xlu0 %v1792, 96
  %v1796 = vpop.permute.xlu0 %1795
  %v1798 = vmul.f32 %v1793, %v1796
  %v1799 = vmul.f32 %v1780, %v1523
  %v1800 = vadd.f32 %v1798, %v1799
  %1802 = vrot.lane.b32.xlu0 %v1800, 96
  %v1803 = vpop.permute.xlu0 %1802
  %v1804 = vsel %vm26, %v1803, 0
  %1806 = vmatprep.subr.mxu0 0.0
  %1807 = vmatpush1.msra.mxu0 0.0
  %1808 = vmatprep.subr.mxu0 0.0
  %1809 = vmatpush1.msra.mxu0 0.0
  %1810 = vmatprep.subr.mxu0 0.0
  %1811 = vmatpush1.msra.mxu0 0.0
  %1812 = vmatprep.subr.mxu0 0.0
  %1813 = vmatpush1.msra.mxu0 0.0
  %1814 = vmatprep.subr.mxu0 0.0
  %1815 = vmatpush1.msra.mxu0 0.0
  %1816 = vmatprep.subr.mxu0 0.0
  %1817 = vmatpush1.msra.mxu0 0.0
  %1818 = vmatprep.subr.mxu0 0.0
  %1819 = vmatpush1.msra.mxu0 0.0
  %1820 = vmatprep.subr.mxu0 0.0
  %1821 = vmatpush1.msra.mxu0 0.0
  %1822 = vmatprep.subr.mxu0 0.0
  %1823 = vmatpush1.msra.mxu0 0.0
  %1824 = vmatprep.subr.mxu0 0.0
  %1825 = vmatpush1.msra.mxu0 0.0
  %1826 = vmatprep.subr.mxu0 0.0
  %1827 = vmatpush1.msra.mxu0 0.0
  %1828 = vmatprep.subr.mxu0 0.0
  %1829 = vmatpush1.msra.mxu0 0.0
  %1830 = vmatprep.subr.mxu0 0.0
  %1831 = vmatpush1.msra.mxu0 %v58
  %1832 = vmatprep.subr.mxu0 0.0
  %1833 = vmatpush1.msra.mxu0 %v57
  %1834 = vmatprep.subr.mxu0 0.0
  %1835 = vmatpush1.msra.mxu0 %v56
  %1836 = vmatprep.subr.mxu0 0.0
  %1837 = vmatpush1.msra.mxu0 %v55
  %1838 = vmatprep.subr.mxu0 0.0
  %1839 = vmatpush2.msra.mxu0 0.0
  %1840 = vmatprep.subr.mxu0 0.0
  %1841 = vmatpush2.msra.mxu0 0.0
  %1842 = vmatprep.subr.mxu0 0.0
  %1843 = vmatpush2.msra.mxu0 0.0
  %1844 = vmatprep.subr.mxu0 0.0
  %1845 = vmatpush2.msra.mxu0 0.0
  %1846 = vmatprep.subr.mxu0 0.0
  %1847 = vmatpush2.msra.mxu0 0.0
  %1848 = vmatprep.subr.mxu0 0.0
  %1849 = vmatpush2.msra.mxu0 0.0
  %1850 = vmatprep.subr.mxu0 0.0
  %1851 = vmatpush2.msra.mxu0 0.0
  %1852 = vmatprep.subr.mxu0 0.0
  %1853 = vmatpush2.msra.mxu0 0.0
  %1854 = vmatprep.subr.mxu0 0.0
  %1855 = vmatpush2.msra.mxu0 0.0
  %1856 = vmatprep.subr.mxu0 0.0
  %1857 = vmatpush2.msra.mxu0 0.0
  %1858 = vmatprep.subr.mxu0 0.0
  %1859 = vmatpush2.msra.mxu0 0.0
  %1860 = vmatprep.subr.mxu0 0.0
  %1861 = vmatpush2.msra.mxu0 0.0
  %1862 = vmatprep.subr.mxu0 0.0
  %1863 = vmatpush2.msra.mxu0 0.0
  %1864 = vmatprep.subr.mxu0 0.0
  %1865 = vmatpush2.msra.mxu0 0.0
  %1866 = vmatprep.subr.mxu0 0.0
  %1867 = vmatpush2.msra.mxu0 0.0
  %1868 = vmatprep.subr.mxu0 0.0
  %1869 = vmatpush2.msra.mxu0 0.0
  %1870 = vmatprep.mubr.f32.mxu0 0.0
  %1871 = vmatmul.mubr.f32.gmra.mxu0 %v1804
  %v1872 = vpop.f32.mrf.mxu0
  %v1873 = vadd.f32 %v69, %v1872
  %v1874 = vpop.f32.mrf.mxu0
  %1875 = vdwg.mxu0
  %v1876 = vsel %vm26, %v1700, 0
  %1878 = vmatprep.subr.mxu0 0.0
  %1879 = vmatpush1.msra.mxu0 0.0
  %1880 = vmatprep.subr.mxu0 0.0
  %1881 = vmatpush1.msra.mxu0 0.0
  %1882 = vmatprep.subr.mxu0 0.0
  %1883 = vmatpush1.msra.mxu0 0.0
  %1884 = vmatprep.subr.mxu0 0.0
  %1885 = vmatpush1.msra.mxu0 0.0
  %1886 = vmatprep.subr.mxu0 0.0
  %1887 = vmatpush1.msra.mxu0 0.0
  %1888 = vmatprep.subr.mxu0 0.0
  %1889 = vmatpush1.msra.mxu0 0.0
  %1890 = vmatprep.subr.mxu0 0.0
  %1891 = vmatpush1.msra.mxu0 0.0
  %1892 = vmatprep.subr.mxu0 0.0
  %1893 = vmatpush1.msra.mxu0 0.0
  %1894 = vmatprep.subr.mxu0 0.0
  %1895 = vmatpush1.msra.mxu0 0.0
  %1896 = vmatprep.subr.mxu0 0.0
  %1897 = vmatpush1.msra.mxu0 0.0
  %1898 = vmatprep.subr.mxu0 0.0
  %1899 = vmatpush1.msra.mxu0 0.0
  %1900 = vmatprep.subr.mxu0 0.0
  %1901 = vmatpush1.msra.mxu0 0.0
  %1902 = vmatprep.subr.mxu0 0.0
  %1903 = vmatpush1.msra.mxu0 %v62
  %1904 = vmatprep.subr.mxu0 0.0
  %1905 = vmatpush1.msra.mxu0 %v61
  %1906 = vmatprep.subr.mxu0 0.0
  %1907 = vmatpush1.msra.mxu0 %v60
  %1908 = vmatprep.subr.mxu0 0.0
  %1909 = vmatpush1.msra.mxu0 %v59
  %1910 = vmatprep.subr.mxu0 0.0
  %1911 = vmatpush2.msra.mxu0 0.0
  %1912 = vmatprep.subr.mxu0 0.0
  %1913 = vmatpush2.msra.mxu0 0.0
  %1914 = vmatprep.subr.mxu0 0.0
  %1915 = vmatpush2.msra.mxu0 0.0
  %1916 = vmatprep.subr.mxu0 0.0
  %1917 = vmatpush2.msra.mxu0 0.0
  %1918 = vmatprep.subr.mxu0 0.0
  %1919 = vmatpush2.msra.mxu0 0.0
  %1920 = vmatprep.subr.mxu0 0.0
  %1921 = vmatpush2.msra.mxu0 0.0
  %1922 = vmatprep.subr.mxu0 0.0
  %1923 = vmatpush2.msra.mxu0 0.0
  %1924 = vmatprep.subr.mxu0 0.0
  %1925 = vmatpush2.msra.mxu0 0.0
  %1926 = vmatprep.subr.mxu0 0.0
  %1927 = vmatpush2.msra.mxu0 0.0
  %1928 = vmatprep.subr.mxu0 0.0
  %1929 = vmatpush2.msra.mxu0 0.0
  %1930 = vmatprep.subr.mxu0 0.0
  %1931 = vmatpush2.msra.mxu0 0.0
  %1932 = vmatprep.subr.mxu0 0.0
  %1933 = vmatpush2.msra.mxu0 0.0
  %1934 = vmatprep.subr.mxu0 0.0
  %1935 = vmatpush2.msra.mxu0 0.0
  %1936 = vmatprep.subr.mxu0 0.0
  %1937 = vmatpush2.msra.mxu0 0.0
  %1938 = vmatprep.subr.mxu0 0.0
  %1939 = vmatpush2.msra.mxu0 0.0
  %1940 = vmatprep.subr.mxu0 0.0
  %1941 = vmatpush2.msra.mxu0 0.0
  %1942 = vmatprep.mubr.f32.mxu0 0.0
  %1943 = vmatmul.mubr.f32.gmra.mxu0 %v1876
  %v1944 = vpop.f32.mrf.mxu0
  %v1945 = vadd.f32 0.0, %v1944
  %v1946 = vpop.f32.mrf.mxu0
  %1947 = vdwg.mxu0
  %v1948 = vadd.f32 %v1873, %v1945
  %v1949 = vxor.u32 %v1948, 2147483648
  %v1950 = vmul.f32 %v1949, 1.442695
  %v1951 = vpow.pop %v1950
  %v1952 = vadd.f32 %v1951, 1.0
  %v1953 = vrcp.pop %v1952
  %v1954 = vmul.f32 1.0, %v1953
  %v1955 = vadd.f32 %v1945, %v565
  %1957 = vrot.lane.b32.xlu0 %v1955, 64
  %v1958 = vpop.permute.xlu0 %1957
  %v1960 = vmul.f32 %v1954, %v1958
  %1962 = vrot.lane.b32.xlu0 %v1960, 64
  %v1963 = vpop.permute.xlu0 %1962
  %v1965 = vadd.f32 %v1873, %v1963
  %v1966 = vtanh.pop %v1965
  %v1967 = vsub.f32 1.0, %v1954
  %1969 = vrot.lane.b32.xlu0 %v1966, 96
  %v1970 = vpop.permute.xlu0 %1969
  %v1972 = vmul.f32 %v1967, %v1970
  %v1973 = vmul.f32 %v1954, %v1697
  %v1974 = vadd.f32 %v1972, %v1973
  %1976 = vrot.lane.b32.xlu0 %v1974, 96
  %v1977 = vpop.permute.xlu0 %1976
  %1979 = vst.msk [vmem:[#allocation3 + $0x28] sm:$0xff] %vm26, %v1977
  %v1980 = vld [vmem:[#allocation2 + $0x30] sm:$0xff]
  %1981 = vmatprep.subr.mxu0 0.0
  %1982 = vmatpush1.msra.mxu0 0.0
  %1983 = vmatprep.subr.mxu0 0.0
  %1984 = vmatpush1.msra.mxu0 0.0
  %1985 = vmatprep.subr.mxu0 0.0
  %1986 = vmatpush1.msra.mxu0 0.0
  %1987 = vmatprep.subr.mxu0 0.0
  %1988 = vmatpush1.msra.mxu0 0.0
  %1989 = vmatprep.subr.mxu0 0.0
  %1990 = vmatpush1.msra.mxu0 0.0
  %1991 = vmatprep.subr.mxu0 0.0
  %1992 = vmatpush1.msra.mxu0 0.0
  %1993 = vmatprep.subr.mxu0 0.0
  %1994 = vmatpush1.msra.mxu0 0.0
  %1995 = vmatprep.subr.mxu0 0.0
  %1996 = vmatpush1.msra.mxu0 0.0
  %1997 = vmatprep.subr.mxu0 0.0
  %1998 = vmatpush1.msra.mxu0 0.0
  %1999 = vmatprep.subr.mxu0 0.0
  %2000 = vmatpush1.msra.mxu0 0.0
  %2001 = vmatprep.subr.mxu0 0.0
  %2002 = vmatpush1.msra.mxu0 0.0
  %2003 = vmatprep.subr.mxu0 0.0
  %2004 = vmatpush1.msra.mxu0 0.0
  %2005 = vmatprep.subr.mxu0 0.0
  %2006 = vmatpush1.msra.mxu0 %v47
  %2007 = vmatprep.subr.mxu0 0.0
  %2008 = vmatpush1.msra.mxu0 %v46
  %2009 = vmatprep.subr.mxu0 0.0
  %2010 = vmatpush1.msra.mxu0 %v45
  %2011 = vmatprep.subr.mxu0 0.0
  %2012 = vmatpush1.msra.mxu0 %v44
  %2013 = vmatprep.subr.mxu0 0.0
  %2014 = vmatpush2.msra.mxu0 0.0
  %2015 = vmatprep.subr.mxu0 0.0
  %2016 = vmatpush2.msra.mxu0 0.0
  %2017 = vmatprep.subr.mxu0 0.0
  %2018 = vmatpush2.msra.mxu0 0.0
  %2019 = vmatprep.subr.mxu0 0.0
  %2020 = vmatpush2.msra.mxu0 0.0
  %2021 = vmatprep.subr.mxu0 0.0
  %2022 = vmatpush2.msra.mxu0 0.0
  %2023 = vmatprep.subr.mxu0 0.0
  %2024 = vmatpush2.msra.mxu0 0.0
  %2025 = vmatprep.subr.mxu0 0.0
  %2026 = vmatpush2.msra.mxu0 0.0
  %2027 = vmatprep.subr.mxu0 0.0
  %2028 = vmatpush2.msra.mxu0 0.0
  %2029 = vmatprep.subr.mxu0 0.0
  %2030 = vmatpush2.msra.mxu0 0.0
  %2031 = vmatprep.subr.mxu0 0.0
  %2032 = vmatpush2.msra.mxu0 0.0
  %2033 = vmatprep.subr.mxu0 0.0
  %2034 = vmatpush2.msra.mxu0 0.0
  %2035 = vmatprep.subr.mxu0 0.0
  %2036 = vmatpush2.msra.mxu0 0.0
  %2037 = vmatprep.subr.mxu0 0.0
  %2038 = vmatpush2.msra.mxu0 0.0
  %2039 = vmatprep.subr.mxu0 0.0
  %2040 = vmatpush2.msra.mxu0 0.0
  %2041 = vmatprep.subr.mxu0 0.0
  %2042 = vmatpush2.msra.mxu0 0.0
  %2043 = vmatprep.subr.mxu0 0.0
  %2044 = vmatpush2.msra.mxu0 0.0
  %2045 = vmatprep.mubr.f32.mxu0 0.0
  %2046 = vmatmul.mubr.f32.gmra.mxu0 %v1804
  %v2047 = vpop.f32.mrf.mxu0
  %v2048 = vadd.f32 0.0, %v2047
  %v2049 = vpop.f32.mrf.mxu0
  %2050 = vdwg.mxu0
  %v2051 = vadd.f32 %v1980, %v2048
  %v2052 = vxor.u32 %v2051, 2147483648
  %v2053 = vmul.f32 %v2052, 1.442695
  %v2054 = vpow.pop %v2053
  %v2055 = vadd.f32 %v2054, 1.0
  %v2056 = vrcp.pop %v2055
  %v2057 = vmul.f32 1.0, %v2056
  %v2058 = vadd.f32 %v2048, %v384
  %2060 = vrot.lane.b32.xlu0 %v2058, 64
  %v2061 = vpop.permute.xlu0 %2060
  %v2063 = vmul.f32 %v2057, %v2061
  %2065 = vrot.lane.b32.xlu0 %v2063, 64
  %v2066 = vpop.permute.xlu0 %2065
  %v2068 = vadd.f32 %v1980, %v2066
  %v2069 = vtanh.pop %v2068
  %v2070 = vsub.f32 1.0, %v2057
  %2072 = vrot.lane.b32.xlu0 %v2069, 96
  %v2073 = vpop.permute.xlu0 %2072
  %v2075 = vmul.f32 %v2070, %v2073
  %v2076 = vmul.f32 %v2057, %v1800
  %v2077 = vadd.f32 %v2075, %v2076
  %2079 = vrot.lane.b32.xlu0 %v2077, 96
  %v2080 = vpop.permute.xlu0 %2079
  %v2081 = vsel %vm26, %v2080, 0
  %2083 = vmatprep.subr.mxu0 0.0
  %2084 = vmatpush1.msra.mxu0 0.0
  %2085 = vmatprep.subr.mxu0 0.0
  %2086 = vmatpush1.msra.mxu0 0.0
  %2087 = vmatprep.subr.mxu0 0.0
  %2088 = vmatpush1.msra.mxu0 0.0
  %2089 = vmatprep.subr.mxu0 0.0
  %2090 = vmatpush1.msra.mxu0 0.0
  %2091 = vmatprep.subr.mxu0 0.0
  %2092 = vmatpush1.msra.mxu0 0.0
  %2093 = vmatprep.subr.mxu0 0.0
  %2094 = vmatpush1.msra.mxu0 0.0
  %2095 = vmatprep.subr.mxu0 0.0
  %2096 = vmatpush1.msra.mxu0 0.0
  %2097 = vmatprep.subr.mxu0 0.0
  %2098 = vmatpush1.msra.mxu0 0.0
  %2099 = vmatprep.subr.mxu0 0.0
  %2100 = vmatpush1.msra.mxu0 0.0
  %2101 = vmatprep.subr.mxu0 0.0
  %2102 = vmatpush1.msra.mxu0 0.0
  %2103 = vmatprep.subr.mxu0 0.0
  %2104 = vmatpush1.msra.mxu0 0.0
  %2105 = vmatprep.subr.mxu0 0.0
  %2106 = vmatpush1.msra.mxu0 0.0
  %2107 = vmatprep.subr.mxu0 0.0
  %2108 = vmatpush1.msra.mxu0 %v58
  %2109 = vmatprep.subr.mxu0 0.0
  %2110 = vmatpush1.msra.mxu0 %v57
  %2111 = vmatprep.subr.mxu0 0.0
  %2112 = vmatpush1.msra.mxu0 %v56
  %2113 = vmatprep.subr.mxu0 0.0
  %2114 = vmatpush1.msra.mxu0 %v55
  %2115 = vmatprep.subr.mxu0 0.0
  %2116 = vmatpush2.msra.mxu0 0.0
  %2117 = vmatprep.subr.mxu0 0.0
  %2118 = vmatpush2.msra.mxu0 0.0
  %2119 = vmatprep.subr.mxu0 0.0
  %2120 = vmatpush2.msra.mxu0 0.0
  %2121 = vmatprep.subr.mxu0 0.0
  %2122 = vmatpush2.msra.mxu0 0.0
  %2123 = vmatprep.subr.mxu0 0.0
  %2124 = vmatpush2.msra.mxu0 0.0
  %2125 = vmatprep.subr.mxu0 0.0
  %2126 = vmatpush2.msra.mxu0 0.0
  %2127 = vmatprep.subr.mxu0 0.0
  %2128 = vmatpush2.msra.mxu0 0.0
  %2129 = vmatprep.subr.mxu0 0.0
  %2130 = vmatpush2.msra.mxu0 0.0
  %2131 = vmatprep.subr.mxu0 0.0
  %2132 = vmatpush2.msra.mxu0 0.0
  %2133 = vmatprep.subr.mxu0 0.0
  %2134 = vmatpush2.msra.mxu0 0.0
  %2135 = vmatprep.subr.mxu0 0.0
  %2136 = vmatpush2.msra.mxu0 0.0
  %2137 = vmatprep.subr.mxu0 0.0
  %2138 = vmatpush2.msra.mxu0 0.0
  %2139 = vmatprep.subr.mxu0 0.0
  %2140 = vmatpush2.msra.mxu0 0.0
  %2141 = vmatprep.subr.mxu0 0.0
  %2142 = vmatpush2.msra.mxu0 0.0
  %2143 = vmatprep.subr.mxu0 0.0
  %2144 = vmatpush2.msra.mxu0 0.0
  %2145 = vmatprep.subr.mxu0 0.0
  %2146 = vmatpush2.msra.mxu0 0.0
  %2147 = vmatprep.mubr.f32.mxu0 0.0
  %2148 = vmatmul.mubr.f32.gmra.mxu0 %v2081
  %v2149 = vpop.f32.mrf.mxu0
  %v2150 = vadd.f32 %v69, %v2149
  %v2151 = vpop.f32.mrf.mxu0
  %2152 = vdwg.mxu0
  %v2153 = vsel %vm26, %v1977, 0
  %2155 = vmatprep.subr.mxu0 0.0
  %2156 = vmatpush1.msra.mxu0 0.0
  %2157 = vmatprep.subr.mxu0 0.0
  %2158 = vmatpush1.msra.mxu0 0.0
  %2159 = vmatprep.subr.mxu0 0.0
  %2160 = vmatpush1.msra.mxu0 0.0
  %2161 = vmatprep.subr.mxu0 0.0
  %2162 = vmatpush1.msra.mxu0 0.0
  %2163 = vmatprep.subr.mxu0 0.0
  %2164 = vmatpush1.msra.mxu0 0.0
  %2165 = vmatprep.subr.mxu0 0.0
  %2166 = vmatpush1.msra.mxu0 0.0
  %2167 = vmatprep.subr.mxu0 0.0
  %2168 = vmatpush1.msra.mxu0 0.0
  %2169 = vmatprep.subr.mxu0 0.0
  %2170 = vmatpush1.msra.mxu0 0.0
  %2171 = vmatprep.subr.mxu0 0.0
  %2172 = vmatpush1.msra.mxu0 0.0
  %2173 = vmatprep.subr.mxu0 0.0
  %2174 = vmatpush1.msra.mxu0 0.0
  %2175 = vmatprep.subr.mxu0 0.0
  %2176 = vmatpush1.msra.mxu0 0.0
  %2177 = vmatprep.subr.mxu0 0.0
  %2178 = vmatpush1.msra.mxu0 0.0
  %2179 = vmatprep.subr.mxu0 0.0
  %2180 = vmatpush1.msra.mxu0 %v62
  %2181 = vmatprep.subr.mxu0 0.0
  %2182 = vmatpush1.msra.mxu0 %v61
  %2183 = vmatprep.subr.mxu0 0.0
  %2184 = vmatpush1.msra.mxu0 %v60
  %2185 = vmatprep.subr.mxu0 0.0
  %2186 = vmatpush1.msra.mxu0 %v59
  %2187 = vmatprep.subr.mxu0 0.0
  %2188 = vmatpush2.msra.mxu0 0.0
  %2189 = vmatprep.subr.mxu0 0.0
  %2190 = vmatpush2.msra.mxu0 0.0
  %2191 = vmatprep.subr.mxu0 0.0
  %2192 = vmatpush2.msra.mxu0 0.0
  %2193 = vmatprep.subr.mxu0 0.0
  %2194 = vmatpush2.msra.mxu0 0.0
  %2195 = vmatprep.subr.mxu0 0.0
  %2196 = vmatpush2.msra.mxu0 0.0
  %2197 = vmatprep.subr.mxu0 0.0
  %2198 = vmatpush2.msra.mxu0 0.0
  %2199 = vmatprep.subr.mxu0 0.0
  %2200 = vmatpush2.msra.mxu0 0.0
  %2201 = vmatprep.subr.mxu0 0.0
  %2202 = vmatpush2.msra.mxu0 0.0
  %2203 = vmatprep.subr.mxu0 0.0
  %2204 = vmatpush2.msra.mxu0 0.0
  %2205 = vmatprep.subr.mxu0 0.0
  %2206 = vmatpush2.msra.mxu0 0.0
  %2207 = vmatprep.subr.mxu0 0.0
  %2208 = vmatpush2.msra.mxu0 0.0
  %2209 = vmatprep.subr.mxu0 0.0
  %2210 = vmatpush2.msra.mxu0 0.0
  %2211 = vmatprep.subr.mxu0 0.0
  %2212 = vmatpush2.msra.mxu0 0.0
  %2213 = vmatprep.subr.mxu0 0.0
  %2214 = vmatpush2.msra.mxu0 0.0
  %2215 = vmatprep.subr.mxu0 0.0
  %2216 = vmatpush2.msra.mxu0 0.0
  %2217 = vmatprep.subr.mxu0 0.0
  %2218 = vmatpush2.msra.mxu0 0.0
  %2219 = vmatprep.mubr.f32.mxu0 0.0
  %2220 = vmatmul.mubr.f32.gmra.mxu0 %v2153
  %v2221 = vpop.f32.mrf.mxu0
  %v2222 = vadd.f32 0.0, %v2221
  %v2223 = vpop.f32.mrf.mxu0
  %2224 = vdwg.mxu0
  %v2225 = vadd.f32 %v2150, %v2222
  %v2226 = vxor.u32 %v2225, 2147483648
  %v2227 = vmul.f32 %v2226, 1.442695
  %v2228 = vpow.pop %v2227
  %v2229 = vadd.f32 %v2228, 1.0
  %v2230 = vrcp.pop %v2229
  %v2231 = vmul.f32 1.0, %v2230
  %v2232 = vadd.f32 %v2222, %v565
  %2234 = vrot.lane.b32.xlu0 %v2232, 64
  %v2235 = vpop.permute.xlu0 %2234
  %v2237 = vmul.f32 %v2231, %v2235
  %2239 = vrot.lane.b32.xlu0 %v2237, 64
  %v2240 = vpop.permute.xlu0 %2239
  %v2242 = vadd.f32 %v2150, %v2240
  %v2243 = vtanh.pop %v2242
  %v2244 = vsub.f32 1.0, %v2231
  %2246 = vrot.lane.b32.xlu0 %v2243, 96
  %v2247 = vpop.permute.xlu0 %2246
  %v2249 = vmul.f32 %v2244, %v2247
  %v2250 = vmul.f32 %v2231, %v1974
  %v2251 = vadd.f32 %v2249, %v2250
  %2253 = vrot.lane.b32.xlu0 %v2251, 96
  %v2254 = vpop.permute.xlu0 %2253
  %2256 = vst.msk [vmem:[#allocation3 + $0x30] sm:$0xff] %vm26, %v2254
  %v2257 = vld [vmem:[#allocation2 + $0x38] sm:$0xff]
  %2258 = vmatprep.subr.mxu0 0.0
  %2259 = vmatpush1.msra.mxu0 0.0
  %2260 = vmatprep.subr.mxu0 0.0
  %2261 = vmatpush1.msra.mxu0 0.0
  %2262 = vmatprep.subr.mxu0 0.0
  %2263 = vmatpush1.msra.mxu0 0.0
  %2264 = vmatprep.subr.mxu0 0.0
  %2265 = vmatpush1.msra.mxu0 0.0
  %2266 = vmatprep.subr.mxu0 0.0
  %2267 = vmatpush1.msra.mxu0 0.0
  %2268 = vmatprep.subr.mxu0 0.0
  %2269 = vmatpush1.msra.mxu0 0.0
  %2270 = vmatprep.subr.mxu0 0.0
  %2271 = vmatpush1.msra.mxu0 0.0
  %2272 = vmatprep.subr.mxu0 0.0
  %2273 = vmatpush1.msra.mxu0 0.0
  %2274 = vmatprep.subr.mxu0 0.0
  %2275 = vmatpush1.msra.mxu0 0.0
  %2276 = vmatprep.subr.mxu0 0.0
  %2277 = vmatpush1.msra.mxu0 0.0
  %2278 = vmatprep.subr.mxu0 0.0
  %2279 = vmatpush1.msra.mxu0 0.0
  %2280 = vmatprep.subr.mxu0 0.0
  %2281 = vmatpush1.msra.mxu0 0.0
  %2282 = vmatprep.subr.mxu0 0.0
  %2283 = vmatpush1.msra.mxu0 %v47
  %2284 = vmatprep.subr.mxu0 0.0
  %2285 = vmatpush1.msra.mxu0 %v46
  %2286 = vmatprep.subr.mxu0 0.0
  %2287 = vmatpush1.msra.mxu0 %v45
  %2288 = vmatprep.subr.mxu0 0.0
  %2289 = vmatpush1.msra.mxu0 %v44
  %2290 = vmatprep.subr.mxu0 0.0
  %2291 = vmatpush2.msra.mxu0 0.0
  %2292 = vmatprep.subr.mxu0 0.0
  %2293 = vmatpush2.msra.mxu0 0.0
  %2294 = vmatprep.subr.mxu0 0.0
  %2295 = vmatpush2.msra.mxu0 0.0
  %2296 = vmatprep.subr.mxu0 0.0
  %2297 = vmatpush2.msra.mxu0 0.0
  %2298 = vmatprep.subr.mxu0 0.0
  %2299 = vmatpush2.msra.mxu0 0.0
  %2300 = vmatprep.subr.mxu0 0.0
  %2301 = vmatpush2.msra.mxu0 0.0
  %2302 = vmatprep.subr.mxu0 0.0
  %2303 = vmatpush2.msra.mxu0 0.0
  %2304 = vmatprep.subr.mxu0 0.0
  %2305 = vmatpush2.msra.mxu0 0.0
  %2306 = vmatprep.subr.mxu0 0.0
  %2307 = vmatpush2.msra.mxu0 0.0
  %2308 = vmatprep.subr.mxu0 0.0
  %2309 = vmatpush2.msra.mxu0 0.0
  %2310 = vmatprep.subr.mxu0 0.0
  %2311 = vmatpush2.msra.mxu0 0.0
  %2312 = vmatprep.subr.mxu0 0.0
  %2313 = vmatpush2.msra.mxu0 0.0
  %2314 = vmatprep.subr.mxu0 0.0
  %2315 = vmatpush2.msra.mxu0 0.0
  %2316 = vmatprep.subr.mxu0 0.0
  %2317 = vmatpush2.msra.mxu0 0.0
  %2318 = vmatprep.subr.mxu0 0.0
  %2319 = vmatpush2.msra.mxu0 0.0
  %2320 = vmatprep.subr.mxu0 0.0
  %2321 = vmatpush2.msra.mxu0 0.0
  %2322 = vmatprep.mubr.f32.mxu0 0.0
  %2323 = vmatmul.mubr.f32.gmra.mxu0 %v2081
  %v2324 = vpop.f32.mrf.mxu0
  %v2325 = vadd.f32 0.0, %v2324
  %v2326 = vpop.f32.mrf.mxu0
  %2327 = vdwg.mxu0
  %v2328 = vadd.f32 %v2257, %v2325
  %v2329 = vxor.u32 %v2328, 2147483648
  %v2330 = vmul.f32 %v2329, 1.442695
  %v2331 = vpow.pop %v2330
  %v2332 = vadd.f32 %v2331, 1.0
  %v2333 = vrcp.pop %v2332
  %v2334 = vmul.f32 1.0, %v2333
  %v2335 = vadd.f32 %v2325, %v384
  %2337 = vrot.lane.b32.xlu0 %v2335, 64
  %v2338 = vpop.permute.xlu0 %2337
  %v2340 = vmul.f32 %v2334, %v2338
  %2342 = vrot.lane.b32.xlu0 %v2340, 64
  %v2343 = vpop.permute.xlu0 %2342
  %v2345 = vadd.f32 %v2257, %v2343
  %v2346 = vtanh.pop %v2345
  %v2347 = vsub.f32 1.0, %v2334
  %2349 = vrot.lane.b32.xlu0 %v2346, 96
  %v2350 = vpop.permute.xlu0 %2349
  %v2352 = vmul.f32 %v2347, %v2350
  %v2353 = vmul.f32 %v2334, %v2077
  %v2354 = vadd.f32 %v2352, %v2353
  %2356 = vrot.lane.b32.xlu0 %v2354, 96
  %v2357 = vpop.permute.xlu0 %2356
  %v2358 = vsel %vm26, %v2357, 0
  %2360 = vmatprep.subr.mxu0 0.0
  %2361 = vmatpush1.msra.mxu0 0.0
  %2362 = vmatprep.subr.mxu0 0.0
  %2363 = vmatpush1.msra.mxu0 0.0
  %2364 = vmatprep.subr.mxu0 0.0
  %2365 = vmatpush1.msra.mxu0 0.0
  %2366 = vmatprep.subr.mxu0 0.0
  %2367 = vmatpush1.msra.mxu0 0.0
  %2368 = vmatprep.subr.mxu0 0.0
  %2369 = vmatpush1.msra.mxu0 0.0
  %2370 = vmatprep.subr.mxu0 0.0
  %2371 = vmatpush1.msra.mxu0 0.0
  %2372 = vmatprep.subr.mxu0 0.0
  %2373 = vmatpush1.msra.mxu0 0.0
  %2374 = vmatprep.subr.mxu0 0.0
  %2375 = vmatpush1.msra.mxu0 0.0
  %2376 = vmatprep.subr.mxu0 0.0
  %2377 = vmatpush1.msra.mxu0 0.0
  %2378 = vmatprep.subr.mxu0 0.0
  %2379 = vmatpush1.msra.mxu0 0.0
  %2380 = vmatprep.subr.mxu0 0.0
  %2381 = vmatpush1.msra.mxu0 0.0
  %2382 = vmatprep.subr.mxu0 0.0
  %2383 = vmatpush1.msra.mxu0 0.0
  %2384 = vmatprep.subr.mxu0 0.0
  %2385 = vmatpush1.msra.mxu0 %v58
  %2386 = vmatprep.subr.mxu0 0.0
  %2387 = vmatpush1.msra.mxu0 %v57
  %2388 = vmatprep.subr.mxu0 0.0
  %2389 = vmatpush1.msra.mxu0 %v56
  %2390 = vmatprep.subr.mxu0 0.0
  %2391 = vmatpush1.msra.mxu0 %v55
  %2392 = vmatprep.subr.mxu0 0.0
  %2393 = vmatpush2.msra.mxu0 0.0
  %2394 = vmatprep.subr.mxu0 0.0
  %2395 = vmatpush2.msra.mxu0 0.0
  %2396 = vmatprep.subr.mxu0 0.0
  %2397 = vmatpush2.msra.mxu0 0.0
  %2398 = vmatprep.subr.mxu0 0.0
  %2399 = vmatpush2.msra.mxu0 0.0
  %2400 = vmatprep.subr.mxu0 0.0
  %2401 = vmatpush2.msra.mxu0 0.0
  %2402 = vmatprep.subr.mxu0 0.0
  %2403 = vmatpush2.msra.mxu0 0.0
  %2404 = vmatprep.subr.mxu0 0.0
  %2405 = vmatpush2.msra.mxu0 0.0
  %2406 = vmatprep.subr.mxu0 0.0
  %2407 = vmatpush2.msra.mxu0 0.0
  %2408 = vmatprep.subr.mxu0 0.0
  %2409 = vmatpush2.msra.mxu0 0.0
  %2410 = vmatprep.subr.mxu0 0.0
  %2411 = vmatpush2.msra.mxu0 0.0
  %2412 = vmatprep.subr.mxu0 0.0
  %2413 = vmatpush2.msra.mxu0 0.0
  %2414 = vmatprep.subr.mxu0 0.0
  %2415 = vmatpush2.msra.mxu0 0.0
  %2416 = vmatprep.subr.mxu0 0.0
  %2417 = vmatpush2.msra.mxu0 0.0
  %2418 = vmatprep.subr.mxu0 0.0
  %2419 = vmatpush2.msra.mxu0 0.0
  %2420 = vmatprep.subr.mxu0 0.0
  %2421 = vmatpush2.msra.mxu0 0.0
  %2422 = vmatprep.subr.mxu0 0.0
  %2423 = vmatpush2.msra.mxu0 0.0
  %2424 = vmatprep.mubr.f32.mxu0 0.0
  %2425 = vmatmul.mubr.f32.gmra.mxu0 %v2358
  %v2426 = vpop.f32.mrf.mxu0
  %v2427 = vadd.f32 %v69, %v2426
  %v2428 = vpop.f32.mrf.mxu0
  %2429 = vdwg.mxu0
  %v2430 = vsel %vm26, %v2254, 0
  %2432 = vmatprep.subr.mxu0 0.0
  %2433 = vmatpush1.msra.mxu0 0.0
  %2434 = vmatprep.subr.mxu0 0.0
  %2435 = vmatpush1.msra.mxu0 0.0
  %2436 = vmatprep.subr.mxu0 0.0
  %2437 = vmatpush1.msra.mxu0 0.0
  %2438 = vmatprep.subr.mxu0 0.0
  %2439 = vmatpush1.msra.mxu0 0.0
  %2440 = vmatprep.subr.mxu0 0.0
  %2441 = vmatpush1.msra.mxu0 0.0
  %2442 = vmatprep.subr.mxu0 0.0
  %2443 = vmatpush1.msra.mxu0 0.0
  %2444 = vmatprep.subr.mxu0 0.0
  %2445 = vmatpush1.msra.mxu0 0.0
  %2446 = vmatprep.subr.mxu0 0.0
  %2447 = vmatpush1.msra.mxu0 0.0
  %2448 = vmatprep.subr.mxu0 0.0
  %2449 = vmatpush1.msra.mxu0 0.0
  %2450 = vmatprep.subr.mxu0 0.0
  %2451 = vmatpush1.msra.mxu0 0.0
  %2452 = vmatprep.subr.mxu0 0.0
  %2453 = vmatpush1.msra.mxu0 0.0
  %2454 = vmatprep.subr.mxu0 0.0
  %2455 = vmatpush1.msra.mxu0 0.0
  %2456 = vmatprep.subr.mxu0 0.0
  %2457 = vmatpush1.msra.mxu0 %v62
  %2458 = vmatprep.subr.mxu0 0.0
  %2459 = vmatpush1.msra.mxu0 %v61
  %2460 = vmatprep.subr.mxu0 0.0
  %2461 = vmatpush1.msra.mxu0 %v60
  %2462 = vmatprep.subr.mxu0 0.0
  %2463 = vmatpush1.msra.mxu0 %v59
  %2464 = vmatprep.subr.mxu0 0.0
  %2465 = vmatpush2.msra.mxu0 0.0
  %2466 = vmatprep.subr.mxu0 0.0
  %2467 = vmatpush2.msra.mxu0 0.0
  %2468 = vmatprep.subr.mxu0 0.0
  %2469 = vmatpush2.msra.mxu0 0.0
  %2470 = vmatprep.subr.mxu0 0.0
  %2471 = vmatpush2.msra.mxu0 0.0
  %2472 = vmatprep.subr.mxu0 0.0
  %2473 = vmatpush2.msra.mxu0 0.0
  %2474 = vmatprep.subr.mxu0 0.0
  %2475 = vmatpush2.msra.mxu0 0.0
  %2476 = vmatprep.subr.mxu0 0.0
  %2477 = vmatpush2.msra.mxu0 0.0
  %2478 = vmatprep.subr.mxu0 0.0
  %2479 = vmatpush2.msra.mxu0 0.0
  %2480 = vmatprep.subr.mxu0 0.0
  %2481 = vmatpush2.msra.mxu0 0.0
  %2482 = vmatprep.subr.mxu0 0.0
  %2483 = vmatpush2.msra.mxu0 0.0
  %2484 = vmatprep.subr.mxu0 0.0
  %2485 = vmatpush2.msra.mxu0 0.0
  %2486 = vmatprep.subr.mxu0 0.0
  %2487 = vmatpush2.msra.mxu0 0.0
  %2488 = vmatprep.subr.mxu0 0.0
  %2489 = vmatpush2.msra.mxu0 0.0
  %2490 = vmatprep.subr.mxu0 0.0
  %2491 = vmatpush2.msra.mxu0 0.0
  %2492 = vmatprep.subr.mxu0 0.0
  %2493 = vmatpush2.msra.mxu0 0.0
  %2494 = vmatprep.subr.mxu0 0.0
  %2495 = vmatpush2.msra.mxu0 0.0
  %2496 = vmatprep.mubr.f32.mxu0 0.0
  %2497 = vmatmul.mubr.f32.gmra.mxu0 %v2430
  %v2498 = vpop.f32.mrf.mxu0
  %v2499 = vadd.f32 0.0, %v2498
  %v2500 = vpop.f32.mrf.mxu0
  %2501 = vdwg.mxu0
  %v2502 = vadd.f32 %v2427, %v2499
  %v2503 = vxor.u32 %v2502, 2147483648
  %v2504 = vmul.f32 %v2503, 1.442695
  %v2505 = vpow.pop %v2504
  %v2506 = vadd.f32 %v2505, 1.0
  %v2507 = vrcp.pop %v2506
  %v2508 = vmul.f32 1.0, %v2507
  %v2509 = vadd.f32 %v2499, %v565
  %2511 = vrot.lane.b32.xlu0 %v2509, 64
  %v2512 = vpop.permute.xlu0 %2511
  %v2514 = vmul.f32 %v2508, %v2512
  %2516 = vrot.lane.b32.xlu0 %v2514, 64
  %v2517 = vpop.permute.xlu0 %2516
  %v2519 = vadd.f32 %v2427, %v2517
  %v2520 = vtanh.pop %v2519
  %v2521 = vsub.f32 1.0, %v2508
  %2523 = vrot.lane.b32.xlu0 %v2520, 96
  %v2524 = vpop.permute.xlu0 %2523
  %v2526 = vmul.f32 %v2521, %v2524
  %v2527 = vmul.f32 %v2508, %v2251
  %v2528 = vadd.f32 %v2526, %v2527
  %2530 = vrot.lane.b32.xlu0 %v2528, 96
  %v2531 = vpop.permute.xlu0 %2530
  %2533 = vst.msk [vmem:[#allocation3 + $0x38] sm:$0xff] %vm26, %v2531
  %v2534 = vld [vmem:[%s5] sm:$0xff]
  %v2535 = vld [vmem:[%s5 + $0x8] sm:$0xff]
  %v2536 = vld [vmem:[%s5 + $0x10] sm:$0xff]
  %v2537 = vld [vmem:[%s5 + $0x18] sm:$0xff]
  %v2538 = vld [vmem:[%s5 + $0x20] sm:$0xff]
  %v2539 = vld [vmem:[%s6] sm:$0x1]
  %v2540 = vld [vmem:[%s6 + $0x1] sm:$0x1]
  %v2541 = vld [vmem:[%s6 + $0x2] sm:$0x1]
  %v2542 = vld [vmem:[#allocation3] sm:$0xff]
  %v2543 = vld [vmem:[#allocation3 + $0x8] sm:$0xff]
  %v2544 = vld [vmem:[#allocation3 + $0x10] sm:$0xff]
  %v2545 = vld [vmem:[#allocation3 + $0x18] sm:$0xff]
  %v2546 = vld [vmem:[#allocation3 + $0x20] sm:$0xff]
  %v2547 = vld [vmem:[#allocation3 + $0x28] sm:$0xff]
  %v2548 = vld [vmem:[#allocation3 + $0x30] sm:$0xff]
  %v2549 = vld [vmem:[#allocation3 + $0x38] sm:$0xff]
  %v2550 = vld [vmem:[#allocation3 + $0x40] sm:$0xff]
  %v2551 = vld [vmem:[#allocation3 + $0x48] sm:$0xff]
  %v2552 = vld [vmem:[#allocation3 + $0x50] sm:$0xff]
  %v2553 = vld [vmem:[#allocation3 + $0x58] sm:$0xff]
  %v2554 = vld [vmem:[#allocation3 + $0x60] sm:$0xff]
  %v2555 = vld [vmem:[#allocation3 + $0x68] sm:$0xff]
  %v2556 = vld [vmem:[#allocation3 + $0x70] sm:$0xff]
  %v2557 = vld [vmem:[#allocation3 + $0x78] sm:$0xff]
  %v2558 = vld [vmem:[%s1] sm:$0xff]
  %v2559 = vld [vmem:[%s1 + $0x8] sm:$0xff]
  %v2560 = vld [vmem:[%s1 + $0x10] sm:$0xff]
  %v2561 = vld [vmem:[%s1 + $0x18] sm:$0xff]
  %v2562 = vld [vmem:[%s1 + $0x20] sm:$0xff]
  %v2563 = vld [vmem:[%s1 + $0x28] sm:$0xff]
  %v2564 = vld [vmem:[%s1 + $0x30] sm:$0xff]
  %v2565 = vld [vmem:[%s1 + $0x38] sm:$0xff]
  %v2566 = vld [vmem:[%s1 + $0x40] sm:$0xff]
  %v2567 = vld [vmem:[%s1 + $0x48] sm:$0xff]
  %v2568 = vld [vmem:[%s1 + $0x50] sm:$0xff]
  %v2569 = vld [vmem:[%s1 + $0x58] sm:$0xff]
  %v2570 = vld [vmem:[%s1 + $0x60] sm:$0xff]
  %v2571 = vld [vmem:[%s1 + $0x68] sm:$0xff]
  %v2572 = vld [vmem:[%s1 + $0x70] sm:$0xff]
  %v2573 = vld [vmem:[%s1 + $0x78] sm:$0xff]
  %v2575 = vsel %vm88, %v2558, 0
  %v2578 = vsel %vm88, %v2559, 0
  %v2581 = vsel %vm88, %v2560, 0
  %v2584 = vsel %vm88, %v2561, 0
  %v2587 = vsel %vm88, %v2562, 0
  %v2590 = vsel %vm88, %v2563, 0
  %v2593 = vsel %vm88, %v2564, 0
  %v2596 = vsel %vm88, %v2565, 0
  %v2599 = vsel %vm88, %v2566, 0
  %v2602 = vsel %vm88, %v2567, 0
  %v2605 = vsel %vm88, %v2568, 0
  %v2608 = vsel %vm88, %v2569, 0
  %v2611 = vsel %vm88, %v2570, 0
  %v2614 = vsel %vm88, %v2571, 0
  %v2617 = vsel %vm88, %v2572, 0
  %v2620 = vsel %vm88, %v2573, 0
  %2622 = vmatprep.subr.mxu0 0.0
  %2623 = vmatpush1.msra.mxu0 0.0
  %2624 = vmatprep.subr.mxu0 0.0
  %2625 = vmatpush1.msra.mxu0 0.0
  %2626 = vmatprep.subr.mxu0 0.0
  %2627 = vmatpush1.msra.mxu0 0.0
  %2628 = vmatprep.subr.mxu0 0.0
  %2629 = vmatpush1.msra.mxu0 0.0
  %2630 = vmatprep.subr.mxu0 0.0
  %2631 = vmatpush1.msra.mxu0 0.0
  %2632 = vmatprep.subr.mxu0 0.0
  %2633 = vmatpush1.msra.mxu0 0.0
  %2634 = vmatprep.subr.mxu0 0.0
  %2635 = vmatpush1.msra.mxu0 0.0
  %2636 = vmatprep.subr.mxu0 0.0
  %2637 = vmatpush1.msra.mxu0 0.0
  %2638 = vmatprep.subr.mxu0 0.0
  %2639 = vmatpush1.msra.mxu0 0.0
  %2640 = vmatprep.subr.mxu0 0.0
  %2641 = vmatpush1.msra.mxu0 0.0
  %2642 = vmatprep.subr.mxu0 0.0
  %2643 = vmatpush1.msra.mxu0 0.0
  %2644 = vmatprep.subr.mxu0 0.0
  %2645 = vmatpush1.msra.mxu0 0.0
  %2646 = vmatprep.subr.mxu0 0.0
  %2647 = vmatpush1.msra.mxu0 0.0
  %2648 = vmatprep.subr.mxu0 0.0
  %2649 = vmatpush1.msra.mxu0 0.0
  %2650 = vmatprep.subr.mxu0 0.0
  %2651 = vmatpush1.msra.mxu0 0.0
  %2652 = vmatprep.subr.mxu0 0.0
  %2653 = vmatpush1.msra.mxu0 %v2538
  %2654 = vmatprep.subr.mxu0 0.0
  %2655 = vmatpush2.msra.mxu0 0.0
  %2656 = vmatprep.subr.mxu0 0.0
  %2657 = vmatpush2.msra.mxu0 0.0
  %2658 = vmatprep.subr.mxu0 0.0
  %2659 = vmatpush2.msra.mxu0 0.0
  %2660 = vmatprep.subr.mxu0 0.0
  %2661 = vmatpush2.msra.mxu0 0.0
  %2662 = vmatprep.subr.mxu0 0.0
  %2663 = vmatpush2.msra.mxu0 0.0
  %2664 = vmatprep.subr.mxu0 0.0
  %2665 = vmatpush2.msra.mxu0 0.0
  %2666 = vmatprep.subr.mxu0 0.0
  %2667 = vmatpush2.msra.mxu0 0.0
  %2668 = vmatprep.subr.mxu0 0.0
  %2669 = vmatpush2.msra.mxu0 0.0
  %2670 = vmatprep.subr.mxu0 0.0
  %2671 = vmatpush2.msra.mxu0 0.0
  %2672 = vmatprep.subr.mxu0 0.0
  %2673 = vmatpush2.msra.mxu0 0.0
  %2674 = vmatprep.subr.mxu0 0.0
  %2675 = vmatpush2.msra.mxu0 0.0
  %2676 = vmatprep.subr.mxu0 0.0
  %2677 = vmatpush2.msra.mxu0 0.0
  %2678 = vmatprep.subr.mxu0 0.0
  %2679 = vmatpush2.msra.mxu0 0.0
  %2680 = vmatprep.subr.mxu0 0.0
  %2681 = vmatpush2.msra.mxu0 0.0
  %2682 = vmatprep.subr.mxu0 0.0
  %2683 = vmatpush2.msra.mxu0 0.0
  %2684 = vmatprep.subr.mxu0 0.0
  %2685 = vmatpush2.msra.mxu0 0.0
  %2686 = vmatprep.mubr.f32.mxu0 0.0
  %2687 = vmatmul.mubr.f32.gmra.mxu0 %v2575
  %v2688 = vpop.f32.mrf.mxu0
  %v2689 = vadd.f32 0.0, %v2688
  %v2690 = vpop.f32.mrf.mxu0
  %2691 = vmatprep.mubr.f32.mxu0 0.0
  %2692 = vmatmul.mubr.f32.gmra.mxu0 %v2578
  %v2693 = vpop.f32.mrf.mxu0
  %v2694 = vadd.f32 0.0, %v2693
  %v2695 = vpop.f32.mrf.mxu0
  %2696 = vmatprep.mubr.f32.mxu0 0.0
  %2697 = vmatmul.mubr.f32.gmra.mxu0 %v2581
  %v2698 = vpop.f32.mrf.mxu0
  %v2699 = vadd.f32 0.0, %v2698
  %v2700 = vpop.f32.mrf.mxu0
  %2701 = vmatprep.mubr.f32.mxu0 0.0
  %2702 = vmatmul.mubr.f32.gmra.mxu0 %v2584
  %v2703 = vpop.f32.mrf.mxu0
  %v2704 = vadd.f32 0.0, %v2703
  %v2705 = vpop.f32.mrf.mxu0
  %2706 = vmatprep.mubr.f32.mxu0 0.0
  %2707 = vmatmul.mubr.f32.gmra.mxu0 %v2587
  %v2708 = vpop.f32.mrf.mxu0
  %v2709 = vadd.f32 0.0, %v2708
  %v2710 = vpop.f32.mrf.mxu0
  %2711 = vmatprep.mubr.f32.mxu0 0.0
  %2712 = vmatmul.mubr.f32.gmra.mxu0 %v2590
  %v2713 = vpop.f32.mrf.mxu0
  %v2714 = vadd.f32 0.0, %v2713
  %v2715 = vpop.f32.mrf.mxu0
  %2716 = vmatprep.mubr.f32.mxu0 0.0
  %2717 = vmatmul.mubr.f32.gmra.mxu0 %v2593
  %v2718 = vpop.f32.mrf.mxu0
  %v2719 = vadd.f32 0.0, %v2718
  %v2720 = vpop.f32.mrf.mxu0
  %2721 = vmatprep.mubr.f32.mxu0 0.0
  %2722 = vmatmul.mubr.f32.gmra.mxu0 %v2596
  %v2723 = vpop.f32.mrf.mxu0
  %v2724 = vadd.f32 0.0, %v2723
  %v2725 = vpop.f32.mrf.mxu0
  %2726 = vmatprep.mubr.f32.mxu0 0.0
  %2727 = vmatmul.mubr.f32.gmra.mxu0 %v2599
  %v2728 = vpop.f32.mrf.mxu0
  %v2729 = vadd.f32 0.0, %v2728
  %v2730 = vpop.f32.mrf.mxu0
  %2731 = vmatprep.mubr.f32.mxu0 0.0
  %2732 = vmatmul.mubr.f32.gmra.mxu0 %v2602
  %v2733 = vpop.f32.mrf.mxu0
  %v2734 = vadd.f32 0.0, %v2733
  %v2735 = vpop.f32.mrf.mxu0
  %2736 = vmatprep.mubr.f32.mxu0 0.0
  %2737 = vmatmul.mubr.f32.gmra.mxu0 %v2605
  %v2738 = vpop.f32.mrf.mxu0
  %v2739 = vadd.f32 0.0, %v2738
  %v2740 = vpop.f32.mrf.mxu0
  %2741 = vmatprep.mubr.f32.mxu0 0.0
  %2742 = vmatmul.mubr.f32.gmra.mxu0 %v2608
  %v2743 = vpop.f32.mrf.mxu0
  %v2744 = vadd.f32 0.0, %v2743
  %v2745 = vpop.f32.mrf.mxu0
  %2746 = vmatprep.mubr.f32.mxu0 0.0
  %2747 = vmatmul.mubr.f32.gmra.mxu0 %v2611
  %v2748 = vpop.f32.mrf.mxu0
  %v2749 = vadd.f32 0.0, %v2748
  %v2750 = vpop.f32.mrf.mxu0
  %2751 = vmatprep.mubr.f32.mxu0 0.0
  %2752 = vmatmul.mubr.f32.gmra.mxu0 %v2614
  %v2753 = vpop.f32.mrf.mxu0
  %v2754 = vadd.f32 0.0, %v2753
  %v2755 = vpop.f32.mrf.mxu0
  %2756 = vmatprep.mubr.f32.mxu0 0.0
  %2757 = vmatmul.mubr.f32.gmra.mxu0 %v2617
  %v2758 = vpop.f32.mrf.mxu0
  %v2759 = vadd.f32 0.0, %v2758
  %v2760 = vpop.f32.mrf.mxu0
  %2761 = vmatprep.mubr.f32.mxu0 0.0
  %2762 = vmatmul.mubr.f32.gmra.mxu0 %v2620
  %v2763 = vpop.f32.mrf.mxu0
  %v2764 = vadd.f32 0.0, %v2763
  %v2765 = vpop.f32.mrf.mxu0
  %2766 = vdwg.mxu0
  %v2768 = vsel %vm26, %v2542, 0
  %v2771 = vsel %vm26, %v2543, 0
  %v2774 = vsel %vm26, %v2544, 0
  %v2777 = vsel %vm26, %v2545, 0
  %v2780 = vsel %vm26, %v2546, 0
  %v2783 = vsel %vm26, %v2547, 0
  %v2786 = vsel %vm26, %v2548, 0
  %v2789 = vsel %vm26, %v2549, 0
  %v2792 = vsel %vm26, %v2550, 0
  %v2795 = vsel %vm26, %v2551, 0
  %v2798 = vsel %vm26, %v2552, 0
  %v2801 = vsel %vm26, %v2553, 0
  %v2804 = vsel %vm26, %v2554, 0
  %v2807 = vsel %vm26, %v2555, 0
  %v2810 = vsel %vm26, %v2556, 0
  %v2813 = vsel %vm26, %v2557, 0
  %2815 = vmatprep.subr.mxu0 0.0
  %2816 = vmatpush1.msra.mxu0 0.0
  %2817 = vmatprep.subr.mxu0 0.0
  %2818 = vmatpush1.msra.mxu0 0.0
  %2819 = vmatprep.subr.mxu0 0.0
  %2820 = vmatpush1.msra.mxu0 0.0
  %2821 = vmatprep.subr.mxu0 0.0
  %2822 = vmatpush1.msra.mxu0 0.0
  %2823 = vmatprep.subr.mxu0 0.0
  %2824 = vmatpush1.msra.mxu0 0.0
  %2825 = vmatprep.subr.mxu0 0.0
  %2826 = vmatpush1.msra.mxu0 0.0
  %2827 = vmatprep.subr.mxu0 0.0
  %2828 = vmatpush1.msra.mxu0 0.0
  %2829 = vmatprep.subr.mxu0 0.0
  %2830 = vmatpush1.msra.mxu0 0.0
  %2831 = vmatprep.subr.mxu0 0.0
  %2832 = vmatpush1.msra.mxu0 0.0
  %2833 = vmatprep.subr.mxu0 0.0
  %2834 = vmatpush1.msra.mxu0 0.0
  %2835 = vmatprep.subr.mxu0 0.0
  %2836 = vmatpush1.msra.mxu0 0.0
  %2837 = vmatprep.subr.mxu0 0.0
  %2838 = vmatpush1.msra.mxu0 0.0
  %2839 = vmatprep.subr.mxu0 0.0
  %2840 = vmatpush1.msra.mxu0 %v2537
  %2841 = vmatprep.subr.mxu0 0.0
  %2842 = vmatpush1.msra.mxu0 %v2536
  %2843 = vmatprep.subr.mxu0 0.0
  %2844 = vmatpush1.msra.mxu0 %v2535
  %2845 = vmatprep.subr.mxu0 0.0
  %2846 = vmatpush1.msra.mxu0 %v2534
  %2847 = vmatprep.subr.mxu0 0.0
  %2848 = vmatpush2.msra.mxu0 0.0
  %2849 = vmatprep.subr.mxu0 0.0
  %2850 = vmatpush2.msra.mxu0 0.0
  %2851 = vmatprep.subr.mxu0 0.0
  %2852 = vmatpush2.msra.mxu0 0.0
  %2853 = vmatprep.subr.mxu0 0.0
  %2854 = vmatpush2.msra.mxu0 0.0
  %2855 = vmatprep.subr.mxu0 0.0
  %2856 = vmatpush2.msra.mxu0 0.0
  %2857 = vmatprep.subr.mxu0 0.0
  %2858 = vmatpush2.msra.mxu0 0.0
  %2859 = vmatprep.subr.mxu0 0.0
  %2860 = vmatpush2.msra.mxu0 0.0
  %2861 = vmatprep.subr.mxu0 0.0
  %2862 = vmatpush2.msra.mxu0 0.0
  %2863 = vmatprep.subr.mxu0 0.0
  %2864 = vmatpush2.msra.mxu0 0.0
  %2865 = vmatprep.subr.mxu0 0.0
  %2866 = vmatpush2.msra.mxu0 0.0
  %2867 = vmatprep.subr.mxu0 0.0
  %2868 = vmatpush2.msra.mxu0 0.0
  %2869 = vmatprep.subr.mxu0 0.0
  %2870 = vmatpush2.msra.mxu0 0.0
  %2871 = vmatprep.subr.mxu0 0.0
  %2872 = vmatpush2.msra.mxu0 0.0
  %2873 = vmatprep.subr.mxu0 0.0
  %2874 = vmatpush2.msra.mxu0 0.0
  %2875 = vmatprep.subr.mxu0 0.0
  %2876 = vmatpush2.msra.mxu0 0.0
  %2877 = vmatprep.subr.mxu0 0.0
  %2878 = vmatpush2.msra.mxu0 0.0
  %2879 = vmatprep.mubr.f32.mxu0 0.0
  %2880 = vmatmul.mubr.f32.gmra.mxu0 %v2768
  %v2881 = vpop.f32.mrf.mxu0
  %v2882 = vadd.f32 %v2689, %v2881
  %v2883 = vpop.f32.mrf.mxu0
  %2884 = vmatprep.mubr.f32.mxu0 0.0
  %2885 = vmatmul.mubr.f32.gmra.mxu0 %v2771
  %v2886 = vpop.f32.mrf.mxu0
  %v2887 = vadd.f32 %v2694, %v2886
  %v2888 = vpop.f32.mrf.mxu0
  %2889 = vmatprep.mubr.f32.mxu0 0.0
  %2890 = vmatmul.mubr.f32.gmra.mxu0 %v2774
  %v2891 = vpop.f32.mrf.mxu0
  %v2892 = vadd.f32 %v2699, %v2891
  %v2893 = vpop.f32.mrf.mxu0
  %2894 = vmatprep.mubr.f32.mxu0 0.0
  %2895 = vmatmul.mubr.f32.gmra.mxu0 %v2777
  %v2896 = vpop.f32.mrf.mxu0
  %v2897 = vadd.f32 %v2704, %v2896
  %v2898 = vpop.f32.mrf.mxu0
  %2899 = vmatprep.mubr.f32.mxu0 0.0
  %2900 = vmatmul.mubr.f32.gmra.mxu0 %v2780
  %v2901 = vpop.f32.mrf.mxu0
  %v2902 = vadd.f32 %v2709, %v2901
  %v2903 = vpop.f32.mrf.mxu0
  %2904 = vmatprep.mubr.f32.mxu0 0.0
  %2905 = vmatmul.mubr.f32.gmra.mxu0 %v2783
  %v2906 = vpop.f32.mrf.mxu0
  %v2907 = vadd.f32 %v2714, %v2906
  %v2908 = vpop.f32.mrf.mxu0
  %2909 = vmatprep.mubr.f32.mxu0 0.0
  %2910 = vmatmul.mubr.f32.gmra.mxu0 %v2786
  %v2911 = vpop.f32.mrf.mxu0
  %v2912 = vadd.f32 %v2719, %v2911
  %v2913 = vpop.f32.mrf.mxu0
  %2914 = vmatprep.mubr.f32.mxu0 0.0
  %2915 = vmatmul.mubr.f32.gmra.mxu0 %v2789
  %v2916 = vpop.f32.mrf.mxu0
  %v2917 = vadd.f32 %v2724, %v2916
  %v2918 = vpop.f32.mrf.mxu0
  %2919 = vmatprep.mubr.f32.mxu0 0.0
  %2920 = vmatmul.mubr.f32.gmra.mxu0 %v2792
  %v2921 = vpop.f32.mrf.mxu0
  %v2922 = vadd.f32 %v2729, %v2921
  %v2923 = vpop.f32.mrf.mxu0
  %2924 = vmatprep.mubr.f32.mxu0 0.0
  %2925 = vmatmul.mubr.f32.gmra.mxu0 %v2795
  %v2926 = vpop.f32.mrf.mxu0
  %v2927 = vadd.f32 %v2734, %v2926
  %v2928 = vpop.f32.mrf.mxu0
  %2929 = vmatprep.mubr.f32.mxu0 0.0
  %2930 = vmatmul.mubr.f32.gmra.mxu0 %v2798
  %v2931 = vpop.f32.mrf.mxu0
  %v2932 = vadd.f32 %v2739, %v2931
  %v2933 = vpop.f32.mrf.mxu0
  %2934 = vmatprep.mubr.f32.mxu0 0.0
  %2935 = vmatmul.mubr.f32.gmra.mxu0 %v2801
  %v2936 = vpop.f32.mrf.mxu0
  %v2937 = vadd.f32 %v2744, %v2936
  %v2938 = vpop.f32.mrf.mxu0
  %2939 = vmatprep.mubr.f32.mxu0 0.0
  %2940 = vmatmul.mubr.f32.gmra.mxu0 %v2804
  %v2941 = vpop.f32.mrf.mxu0
  %v2942 = vadd.f32 %v2749, %v2941
  %v2943 = vpop.f32.mrf.mxu0
  %2944 = vmatprep.mubr.f32.mxu0 0.0
  %2945 = vmatmul.mubr.f32.gmra.mxu0 %v2807
  %v2946 = vpop.f32.mrf.mxu0
  %v2947 = vadd.f32 %v2754, %v2946
  %v2948 = vpop.f32.mrf.mxu0
  %2949 = vmatprep.mubr.f32.mxu0 0.0
  %2950 = vmatmul.mubr.f32.gmra.mxu0 %v2810
  %v2951 = vpop.f32.mrf.mxu0
  %v2952 = vadd.f32 %v2759, %v2951
  %v2953 = vpop.f32.mrf.mxu0
  %2954 = vmatprep.mubr.f32.mxu0 0.0
  %2955 = vmatmul.mubr.f32.gmra.mxu0 %v2813
  %v2956 = vpop.f32.mrf.mxu0
  %v2957 = vadd.f32 %v2764, %v2956
  %v2958 = vpop.f32.mrf.mxu0
  %2959 = vdwg.mxu0
  %v2960 = vlaneseq
  %v2961 = vshrl.u32 %v2960, 7
  %v2962 = vsub.s32 0, %v2961
  %v2963 = vrot.slane %v2539, %v2962
  %v2964 = vadd.f32 %v2882, %v2963
  %v2965 = vadd.f32 %v2887, %v2963
  %v2966 = vadd.f32 %v2892, %v2963
  %v2967 = vadd.f32 %v2897, %v2963
  %v2968 = vadd.f32 %v2902, %v2963
  %v2969 = vadd.f32 %v2907, %v2963
  %v2970 = vadd.f32 %v2912, %v2963
  %v2971 = vadd.f32 %v2917, %v2963
  %v2972 = vadd.f32 %v2922, %v2963
  %v2973 = vadd.f32 %v2927, %v2963
  %v2974 = vadd.f32 %v2932, %v2963
  %v2975 = vadd.f32 %v2937, %v2963
  %v2976 = vadd.f32 %v2942, %v2963
  %v2977 = vadd.f32 %v2947, %v2963
  %v2978 = vadd.f32 %v2952, %v2963
  %v2979 = vadd.f32 %v2957, %v2963
  %v2980 = vmax.f32 %v2964, 0.0
  %v2981 = vmax.f32 %v2965, 0.0
  %v2982 = vmax.f32 %v2966, 0.0
  %v2983 = vmax.f32 %v2967, 0.0
  %v2984 = vmax.f32 %v2968, 0.0
  %v2985 = vmax.f32 %v2969, 0.0
  %v2986 = vmax.f32 %v2970, 0.0
  %v2987 = vmax.f32 %v2971, 0.0
  %v2988 = vmax.f32 %v2972, 0.0
  %v2989 = vmax.f32 %v2973, 0.0
  %v2990 = vmax.f32 %v2974, 0.0
  %v2991 = vmax.f32 %v2975, 0.0
  %v2992 = vmax.f32 %v2976, 0.0
  %v2993 = vmax.f32 %v2977, 0.0
  %v2994 = vmax.f32 %v2978, 0.0
  %v2995 = vmax.f32 %v2979, 0.0
  %v2996 = vlaneseq
  %v2997 = vshrl.u32 %v2996, 7
  %v2998 = vsub.s32 0, %v2997
  %v2999 = vrot.slane %v2540, %v2998
  %v3000 = vmul.f32 %v2980, %v2999
  %v3001 = vmul.f32 %v2981, %v2999
  %v3002 = vmul.f32 %v2982, %v2999
  %v3003 = vmul.f32 %v2983, %v2999
  %v3004 = vmul.f32 %v2984, %v2999
  %v3005 = vmul.f32 %v2985, %v2999
  %v3006 = vmul.f32 %v2986, %v2999
  %v3007 = vmul.f32 %v2987, %v2999
  %v3008 = vmul.f32 %v2988, %v2999
  %v3009 = vmul.f32 %v2989, %v2999
  %v3010 = vmul.f32 %v2990, %v2999
  %v3011 = vmul.f32 %v2991, %v2999
  %v3012 = vmul.f32 %v2992, %v2999
  %v3013 = vmul.f32 %v2993, %v2999
  %v3014 = vmul.f32 %v2994, %v2999
  %v3015 = vmul.f32 %v2995, %v2999
  %v3016 = vsel %vm26, %v3000, 0.0
  %3017 = vadd.xlane.f32.xlu0 %v3016
  %v3018 = vpop.xlane.xlu0 %3017
  %v3019 = vsel %vm26, %v3001, 0.0
  %3020 = vadd.xlane.f32.xlu0 %v3019
  %v3021 = vpop.xlane.xlu0 %3020
  %v3022 = vsel %vm26, %v3002, 0.0
  %3023 = vadd.xlane.f32.xlu0 %v3022
  %v3024 = vpop.xlane.xlu0 %3023
  %v3025 = vsel %vm26, %v3003, 0.0
  %3026 = vadd.xlane.f32.xlu0 %v3025
  %v3027 = vpop.xlane.xlu0 %3026
  %v3028 = vsel %vm26, %v3004, 0.0
  %3029 = vadd.xlane.f32.xlu0 %v3028
  %v3030 = vpop.xlane.xlu0 %3029
  %v3031 = vsel %vm26, %v3005, 0.0
  %3032 = vadd.xlane.f32.xlu0 %v3031
  %v3033 = vpop.xlane.xlu0 %3032
  %v3034 = vsel %vm26, %v3006, 0.0
  %3035 = vadd.xlane.f32.xlu0 %v3034
  %v3036 = vpop.xlane.xlu0 %3035
  %v3037 = vsel %vm26, %v3007, 0.0
  %3038 = vadd.xlane.f32.xlu0 %v3037
  %v3039 = vpop.xlane.xlu0 %3038
  %v3040 = vsel %vm26, %v3008, 0.0
  %3041 = vadd.xlane.f32.xlu0 %v3040
  %v3042 = vpop.xlane.xlu0 %3041
  %v3043 = vsel %vm26, %v3009, 0.0
  %3044 = vadd.xlane.f32.xlu0 %v3043
  %v3045 = vpop.xlane.xlu0 %3044
  %v3046 = vsel %vm26, %v3010, 0.0
  %3047 = vadd.xlane.f32.xlu0 %v3046
  %v3048 = vpop.xlane.xlu0 %3047
  %v3049 = vsel %vm26, %v3011, 0.0
  %3050 = vadd.xlane.f32.xlu0 %v3049
  %v3051 = vpop.xlane.xlu0 %3050
  %v3052 = vsel %vm26, %v3012, 0.0
  %3053 = vadd.xlane.f32.xlu0 %v3052
  %v3054 = vpop.xlane.xlu0 %3053
  %v3055 = vsel %vm26, %v3013, 0.0
  %3056 = vadd.xlane.f32.xlu0 %v3055
  %v3057 = vpop.xlane.xlu0 %3056
  %v3058 = vsel %vm26, %v3014, 0.0
  %3059 = vadd.xlane.f32.xlu0 %v3058
  %v3060 = vpop.xlane.xlu0 %3059
  %v3061 = vsel %vm26, %v3015, 0.0
  %3062 = vadd.xlane.f32.xlu0 %v3061
  %v3063 = vpop.xlane.xlu0 %3062
  %3065 = vset.pattern.permute.xlu0 0
  %3066 = vperm.xlu0 %3065, %v2541
  %v3067 = vpop.permute.xlu0 %3066
  %v3068 = vlaneseq
  %v3069 = vshrl.u32 %v3068, 7
  %v3070 = vsub.s32 0, %v3069
  %v3071 = vrot.slane %v3067, %v3070
  %v3073 = vadd.f32 %v3018, %v3071
  %v3074 = vadd.f32 %v3021, %v3071
  %v3075 = vadd.f32 %v3024, %v3071
  %v3076 = vadd.f32 %v3027, %v3071
  %v3077 = vadd.f32 %v3030, %v3071
  %v3078 = vadd.f32 %v3033, %v3071
  %v3079 = vadd.f32 %v3036, %v3071
  %v3080 = vadd.f32 %v3039, %v3071
  %v3081 = vadd.f32 %v3042, %v3071
  %v3082 = vadd.f32 %v3045, %v3071
  %v3083 = vadd.f32 %v3048, %v3071
  %v3084 = vadd.f32 %v3051, %v3071
  %v3085 = vadd.f32 %v3054, %v3071
  %v3086 = vadd.f32 %v3057, %v3071
  %v3087 = vadd.f32 %v3060, %v3071
  %v3088 = vadd.f32 %v3063, %v3071
  %v3089 = vxor.u32 %v3073, 2147483648
  %v3090 = vxor.u32 %v3074, 2147483648
  %v3091 = vxor.u32 %v3075, 2147483648
  %v3092 = vxor.u32 %v3076, 2147483648
  %v3093 = vxor.u32 %v3077, 2147483648
  %v3094 = vxor.u32 %v3078, 2147483648
  %v3095 = vxor.u32 %v3079, 2147483648
  %v3096 = vxor.u32 %v3080, 2147483648
  %v3097 = vxor.u32 %v3081, 2147483648
  %v3098 = vxor.u32 %v3082, 2147483648
  %v3099 = vxor.u32 %v3083, 2147483648
  %v3100 = vxor.u32 %v3084, 2147483648
  %v3101 = vxor.u32 %v3085, 2147483648
  %v3102 = vxor.u32 %v3086, 2147483648
  %v3103 = vxor.u32 %v3087, 2147483648
  %v3104 = vxor.u32 %v3088, 2147483648
  %v3105 = vmul.f32 %v3089, 1.442695
  %v3106 = vpow.pop %v3105
  %v3107 = vmul.f32 %v3090, 1.442695
  %v3108 = vpow.pop %v3107
  %v3109 = vmul.f32 %v3091, 1.442695
  %v3110 = vpow.pop %v3109
  %v3111 = vmul.f32 %v3092, 1.442695
  %v3112 = vpow.pop %v3111
  %v3113 = vmul.f32 %v3093, 1.442695
  %v3114 = vpow.pop %v3113
  %v3115 = vmul.f32 %v3094, 1.442695
  %v3116 = vpow.pop %v3115
  %v3117 = vmul.f32 %v3095, 1.442695
  %v3118 = vpow.pop %v3117
  %v3119 = vmul.f32 %v3096, 1.442695
  %v3120 = vpow.pop %v3119
  %v3121 = vmul.f32 %v3097, 1.442695
  %v3122 = vpow.pop %v3121
  %v3123 = vmul.f32 %v3098, 1.442695
  %v3124 = vpow.pop %v3123
  %v3125 = vmul.f32 %v3099, 1.442695
  %v3126 = vpow.pop %v3125
  %v3127 = vmul.f32 %v3100, 1.442695
  %v3128 = vpow.pop %v3127
  %v3129 = vmul.f32 %v3101, 1.442695
  %v3130 = vpow.pop %v3129
  %v3131 = vmul.f32 %v3102, 1.442695
  %v3132 = vpow.pop %v3131
  %v3133 = vmul.f32 %v3103, 1.442695
  %v3134 = vpow.pop %v3133
  %v3135 = vmul.f32 %v3104, 1.442695
  %v3136 = vpow.pop %v3135
  %v3137 = vadd.f32 %v3106, 1.0
  %v3138 = vadd.f32 %v3108, 1.0
  %v3139 = vadd.f32 %v3110, 1.0
  %v3140 = vadd.f32 %v3112, 1.0
  %v3141 = vadd.f32 %v3114, 1.0
  %v3142 = vadd.f32 %v3116, 1.0
  %v3143 = vadd.f32 %v3118, 1.0
  %v3144 = vadd.f32 %v3120, 1.0
  %v3145 = vadd.f32 %v3122, 1.0
  %v3146 = vadd.f32 %v3124, 1.0
  %v3147 = vadd.f32 %v3126, 1.0
  %v3148 = vadd.f32 %v3128, 1.0
  %v3149 = vadd.f32 %v3130, 1.0
  %v3150 = vadd.f32 %v3132, 1.0
  %v3151 = vadd.f32 %v3134, 1.0
  %v3152 = vadd.f32 %v3136, 1.0
  %v3153 = vrcp.pop %v3137
  %v3154 = vmul.f32 1.0, %v3153
  %v3155 = vrcp.pop %v3138
  %v3156 = vmul.f32 1.0, %v3155
  %v3157 = vrcp.pop %v3139
  %v3158 = vmul.f32 1.0, %v3157
  %v3159 = vrcp.pop %v3140
  %v3160 = vmul.f32 1.0, %v3159
  %v3161 = vrcp.pop %v3141
  %v3162 = vmul.f32 1.0, %v3161
  %v3163 = vrcp.pop %v3142
  %v3164 = vmul.f32 1.0, %v3163
  %v3165 = vrcp.pop %v3143
  %v3166 = vmul.f32 1.0, %v3165
  %v3167 = vrcp.pop %v3144
  %v3168 = vmul.f32 1.0, %v3167
  %v3169 = vrcp.pop %v3145
  %v3170 = vmul.f32 1.0, %v3169
  %v3171 = vrcp.pop %v3146
  %v3172 = vmul.f32 1.0, %v3171
  %v3173 = vrcp.pop %v3147
  %v3174 = vmul.f32 1.0, %v3173
  %v3175 = vrcp.pop %v3148
  %v3176 = vmul.f32 1.0, %v3175
  %v3177 = vrcp.pop %v3149
  %v3178 = vmul.f32 1.0, %v3177
  %v3179 = vrcp.pop %v3150
  %v3180 = vmul.f32 1.0, %v3179
  %v3181 = vrcp.pop %v3151
  %v3182 = vmul.f32 1.0, %v3181
  %v3183 = vrcp.pop %v3152
  %v3184 = vmul.f32 1.0, %v3183
  %3201 = vset.pattern.permute.xlu0 0
  %3202 = vperm.xlu0 %3201, %v3154
  %v3203 = vpop.permute.xlu0 %3202
  %3204 = vset.pattern.permute.xlu0 0
  %3205 = vperm.xlu0 %3204, %v3156
  %v3206 = vpop.permute.xlu0 %3205
  %3207 = vset.pattern.permute.xlu0 0
  %3208 = vperm.xlu0 %3207, %v3158
  %v3209 = vpop.permute.xlu0 %3208
  %3210 = vset.pattern.permute.xlu0 0
  %3211 = vperm.xlu0 %3210, %v3160
  %v3212 = vpop.permute.xlu0 %3211
  %3213 = vset.pattern.permute.xlu0 0
  %3214 = vperm.xlu0 %3213, %v3162
  %v3215 = vpop.permute.xlu0 %3214
  %3216 = vset.pattern.permute.xlu0 0
  %3217 = vperm.xlu0 %3216, %v3164
  %v3218 = vpop.permute.xlu0 %3217
  %3219 = vset.pattern.permute.xlu0 0
  %3220 = vperm.xlu0 %3219, %v3166
  %v3221 = vpop.permute.xlu0 %3220
  %3222 = vset.pattern.permute.xlu0 0
  %3223 = vperm.xlu0 %3222, %v3168
  %v3224 = vpop.permute.xlu0 %3223
  %3225 = vset.pattern.permute.xlu0 0
  %3226 = vperm.xlu0 %3225, %v3170
  %v3227 = vpop.permute.xlu0 %3226
  %3228 = vset.pattern.permute.xlu0 0
  %3229 = vperm.xlu0 %3228, %v3172
  %v3230 = vpop.permute.xlu0 %3229
  %3231 = vset.pattern.permute.xlu0 0
  %3232 = vperm.xlu0 %3231, %v3174
  %v3233 = vpop.permute.xlu0 %3232
  %3234 = vset.pattern.permute.xlu0 0
  %3235 = vperm.xlu0 %3234, %v3176
  %v3236 = vpop.permute.xlu0 %3235
  %3237 = vset.pattern.permute.xlu0 0
  %3238 = vperm.xlu0 %3237, %v3178
  %v3239 = vpop.permute.xlu0 %3238
  %3240 = vset.pattern.permute.xlu0 0
  %3241 = vperm.xlu0 %3240, %v3180
  %v3242 = vpop.permute.xlu0 %3241
  %3243 = vset.pattern.permute.xlu0 0
  %3244 = vperm.xlu0 %3243, %v3182
  %v3245 = vpop.permute.xlu0 %3244
  %3246 = vset.pattern.permute.xlu0 0
  %3247 = vperm.xlu0 %3246, %v3184
  %v3248 = vpop.permute.xlu0 %3247
  %v3249 = vlaneseq
  %v3250 = vand.u32 %v3249, 127
  %v3251 = vlaneseq
  %v3252 = vshrl.u32 %v3251, 7
  %v3253 = vsub.s32 %v3250, %v3252
  %v3254 = vrot.slane %v3203, %v3253
  %v3255 = vadd.s32 %v3250, 4294967288
  %v3256 = vlaneseq
  %v3257 = vshrl.u32 %v3256, 7
  %v3258 = vsub.s32 %v3255, %v3257
  %v3259 = vrot.slane %v3206, %v3258
  %vm3260 = vcmask 130112
  %v3261 = vsel %vm3260, %v3259, %v3254
  %v3262 = vadd.s32 %v3250, 4294967280
  %v3263 = vlaneseq
  %v3264 = vshrl.u32 %v3263, 7
  %v3265 = vsub.s32 %v3262, %v3264
  %v3266 = vrot.slane %v3209, %v3265
  %vm3267 = vcmask 195712
  %v3268 = vsel %vm3267, %v3266, %v3261
  %v3269 = vadd.s32 %v3250, 4294967272
  %v3270 = vlaneseq
  %v3271 = vshrl.u32 %v3270, 7
  %v3272 = vsub.s32 %v3269, %v3271
  %v3273 = vrot.slane %v3212, %v3272
  %vm3274 = vcmask 261312
  %v3275 = vsel %vm3274, %v3273, %v3268
  %v3276 = vadd.s32 %v3250, 4294967264
  %v3277 = vlaneseq
  %v3278 = vshrl.u32 %v3277, 7
  %v3279 = vsub.s32 %v3276, %v3278
  %v3280 = vrot.slane %v3215, %v3279
  %vm3281 = vcmask 326912
  %v3282 = vsel %vm3281, %v3280, %v3275
  %v3283 = vadd.s32 %v3250, 4294967256
  %v3284 = vlaneseq
  %v3285 = vshrl.u32 %v3284, 7
  %v3286 = vsub.s32 %v3283, %v3285
  %v3287 = vrot.slane %v3218, %v3286
  %vm3288 = vcmask 392512
  %v3289 = vsel %vm3288, %v3287, %v3282
  %v3290 = vadd.s32 %v3250, 4294967248
  %v3291 = vlaneseq
  %v3292 = vshrl.u32 %v3291, 7
  %v3293 = vsub.s32 %v3290, %v3292
  %v3294 = vrot.slane %v3221, %v3293
  %vm3295 = vcmask 458112
  %v3296 = vsel %vm3295, %v3294, %v3289
  %v3297 = vadd.s32 %v3250, 4294967240
  %v3298 = vlaneseq
  %v3299 = vshrl.u32 %v3298, 7
  %v3300 = vsub.s32 %v3297, %v3299
  %v3301 = vrot.slane %v3224, %v3300
  %vm3302 = vcmask 523712
  %v3303 = vsel %vm3302, %v3301, %v3296
  %v3304 = vadd.s32 %v3250, 4294967232
  %v3305 = vlaneseq
  %v3306 = vshrl.u32 %v3305, 7
  %v3307 = vsub.s32 %v3304, %v3306
  %v3308 = vrot.slane %v3227, %v3307
  %vm3309 = vcmask 589312
  %v3310 = vsel %vm3309, %v3308, %v3303
  %v3311 = vadd.s32 %v3250, 4294967224
  %v3312 = vlaneseq
  %v3313 = vshrl.u32 %v3312, 7
  %v3314 = vsub.s32 %v3311, %v3313
  %v3315 = vrot.slane %v3230, %v3314
  %vm3316 = vcmask 654912
  %v3317 = vsel %vm3316, %v3315, %v3310
  %v3318 = vadd.s32 %v3250, 4294967216
  %v3319 = vlaneseq
  %v3320 = vshrl.u32 %v3319, 7
  %v3321 = vsub.s32 %v3318, %v3320
  %v3322 = vrot.slane %v3233, %v3321
  %vm3323 = vcmask 720512
  %v3324 = vsel %vm3323, %v3322, %v3317
  %v3325 = vadd.s32 %v3250, 4294967208
  %v3326 = vlaneseq
  %v3327 = vshrl.u32 %v3326, 7
  %v3328 = vsub.s32 %v3325, %v3327
  %v3329 = vrot.slane %v3236, %v3328
  %vm3330 = vcmask 786112
  %v3331 = vsel %vm3330, %v3329, %v3324
  %v3332 = vadd.s32 %v3250, 4294967200
  %v3333 = vlaneseq
  %v3334 = vshrl.u32 %v3333, 7
  %v3335 = vsub.s32 %v3332, %v3334
  %v3336 = vrot.slane %v3239, %v3335
  %vm3337 = vcmask 851712
  %v3338 = vsel %vm3337, %v3336, %v3331
  %v3339 = vadd.s32 %v3250, 4294967192
  %v3340 = vlaneseq
  %v3341 = vshrl.u32 %v3340, 7
  %v3342 = vsub.s32 %v3339, %v3341
  %v3343 = vrot.slane %v3242, %v3342
  %vm3344 = vcmask 917312
  %v3345 = vsel %vm3344, %v3343, %v3338
  %v3346 = vadd.s32 %v3250, 4294967184
  %v3347 = vlaneseq
  %v3348 = vshrl.u32 %v3347, 7
  %v3349 = vsub.s32 %v3346, %v3348
  %v3350 = vrot.slane %v3245, %v3349
  %vm3351 = vcmask 982912
  %v3352 = vsel %vm3351, %v3350, %v3345
  %v3353 = vadd.s32 %v3250, 4294967176
  %v3354 = vlaneseq
  %v3355 = vshrl.u32 %v3354, 7
  %v3356 = vsub.s32 %v3353, %v3355
  %v3357 = vrot.slane %v3248, %v3356
  %vm3358 = vcmask 1048512
  %v3359 = vsel %vm3358, %v3357, %v3352
  %3361 = vst [vmem:[%s7] sm:$0x1] %v3359
  // Predicated region
  $region30: #{discriminator_forward.1} parent=0 // pred_check
    _
  $region31: #{discriminator_forward.1} parent=0 // pred_check_branch
    %3363 = sbr.rel (0) target = $region33
  $region32: #{discriminator_forward.1} parent=0 // pred_region
    _
  $region33: #{discriminator_forward.1} parent=0 // pred_fallthru
    _
  // Predicated region
  $region34: #{discriminator_forward.1} parent=0 // pred_check
    _
  $region35: #{discriminator_forward.1} parent=0 // pred_check_branch
    %3365 = sbr.rel (0) target = $region37
  $region36: #{discriminator_forward.1} parent=0 // pred_region
    _
  $region37: #{discriminator_forward.1} parent=0 // pred_fallthru
    _

</llo_original>
